<compile_context>
chip_gen: v6e
topology: v6e:2x2x1
jax: 0.10.0
libtpu: 0.0.40
codegen_flags: <defaults>
</compile_context>

<pallas_src>
import numpy as np
import jax
import jax.numpy as jnp
from jax.experimental import pallas as pl
from jax.experimental.pallas import tpu as pltpu

EPS = 1e-5
KH = 5   # 5x5 conv kernels, fixed by the module


# ---------------------------------------------------------------------------
# The single fused kernel
# ---------------------------------------------------------------------------
def _encoder_fwd_kernel(x_ref,
                        w1_ref, b1_ref, pm1_ref, pr1_ref, a1_ref,
                        w2_ref, b2_ref, pm2_ref, pr2_ref, a2_ref,
                        wf1_ref, sel_ref, bf1_ref,
                        wl2_ref, bl2_ref, wl3_ref, bl3_ref,
                        o_ref):
    f32 = jnp.float32
    mm = w1_ref.dtype          # bf16 on the fast path, f32 on the self-check path

    def conv_relu_pool_bn(xin, w_ref, b_ref, pm_ref, pr_ref, a_ref):
        # xin: (R, K) with all images stacked along rows (R = N * Hin), mm dtype.
        kh = w_ref.shape[0]
        m = pr_ref.shape[1]                    # R - (kh-1): conv evaluated at every row
        # 5x5 VALID conv as 5 accumulated row-Toeplitz matmuls, batch folded into M.
        acc = jnp.dot(xin[0:m, :], w_ref[0], preferred_element_type=f32)
        for dy in range(1, kh):
            acc = acc + jnp.dot(xin[dy:dy + m, :], w_ref[dy],
                                preferred_element_type=f32)
        act = jnp.maximum(acc + b_ref[...], 0.0).astype(mm)     # bias + ReLU
        # 2x2 average pool: column-pair pool (lane space, 0.5) then block-diagonal
        # row-pair pool (0.5) that also drops rows whose window crossed an image.
        t = jnp.dot(act, pm_ref[...], preferred_element_type=f32).astype(mm)
        pooled = jnp.dot(pr_ref[...], t, preferred_element_type=f32)   # (N*Hp, NPP) f32
        # BatchNorm2d(affine=False), training statistics over (N, Hp, Wp) per channel.
        # a_ref broadcasts the per-channel average back to the (w, c) lane layout.
        mean = jnp.sum(jnp.dot(pooled, a_ref[...], preferred_element_type=f32),
                       axis=0, keepdims=True)
        msq = jnp.sum(jnp.dot(pooled * pooled, a_ref[...], preferred_element_type=f32),
                      axis=0, keepdims=True)
        var = jnp.maximum(msq - mean * mean, 0.0)                # biased variance
        return (pooled - mean) * jax.lax.rsqrt(var + EPS)        # padded lanes stay 0

    h1 = conv_relu_pool_bn(x_ref[...], w1_ref, b1_ref, pm1_ref, pr1_ref, a1_ref)
    h2 = conv_relu_pool_bn(h1.astype(mm), w2_ref, b2_ref, pm2_ref, pr2_ref, a2_ref)

    # fc1 over the torch-order flatten, written as a height-Hf "row conv" over the
    # stacked (N*Hp2, lanes) feature slab followed by a row-selection matmul that
    # picks row n*Hp2 of every image (keeps batch folded into M, no reshapes).
    h2m = h2.astype(mm)
    hf = wf1_ref.shape[0]
    ms = sel_ref.shape[1]
    y = jnp.dot(h2m[0:ms, :], wf1_ref[0], preferred_element_type=f32)
    for h in range(1, hf):
        y = y + jnp.dot(h2m[h:h + ms, :], wf1_ref[h], preferred_element_type=f32)
    z1 = jnp.dot(sel_ref[...], y.astype(mm), preferred_element_type=f32)  # (N, D1P)

    def relu_bn1d(pre, b_ref):
        a = jnp.maximum(pre + b_ref[...], 0.0)
        mu = jnp.mean(a, axis=0, keepdims=True)
        var = jnp.mean(jnp.square(a - mu), axis=0, keepdims=True)   # biased variance
        return (a - mu) * jax.lax.rsqrt(var + EPS)

    g1 = relu_bn1d(z1, bf1_ref)
    g2 = relu_bn1d(jnp.dot(g1.astype(mm), wl2_ref[...],
                           preferred_element_type=f32), bl2_ref)
    g3 = relu_bn1d(jnp.dot(g2.astype(mm), wl3_ref[...],
                           preferred_element_type=f32), bl3_ref)
    o_ref[...] = g3


# ---------------------------------------------------------------------------
# Constant (per-model) weight preparation -- hoisted out of the per-forward path
# ---------------------------------------------------------------------------
def _conv_toeplitz(w_oihw, w_in):
    """(Cout,Cin,KH,KW) -> (KH, W_in*Cin, Wo*Cout) row-Toeplitz weight for a
    stride-1 VALID cross-correlation (torch Conv2d semantics)."""
    cout, cin, kh, kw = w_oihw.shape
    wo = w_in - kw + 1
    wt = jnp.transpose(w_oihw, (2, 3, 1, 0))                      # (KH, KW, Cin, Cout)
    dx = jnp.arange(w_in)[:, None] - jnp.arange(wo)[None, :]      # wi - wo
    valid = (dx >= 0) & (dx < kw)
    mat = wt[:, jnp.clip(dx, 0, kw - 1), :, :]                    # (KH, W_in, Wo, Cin, Cout)
    mat = jnp.where(valid[None, :, :, None, None], mat, 0.0)
    mat = jnp.transpose(mat, (0, 1, 3, 2, 4))                     # (KH, W_in, Cin, Wo, Cout)
    return mat.reshape(kh, w_in * cin, wo * cout)


def _col_pool_matrix(wo, c, nc_pad, np_pad):
    """(nc_pad, np_pad): sums adjacent column (w) pairs per channel, weight 0.5."""
    m = np.zeros((nc_pad, np_pad), np.float32)
    cols = np.arange(wo * c)
    m[cols, (cols // c // 2) * c + (cols % c)] = 0.5
    return m


def _row_pool_matrix(n, h_in, h_pool, kh):
    """(n*h_pool, n*h_in-(kh-1)): block-diagonal; picks the valid conv rows of each
    image and sums adjacent row pairs with weight 0.5 (drops boundary-garbage rows)."""
    mcols = n * h_in - (kh - 1)
    m = np.zeros((n * h_pool, mcols), np.float32)
    for b in range(n):
        for i in range(h_pool):
            m[b * h_pool + i, b * h_in + 2 * i] = 0.5
            m[b * h_pool + i, b * h_in + 2 * i + 1] = 0.5
    return m


def _chan_avg_matrix(wp, c, np_pad, count):
    """(np_pad, np_pad): right-multiplying the (w,c)-lane activations by this matrix
    and summing rows yields the per-channel mean broadcast back to every w lane."""
    m = np.zeros((np_pad, np_pad), np.float32)
    lanes = np.arange(wp * c)
    same = (lanes[:, None] % c) == (lanes[None, :] % c)
    m[:wp * c, :wp * c] = same.astype(np.float32) / float(count)
    return m


def _row_select_matrix(n, h_pool, window):
    """(n, n*h_pool-(window-1)): picks row n*h_pool for each image."""
    mcols = n * h_pool - (window - 1)
    m = np.zeros((n, mcols), np.float32)
    m[np.arange(n), np.arange(n) * h_pool] = 1.0
    return m


def make_encoder_forward(params, batch, in_ch, height, width, feat_size, use_bf16=True):
    mmdt = jnp.bfloat16 if use_bf16 else jnp.float32
    f32 = jnp.float32
    rup = lambda v: ((v + 127) // 128) * 128
    N, H, W, Cin = batch, height, width, in_ch
    assert H >= 6 and W >= 6 and (H - 4) % 2 == 0 and (W - 4) % 2 == 0

    # --- conv1 stage constants ---
    C1 = params["conv1_w"].shape[0]
    Ho1, Wo1 = H - 4, W - 4
    Hp1, Wp1 = Ho1 // 2, Wo1 // 2
    NC1, NP1 = Wo1 * C1, Wp1 * C1
    NC1P, NP1P = rup(NC1), rup(NP1)
    w1 = jnp.pad(_conv_toeplitz(params["conv1_w"], W),
                 ((0, 0), (0, 0), (0, NC1P - NC1))).astype(mmdt)
    b1 = jnp.pad(jnp.tile(params["conv1_b"], Wo1), (0, NC1P - NC1)).reshape(1, NC1P).astype(f32)
    pm1 = jnp.asarray(_col_pool_matrix(Wo1, C1, NC1P, NP1P), mmdt)
    pr1 = jnp.asarray(_row_pool_matrix(N, H, Hp1, KH), mmdt)
    a1 = jnp.asarray(_chan_avg_matrix(Wp1, C1, NP1P, N * Hp1 * Wp1), f32)

    # --- conv2 stage constants ---
    C2 = params["conv2_w"].shape[0]
    H2, W2 = Hp1, Wp1
    assert H2 >= 6 and W2 >= 6 and (H2 - 4) % 2 == 0 and (W2 - 4) % 2 == 0
    Ho2, Wo2 = H2 - 4, W2 - 4
    Hp2, Wp2 = Ho2 // 2, Wo2 // 2
    NC2, NP2 = Wo2 * C2, Wp2 * C2
    NC2P, NP2P = rup(NC2), rup(NP2)
    K2 = W2 * C1
    w2 = jnp.pad(_conv_toeplitz(params["conv2_w"], W2),
                 ((0, 0), (0, NP1P - K2), (0, NC2P - NC2))).astype(mmdt)
    b2 = jnp.pad(jnp.tile(params["conv2_b"], Wo2), (0, NC2P - NC2)).reshape(1, NC2P).astype(f32)
    pm2 = jnp.asarray(_col_pool_matrix(Wo2, C2, NC2P, NP2P), mmdt)
    pr2 = jnp.asarray(_row_pool_matrix(N, H2, Hp2, KH), mmdt)
    a2 = jnp.asarray(_chan_avg_matrix(Wp2, C2, NP2P, N * Hp2 * Wp2), f32)

    # --- linear stack constants (torch (c,h,w) flatten order folded into fc1) ---
    D1, D2, D3 = params["fc1_w"].shape[0], params["fc2_w"].shape[0], params["fc3_w"].shape[0]
    D1P, D2P, D3P = rup(D1), rup(D2), rup(D3)
    Hf, Wf = Hp2, Wp2
    assert params["fc1_w"].shape[1] == C2 * Hf * Wf
    wf1 = params["fc1_w"].reshape(D1, C2, Hf, Wf)
    wf1 = jnp.transpose(wf1, (2, 3, 1, 0)).reshape(Hf, Wf * C2, D1)   # [h, w*C2+c, d]
    wf1 = jnp.pad(wf1, ((0, 0), (0, NP2P - Wf * C2), (0, D1P - D1))).astype(mmdt)
    sel = jnp.asarray(_row_select_matrix(N, Hp2, Hf), mmdt)
    bf1 = jnp.pad(params["fc1_b"], (0, D1P - D1)).reshape(1, D1P).astype(f32)
    wl2 = jnp.pad(params["fc2_w"].T, ((0, D1P - D1), (0, D2P - D2))).astype(mmdt)
    bl2 = jnp.pad(params["fc2_b"], (0, D2P - D2)).reshape(1, D2P).astype(f32)
    wl3 = jnp.pad(params["fc3_w"].T, ((0, D2P - D2), (0, D3P - D3))).astype(mmdt)
    bl3 = jnp.pad(params["fc3_b"], (0, D3P - D3)).reshape(1, D3P).astype(f32)

    consts = (w1, b1, pm1, pr1, a1, w2, b2, pm2, pr2, a2,
              wf1, sel, bf1, wl2, bl2, wl3, bl3)

    def full_spec(shape):
        nd = len(shape)
        return pl.BlockSpec(shape, lambda i, _nd=nd: (0,) * _nd)

    call = pl.pallas_call(
        _encoder_fwd_kernel,
        out_shape=jax.ShapeDtypeStruct((N, D3P), jnp.float32),
        grid=(1,),
        in_specs=[full_spec((N * H, W * Cin))] + [full_spec(c.shape) for c in consts],
        out_specs=full_spec((N, D3P)),
        compiler_params=pltpu.CompilerParams(
            dimension_semantics=("arbitrary",),
            vmem_limit_bytes=32 * 1024 * 1024,
        ),
    )

    def forward(x_nchw):
        # NCHW -> NHWC -> (N*H, W*Cin), bf16 on the fast path (halves input DMA bytes).
        x = jnp.transpose(x_nchw, (0, 2, 3, 1)).astype(mmdt)
        x2 = x.reshape(N * H, W * Cin)
        out = call(x2, *consts)
        return out[:, :D3]

    return jax.jit(forward)


# ---------------------------------------------------------------------------
# Pure-JAX reference of the PyTorch module (for the numerical self-check)
# ---------------------------------------------------------------------------
def reference_forward(x_nchw, params):
    prec = jax.lax.Precision.HIGHEST
    dn = ("NCHW", "OIHW", "NCHW")

    def conv_relu(x, w, b):
        y = jax.lax.conv_general_dilated(x, w, (1, 1), "VALID",
                                         dimension_numbers=dn, precision=prec)
        return jnp.maximum(y + b[None, :, None, None], 0.0)

    def pool_bn(y):
        n, c, h, w = y.shape
        y = y.reshape(n, c, h // 2, 2, w // 2, 2).mean(axis=(3, 5))
        mu = y.mean(axis=(0, 2, 3), keepdims=True)
        var = ((y - mu) ** 2).mean(axis=(0, 2, 3), keepdims=True)
        return (y - mu) * jax.lax.rsqrt(var + EPS)

    def lin_relu_bn(h, w, b):
        y = jnp.maximum(jnp.dot(h, w.T, precision=prec) + b, 0.0)
        mu = y.mean(axis=0, keepdims=True)
        var = ((y - mu) ** 2).mean(axis=0, keepdims=True)
        return (y - mu) * jax.lax.rsqrt(var + EPS)

    x = x_nchw.astype(jnp.float32)
    y = pool_bn(conv_relu(x, params["conv1_w"], params["conv1_b"]))
    y = pool_bn(conv_relu(y, params["conv2_w"], params["conv2_b"]))
    flat = y.reshape(y.shape[0], -1)
    h = lin_relu_bn(flat, params["fc1_w"], params["fc1_b"])
    h = lin_relu_bn(h, params["fc2_w"], params["fc2_b"])
    return lin_relu_bn(h, params["fc3_w"], params["fc3_b"])


# ---------------------------------------------------------------------------
# Deterministic parameter init (PyTorch-default-style uniform bounds)
# ---------------------------------------------------------------------------
def init_params(key, input_ch, feat_extr_output_size, feat_size):
    def uni(k, shape, fan_in):
        bound = 1.0 / jnp.sqrt(fan_in)
        return jax.random.uniform(k, shape, jnp.float32, -bound, bound)

    ks = jax.random.split(key, 10)
    return {
        "conv1_w": uni(ks[0], (6, input_ch, 5, 5), input_ch * 25),
        "conv1_b": uni(ks[1], (6,), input_ch * 25),
        "conv2_w": uni(ks[2], (16, 6, 5, 5), 6 * 25),
        "conv2_b": uni(ks[3], (16,), 6 * 25),
        "fc1_w": uni(ks[4], (120, feat_extr_output_size), feat_extr_output_size),
        "fc1_b": uni(ks[5], (120,), feat_extr_output_size),
        "fc2_w": uni(ks[6], (84, 120), 120),
        "fc2_b": uni(ks[7], (84,), 120),
        "fc3_w": uni(ks[8], (feat_size, 84), 84),
        "fc3_b": uni(ks[9], (feat_size,), 84),
    }


if __name__ == "__main__":
    # Small, forward-consistent shapes: batch=8, input_dim=(1, 32, 32), feat_size=32.
    # 32 -> conv5 -> 28 -> pool -> 14 -> conv5 -> 10 -> pool -> 5 ; flat = 16*5*5 = 400.
    batch, in_ch, side, feat_size = 8, 1, 32, 32
    hp1 = (side - 4) // 2
    hp2 = (hp1 - 4) // 2
    feat_extr_output_size = 16 * hp2 * hp2

    key = jax.random.PRNGKey(0)
    kx, kp = jax.random.split(key)
    x = jax.random.normal(kx, (batch, in_ch, side, side), dtype=jnp.float32)
    params = init_params(kp, in_ch, feat_extr_output_size, feat_size)

    fwd_bf16 = make_encoder_forward(params, batch, in_ch, side, side, feat_size, use_bf16=True)
    fwd_f32 = make_encoder_forward(params, batch, in_ch, side, side, feat_size, use_bf16=False)

    # fast (bf16-MXU) path
    feats = jax.block_until_ready(fwd_bf16(x))
    assert feats.shape == (batch, feat_size), feats.shape
    assert bool(jnp.isfinite(feats).all())

    # numerical self-check: f32 kernel path vs. pure-JAX reference of the module
    ref = jax.block_until_ready(reference_forward(x, params))
    feats_f32 = jax.block_until_ready(fwd_f32(x))
    assert bool(jnp.allclose(feats_f32, ref, atol=3e-2, rtol=3e-2)), float(
        jnp.max(jnp.abs(feats_f32 - ref)))

    # loose validation of the bf16 fast path (BN outputs are O(1), so mean-abs-diff
    # is a robust, seed-stable check of the low-precision path)
    bf16_err = float(jnp.mean(jnp.abs(feats.astype(jnp.float32) - ref)))
    assert bf16_err < 0.15, bf16_err

    print("KERNEL_OK")
</pallas_src>

<mosaic_0001>
module attributes {stable_mosaic.version = 11 : i64} {
  func.func @_encoder_fwd_kernel(%arg0: i32, %arg1: memref<256x32xbf16, #tpu.memory_space<vmem>>, %arg2: memref<5x32x256xbf16, #tpu.memory_space<vmem>>, %arg3: memref<1x256xf32, #tpu.memory_space<vmem>>, %arg4: memref<256x128xbf16, #tpu.memory_space<vmem>>, %arg5: memref<112x252xbf16, #tpu.memory_space<vmem>>, %arg6: memref<128x128xf32, #tpu.memory_space<vmem>>, %arg7: memref<5x128x256xbf16, #tpu.memory_space<vmem>>, %arg8: memref<1x256xf32, #tpu.memory_space<vmem>>, %arg9: memref<256x128xbf16, #tpu.memory_space<vmem>>, %arg10: memref<40x108xbf16, #tpu.memory_space<vmem>>, %arg11: memref<128x128xf32, #tpu.memory_space<vmem>>, %arg12: memref<5x128x128xbf16, #tpu.memory_space<vmem>>, %arg13: memref<8x36xbf16, #tpu.memory_space<vmem>>, %arg14: memref<1x128xf32, #tpu.memory_space<vmem>>, %arg15: memref<128x128xbf16, #tpu.memory_space<vmem>>, %arg16: memref<1x128xf32, #tpu.memory_space<vmem>>, %arg17: memref<128x128xbf16, #tpu.memory_space<vmem>>, %arg18: memref<1x128xf32, #tpu.memory_space<vmem>>, %arg19: memref<8x128xf32, #tpu.memory_space<vmem>>) attributes {dimension_semantics = [#tpu.dimension_semantics<arbitrary>], iteration_bounds = array<i64: 1>, scalar_prefetch = 0 : i64, scratch_operands = 0 : i64, tpu.core_type = #tpu.core_type<tc>, window_params = [{pipeline_mode = #tpu.pipeline_mode<synchronous>, transform_indices = @transform_0, window_bounds = array<i64: 256, 32>}, {pipeline_mode = #tpu.pipeline_mode<synchronous>, transform_indices = @transform_1, window_bounds = array<i64: 5, 32, 256>}, {pipeline_mode = #tpu.pipeline_mode<synchronous>, transform_indices = @transform_2, window_bounds = array<i64: 1, 256>}, {pipeline_mode = #tpu.pipeline_mode<synchronous>, transform_indices = @transform_3, window_bounds = array<i64: 256, 128>}, {pipeline_mode = #tpu.pipeline_mode<synchronous>, transform_indices = @transform_4, window_bounds = array<i64: 112, 252>}, {pipeline_mode = #tpu.pipeline_mode<synchronous>, transform_indices = @transform_5, window_bounds = array<i64: 128, 128>}, {pipeline_mode = #tpu.pipeline_mode<synchronous>, transform_indices = @transform_6, window_bounds = array<i64: 5, 128, 256>}, {pipeline_mode = #tpu.pipeline_mode<synchronous>, transform_indices = @transform_7, window_bounds = array<i64: 1, 256>}, {pipeline_mode = #tpu.pipeline_mode<synchronous>, transform_indices = @transform_8, window_bounds = array<i64: 256, 128>}, {pipeline_mode = #tpu.pipeline_mode<synchronous>, transform_indices = @transform_9, window_bounds = array<i64: 40, 108>}, {pipeline_mode = #tpu.pipeline_mode<synchronous>, transform_indices = @transform_10, window_bounds = array<i64: 128, 128>}, {pipeline_mode = #tpu.pipeline_mode<synchronous>, transform_indices = @transform_11, window_bounds = array<i64: 5, 128, 128>}, {pipeline_mode = #tpu.pipeline_mode<synchronous>, transform_indices = @transform_12, window_bounds = array<i64: 8, 36>}, {pipeline_mode = #tpu.pipeline_mode<synchronous>, transform_indices = @transform_13, window_bounds = array<i64: 1, 128>}, {pipeline_mode = #tpu.pipeline_mode<synchronous>, transform_indices = @transform_14, window_bounds = array<i64: 128, 128>}, {pipeline_mode = #tpu.pipeline_mode<synchronous>, transform_indices = @transform_15, window_bounds = array<i64: 1, 128>}, {pipeline_mode = #tpu.pipeline_mode<synchronous>, transform_indices = @transform_16, window_bounds = array<i64: 128, 128>}, {pipeline_mode = #tpu.pipeline_mode<synchronous>, transform_indices = @transform_17, window_bounds = array<i64: 1, 128>}, {pipeline_mode = #tpu.pipeline_mode<synchronous>, transform_indices = @transform_18, window_bounds = array<i64: 8, 128>}]} {
    %c0 = arith.constant 0 : index
    %c0_0 = arith.constant 0 : index
    %0 = vector.load %arg1[%c0, %c0_0] : memref<256x32xbf16, #tpu.memory_space<vmem>>, vector<256x32xbf16>
    %1 = vector.extract_strided_slice %0 {offsets = [0, 0], sizes = [252, 32], strides = [1, 1]} : vector<256x32xbf16> to vector<252x32xbf16>
    %c0_1 = arith.constant 0 : index
    %c0_2 = arith.constant 0 : index
    %c0_3 = arith.constant 0 : index
    %2 = vector.load %arg2[%c0_1, %c0_2, %c0_3] : memref<5x32x256xbf16, #tpu.memory_space<vmem>>, vector<1x32x256xbf16>
    %3 = vector.shape_cast %2 : vector<1x32x256xbf16> to vector<32x256xbf16>
    %cst = arith.constant dense<0.000000e+00> : vector<252x256xf32>
    %4 = tpu.matmul %1, %3, %cst {dimension_numbers = #tpu.dot_dimension_numbers<[1], [0], [0], [1], [0, 0, 1, 1], [], []>} : vector<252x32xbf16>, vector<32x256xbf16>, vector<252x256xf32> -> vector<252x256xf32>
    %5 = vector.extract_strided_slice %0 {offsets = [1, 0], sizes = [252, 32], strides = [1, 1]} : vector<256x32xbf16> to vector<252x32xbf16>
    %c1 = arith.constant 1 : index
    %c0_4 = arith.constant 0 : index
    %c0_5 = arith.constant 0 : index
    %6 = vector.load %arg2[%c1, %c0_4, %c0_5] : memref<5x32x256xbf16, #tpu.memory_space<vmem>>, vector<1x32x256xbf16>
    %7 = vector.shape_cast %6 : vector<1x32x256xbf16> to vector<32x256xbf16>
    %cst_6 = arith.constant dense<0.000000e+00> : vector<252x256xf32>
    %8 = tpu.matmul %5, %7, %cst_6 {dimension_numbers = #tpu.dot_dimension_numbers<[1], [0], [0], [1], [0, 0, 1, 1], [], []>} : vector<252x32xbf16>, vector<32x256xbf16>, vector<252x256xf32> -> vector<252x256xf32>
    %9 = arith.addf %4, %8 : vector<252x256xf32>
    %10 = vector.extract_strided_slice %0 {offsets = [2, 0], sizes = [252, 32], strides = [1, 1]} : vector<256x32xbf16> to vector<252x32xbf16>
    %c2 = arith.constant 2 : index
    %c0_7 = arith.constant 0 : index
    %c0_8 = arith.constant 0 : index
    %11 = vector.load %arg2[%c2, %c0_7, %c0_8] : memref<5x32x256xbf16, #tpu.memory_space<vmem>>, vector<1x32x256xbf16>
    %12 = vector.shape_cast %11 : vector<1x32x256xbf16> to vector<32x256xbf16>
    %cst_9 = arith.constant dense<0.000000e+00> : vector<252x256xf32>
    %13 = tpu.matmul %10, %12, %cst_9 {dimension_numbers = #tpu.dot_dimension_numbers<[1], [0], [0], [1], [0, 0, 1, 1], [], []>} : vector<252x32xbf16>, vector<32x256xbf16>, vector<252x256xf32> -> vector<252x256xf32>
    %14 = arith.addf %9, %13 : vector<252x256xf32>
    %15 = vector.extract_strided_slice %0 {offsets = [3, 0], sizes = [252, 32], strides = [1, 1]} : vector<256x32xbf16> to vector<252x32xbf16>
    %c3 = arith.constant 3 : index
    %c0_10 = arith.constant 0 : index
    %c0_11 = arith.constant 0 : index
    %16 = vector.load %arg2[%c3, %c0_10, %c0_11] : memref<5x32x256xbf16, #tpu.memory_space<vmem>>, vector<1x32x256xbf16>
    %17 = vector.shape_cast %16 : vector<1x32x256xbf16> to vector<32x256xbf16>
    %cst_12 = arith.constant dense<0.000000e+00> : vector<252x256xf32>
    %18 = tpu.matmul %15, %17, %cst_12 {dimension_numbers = #tpu.dot_dimension_numbers<[1], [0], [0], [1], [0, 0, 1, 1], [], []>} : vector<252x32xbf16>, vector<32x256xbf16>, vector<252x256xf32> -> vector<252x256xf32>
    %19 = arith.addf %14, %18 : vector<252x256xf32>
    %20 = vector.extract_strided_slice %0 {offsets = [4, 0], sizes = [252, 32], strides = [1, 1]} : vector<256x32xbf16> to vector<252x32xbf16>
    %c4 = arith.constant 4 : index
    %c0_13 = arith.constant 0 : index
    %c0_14 = arith.constant 0 : index
    %21 = vector.load %arg2[%c4, %c0_13, %c0_14] : memref<5x32x256xbf16, #tpu.memory_space<vmem>>, vector<1x32x256xbf16>
    %22 = vector.shape_cast %21 : vector<1x32x256xbf16> to vector<32x256xbf16>
    %cst_15 = arith.constant dense<0.000000e+00> : vector<252x256xf32>
    %23 = tpu.matmul %20, %22, %cst_15 {dimension_numbers = #tpu.dot_dimension_numbers<[1], [0], [0], [1], [0, 0, 1, 1], [], []>} : vector<252x32xbf16>, vector<32x256xbf16>, vector<252x256xf32> -> vector<252x256xf32>
    %24 = arith.addf %19, %23 : vector<252x256xf32>
    %c0_16 = arith.constant 0 : index
    %c0_17 = arith.constant 0 : index
    %25 = vector.load %arg3[%c0_16, %c0_17] : memref<1x256xf32, #tpu.memory_space<vmem>>, vector<1x256xf32>
    %26 = vector.broadcast %25 : vector<1x256xf32> to vector<252x256xf32>
    %27 = arith.addf %24, %26 : vector<252x256xf32>
    %cst_18 = arith.constant 0.000000e+00 : f32
    %28 = vector.broadcast %cst_18 : f32 to vector<252x256xf32>
    %29 = arith.maximumf %27, %28 : vector<252x256xf32>
    %30 = arith.truncf %29 : vector<252x256xf32> to vector<252x256xbf16>
    %c0_19 = arith.constant 0 : index
    %c0_20 = arith.constant 0 : index
    %31 = vector.load %arg4[%c0_19, %c0_20] : memref<256x128xbf16, #tpu.memory_space<vmem>>, vector<256x128xbf16>
    %cst_21 = arith.constant dense<0.000000e+00> : vector<252x128xf32>
    %32 = tpu.matmul %30, %31, %cst_21 {dimension_numbers = #tpu.dot_dimension_numbers<[1], [0], [0], [1], [0, 0, 1, 1], [], []>} : vector<252x256xbf16>, vector<256x128xbf16>, vector<252x128xf32> -> vector<252x128xf32>
    %33 = arith.truncf %32 : vector<252x128xf32> to vector<252x128xbf16>
    %c0_22 = arith.constant 0 : index
    %c0_23 = arith.constant 0 : index
    %34 = vector.load %arg5[%c0_22, %c0_23] : memref<112x252xbf16, #tpu.memory_space<vmem>>, vector<112x252xbf16>
    %cst_24 = arith.constant dense<0.000000e+00> : vector<112x128xf32>
    %35 = tpu.matmul %34, %33, %cst_24 {dimension_numbers = #tpu.dot_dimension_numbers<[1], [0], [0], [1], [0, 0, 1, 1], [], []>} : vector<112x252xbf16>, vector<252x128xbf16>, vector<112x128xf32> -> vector<112x128xf32>
    %c0_25 = arith.constant 0 : index
    %c0_26 = arith.constant 0 : index
    %36 = vector.load %arg6[%c0_25, %c0_26] : memref<128x128xf32, #tpu.memory_space<vmem>>, vector<128x128xf32>
    %cst_27 = arith.constant dense<0.000000e+00> : vector<112x128xf32>
    %37 = tpu.matmul %35, %36, %cst_27 {dimension_numbers = #tpu.dot_dimension_numbers<[1], [0], [0], [1], [0, 0, 1, 1], [], []>} : vector<112x128xf32>, vector<128x128xf32>, vector<112x128xf32> -> vector<112x128xf32>
    %cst_28 = arith.constant dense<0.000000e+00> : vector<128xf32>
    %38 = vector.multi_reduction <add>, %37, %cst_28 [0] : vector<112x128xf32> to vector<128xf32>
    %39 = vector.shape_cast %38 : vector<128xf32> to vector<1x128xf32>
    %40 = arith.mulf %35, %35 : vector<112x128xf32>
    %c0_29 = arith.constant 0 : index
    %c0_30 = arith.constant 0 : index
    %41 = vector.load %arg6[%c0_29, %c0_30] : memref<128x128xf32, #tpu.memory_space<vmem>>, vector<128x128xf32>
    %cst_31 = arith.constant dense<0.000000e+00> : vector<112x128xf32>
    %42 = tpu.matmul %40, %41, %cst_31 {dimension_numbers = #tpu.dot_dimension_numbers<[1], [0], [0], [1], [0, 0, 1, 1], [], []>} : vector<112x128xf32>, vector<128x128xf32>, vector<112x128xf32> -> vector<112x128xf32>
    %cst_32 = arith.constant dense<0.000000e+00> : vector<128xf32>
    %43 = vector.multi_reduction <add>, %42, %cst_32 [0] : vector<112x128xf32> to vector<128xf32>
    %44 = vector.shape_cast %43 : vector<128xf32> to vector<1x128xf32>
    %45 = arith.mulf %39, %39 : vector<1x128xf32>
    %46 = arith.subf %44, %45 : vector<1x128xf32>
    %cst_33 = arith.constant 0.000000e+00 : f32
    %47 = vector.broadcast %cst_33 : f32 to vector<1x128xf32>
    %48 = arith.maximumf %46, %47 : vector<1x128xf32>
    %49 = vector.broadcast %39 : vector<1x128xf32> to vector<112x128xf32>
    %50 = arith.subf %35, %49 : vector<112x128xf32>
    %cst_34 = arith.constant 9.99999974E-6 : f32
    %51 = vector.broadcast %cst_34 : f32 to vector<1x128xf32>
    %52 = arith.addf %48, %51 : vector<1x128xf32>
    %53 = math.rsqrt %52 : vector<1x128xf32>
    %54 = vector.broadcast %53 : vector<1x128xf32> to vector<112x128xf32>
    %55 = arith.mulf %50, %54 : vector<112x128xf32>
    %56 = arith.truncf %55 : vector<112x128xf32> to vector<112x128xbf16>
    %57 = vector.extract_strided_slice %56 {offsets = [0, 0], sizes = [108, 128], strides = [1, 1]} : vector<112x128xbf16> to vector<108x128xbf16>
    %c0_35 = arith.constant 0 : index
    %c0_36 = arith.constant 0 : index
    %c0_37 = arith.constant 0 : index
    %58 = vector.load %arg7[%c0_35, %c0_36, %c0_37] : memref<5x128x256xbf16, #tpu.memory_space<vmem>>, vector<1x128x256xbf16>
    %59 = vector.shape_cast %58 : vector<1x128x256xbf16> to vector<128x256xbf16>
    %cst_38 = arith.constant dense<0.000000e+00> : vector<108x256xf32>
    %60 = tpu.matmul %57, %59, %cst_38 {dimension_numbers = #tpu.dot_dimension_numbers<[1], [0], [0], [1], [0, 0, 1, 1], [], []>} : vector<108x128xbf16>, vector<128x256xbf16>, vector<108x256xf32> -> vector<108x256xf32>
    %61 = vector.extract_strided_slice %56 {offsets = [1, 0], sizes = [108, 128], strides = [1, 1]} : vector<112x128xbf16> to vector<108x128xbf16>
    %c1_39 = arith.constant 1 : index
    %c0_40 = arith.constant 0 : index
    %c0_41 = arith.constant 0 : index
    %62 = vector.load %arg7[%c1_39, %c0_40, %c0_41] : memref<5x128x256xbf16, #tpu.memory_space<vmem>>, vector<1x128x256xbf16>
    %63 = vector.shape_cast %62 : vector<1x128x256xbf16> to vector<128x256xbf16>
    %cst_42 = arith.constant dense<0.000000e+00> : vector<108x256xf32>
    %64 = tpu.matmul %61, %63, %cst_42 {dimension_numbers = #tpu.dot_dimension_numbers<[1], [0], [0], [1], [0, 0, 1, 1], [], []>} : vector<108x128xbf16>, vector<128x256xbf16>, vector<108x256xf32> -> vector<108x256xf32>
    %65 = arith.addf %60, %64 : vector<108x256xf32>
    %66 = vector.extract_strided_slice %56 {offsets = [2, 0], sizes = [108, 128], strides = [1, 1]} : vector<112x128xbf16> to vector<108x128xbf16>
    %c2_43 = arith.constant 2 : index
    %c0_44 = arith.constant 0 : index
    %c0_45 = arith.constant 0 : index
    %67 = vector.load %arg7[%c2_43, %c0_44, %c0_45] : memref<5x128x256xbf16, #tpu.memory_space<vmem>>, vector<1x128x256xbf16>
    %68 = vector.shape_cast %67 : vector<1x128x256xbf16> to vector<128x256xbf16>
    %cst_46 = arith.constant dense<0.000000e+00> : vector<108x256xf32>
    %69 = tpu.matmul %66, %68, %cst_46 {dimension_numbers = #tpu.dot_dimension_numbers<[1], [0], [0], [1], [0, 0, 1, 1], [], []>} : vector<108x128xbf16>, vector<128x256xbf16>, vector<108x256xf32> -> vector<108x256xf32>
    %70 = arith.addf %65, %69 : vector<108x256xf32>
    %71 = vector.extract_strided_slice %56 {offsets = [3, 0], sizes = [108, 128], strides = [1, 1]} : vector<112x128xbf16> to vector<108x128xbf16>
    %c3_47 = arith.constant 3 : index
    %c0_48 = arith.constant 0 : index
    %c0_49 = arith.constant 0 : index
    %72 = vector.load %arg7[%c3_47, %c0_48, %c0_49] : memref<5x128x256xbf16, #tpu.memory_space<vmem>>, vector<1x128x256xbf16>
    %73 = vector.shape_cast %72 : vector<1x128x256xbf16> to vector<128x256xbf16>
    %cst_50 = arith.constant dense<0.000000e+00> : vector<108x256xf32>
    %74 = tpu.matmul %71, %73, %cst_50 {dimension_numbers = #tpu.dot_dimension_numbers<[1], [0], [0], [1], [0, 0, 1, 1], [], []>} : vector<108x128xbf16>, vector<128x256xbf16>, vector<108x256xf32> -> vector<108x256xf32>
    %75 = arith.addf %70, %74 : vector<108x256xf32>
    %76 = vector.extract_strided_slice %56 {offsets = [4, 0], sizes = [108, 128], strides = [1, 1]} : vector<112x128xbf16> to vector<108x128xbf16>
    %c4_51 = arith.constant 4 : index
    %c0_52 = arith.constant 0 : index
    %c0_53 = arith.constant 0 : index
    %77 = vector.load %arg7[%c4_51, %c0_52, %c0_53] : memref<5x128x256xbf16, #tpu.memory_space<vmem>>, vector<1x128x256xbf16>
    %78 = vector.shape_cast %77 : vector<1x128x256xbf16> to vector<128x256xbf16>
    %cst_54 = arith.constant dense<0.000000e+00> : vector<108x256xf32>
    %79 = tpu.matmul %76, %78, %cst_54 {dimension_numbers = #tpu.dot_dimension_numbers<[1], [0], [0], [1], [0, 0, 1, 1], [], []>} : vector<108x128xbf16>, vector<128x256xbf16>, vector<108x256xf32> -> vector<108x256xf32>
    %80 = arith.addf %75, %79 : vector<108x256xf32>
    %c0_55 = arith.constant 0 : index
    %c0_56 = arith.constant 0 : index
    %81 = vector.load %arg8[%c0_55, %c0_56] : memref<1x256xf32, #tpu.memory_space<vmem>>, vector<1x256xf32>
    %82 = vector.broadcast %81 : vector<1x256xf32> to vector<108x256xf32>
    %83 = arith.addf %80, %82 : vector<108x256xf32>
    %cst_57 = arith.constant 0.000000e+00 : f32
    %84 = vector.broadcast %cst_57 : f32 to vector<108x256xf32>
    %85 = arith.maximumf %83, %84 : vector<108x256xf32>
    %86 = arith.truncf %85 : vector<108x256xf32> to vector<108x256xbf16>
    %c0_58 = arith.constant 0 : index
    %c0_59 = arith.constant 0 : index
    %87 = vector.load %arg9[%c0_58, %c0_59] : memref<256x128xbf16, #tpu.memory_space<vmem>>, vector<256x128xbf16>
    %cst_60 = arith.constant dense<0.000000e+00> : vector<108x128xf32>
    %88 = tpu.matmul %86, %87, %cst_60 {dimension_numbers = #tpu.dot_dimension_numbers<[1], [0], [0], [1], [0, 0, 1, 1], [], []>} : vector<108x256xbf16>, vector<256x128xbf16>, vector<108x128xf32> -> vector<108x128xf32>
    %89 = arith.truncf %88 : vector<108x128xf32> to vector<108x128xbf16>
    %c0_61 = arith.constant 0 : index
    %c0_62 = arith.constant 0 : index
    %90 = vector.load %arg10[%c0_61, %c0_62] : memref<40x108xbf16, #tpu.memory_space<vmem>>, vector<40x108xbf16>
    %cst_63 = arith.constant dense<0.000000e+00> : vector<40x128xf32>
    %91 = tpu.matmul %90, %89, %cst_63 {dimension_numbers = #tpu.dot_dimension_numbers<[1], [0], [0], [1], [0, 0, 1, 1], [], []>} : vector<40x108xbf16>, vector<108x128xbf16>, vector<40x128xf32> -> vector<40x128xf32>
    %c0_64 = arith.constant 0 : index
    %c0_65 = arith.constant 0 : index
    %92 = vector.load %arg11[%c0_64, %c0_65] : memref<128x128xf32, #tpu.memory_space<vmem>>, vector<128x128xf32>
    %cst_66 = arith.constant dense<0.000000e+00> : vector<40x128xf32>
    %93 = tpu.matmul %91, %92, %cst_66 {dimension_numbers = #tpu.dot_dimension_numbers<[1], [0], [0], [1], [0, 0, 1, 1], [], []>} : vector<40x128xf32>, vector<128x128xf32>, vector<40x128xf32> -> vector<40x128xf32>
    %cst_67 = arith.constant dense<0.000000e+00> : vector<128xf32>
    %94 = vector.multi_reduction <add>, %93, %cst_67 [0] : vector<40x128xf32> to vector<128xf32>
    %95 = vector.shape_cast %94 : vector<128xf32> to vector<1x128xf32>
    %96 = arith.mulf %91, %91 : vector<40x128xf32>
    %c0_68 = arith.constant 0 : index
    %c0_69 = arith.constant 0 : index
    %97 = vector.load %arg11[%c0_68, %c0_69] : memref<128x128xf32, #tpu.memory_space<vmem>>, vector<128x128xf32>
    %cst_70 = arith.constant dense<0.000000e+00> : vector<40x128xf32>
    %98 = tpu.matmul %96, %97, %cst_70 {dimension_numbers = #tpu.dot_dimension_numbers<[1], [0], [0], [1], [0, 0, 1, 1], [], []>} : vector<40x128xf32>, vector<128x128xf32>, vector<40x128xf32> -> vector<40x128xf32>
    %cst_71 = arith.constant dense<0.000000e+00> : vector<128xf32>
    %99 = vector.multi_reduction <add>, %98, %cst_71 [0] : vector<40x128xf32> to vector<128xf32>
    %100 = vector.shape_cast %99 : vector<128xf32> to vector<1x128xf32>
    %101 = arith.mulf %95, %95 : vector<1x128xf32>
    %102 = arith.subf %100, %101 : vector<1x128xf32>
    %cst_72 = arith.constant 0.000000e+00 : f32
    %103 = vector.broadcast %cst_72 : f32 to vector<1x128xf32>
    %104 = arith.maximumf %102, %103 : vector<1x128xf32>
    %105 = vector.broadcast %95 : vector<1x128xf32> to vector<40x128xf32>
    %106 = arith.subf %91, %105 : vector<40x128xf32>
    %cst_73 = arith.constant 9.99999974E-6 : f32
    %107 = vector.broadcast %cst_73 : f32 to vector<1x128xf32>
    %108 = arith.addf %104, %107 : vector<1x128xf32>
    %109 = math.rsqrt %108 : vector<1x128xf32>
    %110 = vector.broadcast %109 : vector<1x128xf32> to vector<40x128xf32>
    %111 = arith.mulf %106, %110 : vector<40x128xf32>
    %112 = arith.truncf %111 : vector<40x128xf32> to vector<40x128xbf16>
    %113 = vector.extract_strided_slice %112 {offsets = [0, 0], sizes = [36, 128], strides = [1, 1]} : vector<40x128xbf16> to vector<36x128xbf16>
    %c0_74 = arith.constant 0 : index
    %c0_75 = arith.constant 0 : index
    %c0_76 = arith.constant 0 : index
    %114 = vector.load %arg12[%c0_74, %c0_75, %c0_76] : memref<5x128x128xbf16, #tpu.memory_space<vmem>>, vector<1x128x128xbf16>
    %115 = vector.shape_cast %114 : vector<1x128x128xbf16> to vector<128x128xbf16>
    %cst_77 = arith.constant dense<0.000000e+00> : vector<36x128xf32>
    %116 = tpu.matmul %113, %115, %cst_77 {dimension_numbers = #tpu.dot_dimension_numbers<[1], [0], [0], [1], [0, 0, 1, 1], [], []>} : vector<36x128xbf16>, vector<128x128xbf16>, vector<36x128xf32> -> vector<36x128xf32>
    %117 = vector.extract_strided_slice %112 {offsets = [1, 0], sizes = [36, 128], strides = [1, 1]} : vector<40x128xbf16> to vector<36x128xbf16>
    %c1_78 = arith.constant 1 : index
    %c0_79 = arith.constant 0 : index
    %c0_80 = arith.constant 0 : index
    %118 = vector.load %arg12[%c1_78, %c0_79, %c0_80] : memref<5x128x128xbf16, #tpu.memory_space<vmem>>, vector<1x128x128xbf16>
    %119 = vector.shape_cast %118 : vector<1x128x128xbf16> to vector<128x128xbf16>
    %cst_81 = arith.constant dense<0.000000e+00> : vector<36x128xf32>
    %120 = tpu.matmul %117, %119, %cst_81 {dimension_numbers = #tpu.dot_dimension_numbers<[1], [0], [0], [1], [0, 0, 1, 1], [], []>} : vector<36x128xbf16>, vector<128x128xbf16>, vector<36x128xf32> -> vector<36x128xf32>
    %121 = arith.addf %116, %120 : vector<36x128xf32>
    %122 = vector.extract_strided_slice %112 {offsets = [2, 0], sizes = [36, 128], strides = [1, 1]} : vector<40x128xbf16> to vector<36x128xbf16>
    %c2_82 = arith.constant 2 : index
    %c0_83 = arith.constant 0 : index
    %c0_84 = arith.constant 0 : index
    %123 = vector.load %arg12[%c2_82, %c0_83, %c0_84] : memref<5x128x128xbf16, #tpu.memory_space<vmem>>, vector<1x128x128xbf16>
    %124 = vector.shape_cast %123 : vector<1x128x128xbf16> to vector<128x128xbf16>
    %cst_85 = arith.constant dense<0.000000e+00> : vector<36x128xf32>
    %125 = tpu.matmul %122, %124, %cst_85 {dimension_numbers = #tpu.dot_dimension_numbers<[1], [0], [0], [1], [0, 0, 1, 1], [], []>} : vector<36x128xbf16>, vector<128x128xbf16>, vector<36x128xf32> -> vector<36x128xf32>
    %126 = arith.addf %121, %125 : vector<36x128xf32>
    %127 = vector.extract_strided_slice %112 {offsets = [3, 0], sizes = [36, 128], strides = [1, 1]} : vector<40x128xbf16> to vector<36x128xbf16>
    %c3_86 = arith.constant 3 : index
    %c0_87 = arith.constant 0 : index
    %c0_88 = arith.constant 0 : index
    %128 = vector.load %arg12[%c3_86, %c0_87, %c0_88] : memref<5x128x128xbf16, #tpu.memory_space<vmem>>, vector<1x128x128xbf16>
    %129 = vector.shape_cast %128 : vector<1x128x128xbf16> to vector<128x128xbf16>
    %cst_89 = arith.constant dense<0.000000e+00> : vector<36x128xf32>
    %130 = tpu.matmul %127, %129, %cst_89 {dimension_numbers = #tpu.dot_dimension_numbers<[1], [0], [0], [1], [0, 0, 1, 1], [], []>} : vector<36x128xbf16>, vector<128x128xbf16>, vector<36x128xf32> -> vector<36x128xf32>
    %131 = arith.addf %126, %130 : vector<36x128xf32>
    %132 = vector.extract_strided_slice %112 {offsets = [4, 0], sizes = [36, 128], strides = [1, 1]} : vector<40x128xbf16> to vector<36x128xbf16>
    %c4_90 = arith.constant 4 : index
    %c0_91 = arith.constant 0 : index
    %c0_92 = arith.constant 0 : index
    %133 = vector.load %arg12[%c4_90, %c0_91, %c0_92] : memref<5x128x128xbf16, #tpu.memory_space<vmem>>, vector<1x128x128xbf16>
    %134 = vector.shape_cast %133 : vector<1x128x128xbf16> to vector<128x128xbf16>
    %cst_93 = arith.constant dense<0.000000e+00> : vector<36x128xf32>
    %135 = tpu.matmul %132, %134, %cst_93 {dimension_numbers = #tpu.dot_dimension_numbers<[1], [0], [0], [1], [0, 0, 1, 1], [], []>} : vector<36x128xbf16>, vector<128x128xbf16>, vector<36x128xf32> -> vector<36x128xf32>
    %136 = arith.addf %131, %135 : vector<36x128xf32>
    %c0_94 = arith.constant 0 : index
    %c0_95 = arith.constant 0 : index
    %137 = vector.load %arg13[%c0_94, %c0_95] : memref<8x36xbf16, #tpu.memory_space<vmem>>, vector<8x36xbf16>
    %138 = arith.truncf %136 : vector<36x128xf32> to vector<36x128xbf16>
    %cst_96 = arith.constant dense<0.000000e+00> : vector<8x128xf32>
    %139 = tpu.matmul %137, %138, %cst_96 {dimension_numbers = #tpu.dot_dimension_numbers<[1], [0], [0], [1], [0, 0, 1, 1], [], []>} : vector<8x36xbf16>, vector<36x128xbf16>, vector<8x128xf32> -> vector<8x128xf32>
    %c0_97 = arith.constant 0 : index
    %c0_98 = arith.constant 0 : index
    %140 = vector.load %arg14[%c0_97, %c0_98] : memref<1x128xf32, #tpu.memory_space<vmem>>, vector<1x128xf32>
    %141 = vector.broadcast %140 : vector<1x128xf32> to vector<8x128xf32>
    %142 = arith.addf %139, %141 : vector<8x128xf32>
    %cst_99 = arith.constant 0.000000e+00 : f32
    %143 = vector.broadcast %cst_99 : f32 to vector<8x128xf32>
    %144 = arith.maximumf %142, %143 : vector<8x128xf32>
    %cst_100 = arith.constant dense<0.000000e+00> : vector<128xf32>
    %145 = vector.multi_reduction <add>, %144, %cst_100 [0] : vector<8x128xf32> to vector<128xf32>
    %146 = vector.shape_cast %145 : vector<128xf32> to vector<1x128xf32>
    %cst_101 = arith.constant 8.000000e+00 : f32
    %147 = vector.broadcast %cst_101 : f32 to vector<1x128xf32>
    %148 = arith.divf %146, %147 : vector<1x128xf32>
    %149 = vector.broadcast %148 : vector<1x128xf32> to vector<8x128xf32>
    %150 = arith.subf %144, %149 : vector<8x128xf32>
    %151 = arith.mulf %150, %150 : vector<8x128xf32>
    %cst_102 = arith.constant dense<0.000000e+00> : vector<128xf32>
    %152 = vector.multi_reduction <add>, %151, %cst_102 [0] : vector<8x128xf32> to vector<128xf32>
    %153 = vector.shape_cast %152 : vector<128xf32> to vector<1x128xf32>
    %cst_103 = arith.constant 8.000000e+00 : f32
    %154 = vector.broadcast %cst_103 : f32 to vector<1x128xf32>
    %155 = arith.divf %153, %154 : vector<1x128xf32>
    %156 = vector.broadcast %148 : vector<1x128xf32> to vector<8x128xf32>
    %157 = arith.subf %144, %156 : vector<8x128xf32>
    %cst_104 = arith.constant 9.99999974E-6 : f32
    %158 = vector.broadcast %cst_104 : f32 to vector<1x128xf32>
    %159 = arith.addf %155, %158 : vector<1x128xf32>
    %160 = math.rsqrt %159 : vector<1x128xf32>
    %161 = vector.broadcast %160 : vector<1x128xf32> to vector<8x128xf32>
    %162 = arith.mulf %157, %161 : vector<8x128xf32>
    %163 = arith.truncf %162 : vector<8x128xf32> to vector<8x128xbf16>
    %c0_105 = arith.constant 0 : index
    %c0_106 = arith.constant 0 : index
    %164 = vector.load %arg15[%c0_105, %c0_106] : memref<128x128xbf16, #tpu.memory_space<vmem>>, vector<128x128xbf16>
    %cst_107 = arith.constant dense<0.000000e+00> : vector<8x128xf32>
    %165 = tpu.matmul %163, %164, %cst_107 {dimension_numbers = #tpu.dot_dimension_numbers<[1], [0], [0], [1], [0, 0, 1, 1], [], []>} : vector<8x128xbf16>, vector<128x128xbf16>, vector<8x128xf32> -> vector<8x128xf32>
    %c0_108 = arith.constant 0 : index
    %c0_109 = arith.constant 0 : index
    %166 = vector.load %arg16[%c0_108, %c0_109] : memref<1x128xf32, #tpu.memory_space<vmem>>, vector<1x128xf32>
    %167 = vector.broadcast %166 : vector<1x128xf32> to vector<8x128xf32>
    %168 = arith.addf %165, %167 : vector<8x128xf32>
    %cst_110 = arith.constant 0.000000e+00 : f32
    %169 = vector.broadcast %cst_110 : f32 to vector<8x128xf32>
    %170 = arith.maximumf %168, %169 : vector<8x128xf32>
    %cst_111 = arith.constant dense<0.000000e+00> : vector<128xf32>
    %171 = vector.multi_reduction <add>, %170, %cst_111 [0] : vector<8x128xf32> to vector<128xf32>
    %172 = vector.shape_cast %171 : vector<128xf32> to vector<1x128xf32>
    %cst_112 = arith.constant 8.000000e+00 : f32
    %173 = vector.broadcast %cst_112 : f32 to vector<1x128xf32>
    %174 = arith.divf %172, %173 : vector<1x128xf32>
    %175 = vector.broadcast %174 : vector<1x128xf32> to vector<8x128xf32>
    %176 = arith.subf %170, %175 : vector<8x128xf32>
    %177 = arith.mulf %176, %176 : vector<8x128xf32>
    %cst_113 = arith.constant dense<0.000000e+00> : vector<128xf32>
    %178 = vector.multi_reduction <add>, %177, %cst_113 [0] : vector<8x128xf32> to vector<128xf32>
    %179 = vector.shape_cast %178 : vector<128xf32> to vector<1x128xf32>
    %cst_114 = arith.constant 8.000000e+00 : f32
    %180 = vector.broadcast %cst_114 : f32 to vector<1x128xf32>
    %181 = arith.divf %179, %180 : vector<1x128xf32>
    %182 = vector.broadcast %174 : vector<1x128xf32> to vector<8x128xf32>
    %183 = arith.subf %170, %182 : vector<8x128xf32>
    %cst_115 = arith.constant 9.99999974E-6 : f32
    %184 = vector.broadcast %cst_115 : f32 to vector<1x128xf32>
    %185 = arith.addf %181, %184 : vector<1x128xf32>
    %186 = math.rsqrt %185 : vector<1x128xf32>
    %187 = vector.broadcast %186 : vector<1x128xf32> to vector<8x128xf32>
    %188 = arith.mulf %183, %187 : vector<8x128xf32>
    %189 = arith.truncf %188 : vector<8x128xf32> to vector<8x128xbf16>
    %c0_116 = arith.constant 0 : index
    %c0_117 = arith.constant 0 : index
    %190 = vector.load %arg17[%c0_116, %c0_117] : memref<128x128xbf16, #tpu.memory_space<vmem>>, vector<128x128xbf16>
    %cst_118 = arith.constant dense<0.000000e+00> : vector<8x128xf32>
    %191 = tpu.matmul %189, %190, %cst_118 {dimension_numbers = #tpu.dot_dimension_numbers<[1], [0], [0], [1], [0, 0, 1, 1], [], []>} : vector<8x128xbf16>, vector<128x128xbf16>, vector<8x128xf32> -> vector<8x128xf32>
    %c0_119 = arith.constant 0 : index
    %c0_120 = arith.constant 0 : index
    %192 = vector.load %arg18[%c0_119, %c0_120] : memref<1x128xf32, #tpu.memory_space<vmem>>, vector<1x128xf32>
    %193 = vector.broadcast %192 : vector<1x128xf32> to vector<8x128xf32>
    %194 = arith.addf %191, %193 : vector<8x128xf32>
    %cst_121 = arith.constant 0.000000e+00 : f32
    %195 = vector.broadcast %cst_121 : f32 to vector<8x128xf32>
    %196 = arith.maximumf %194, %195 : vector<8x128xf32>
    %cst_122 = arith.constant dense<0.000000e+00> : vector<128xf32>
    %197 = vector.multi_reduction <add>, %196, %cst_122 [0] : vector<8x128xf32> to vector<128xf32>
    %198 = vector.shape_cast %197 : vector<128xf32> to vector<1x128xf32>
    %cst_123 = arith.constant 8.000000e+00 : f32
    %199 = vector.broadcast %cst_123 : f32 to vector<1x128xf32>
    %200 = arith.divf %198, %199 : vector<1x128xf32>
    %201 = vector.broadcast %200 : vector<1x128xf32> to vector<8x128xf32>
    %202 = arith.subf %196, %201 : vector<8x128xf32>
    %203 = arith.mulf %202, %202 : vector<8x128xf32>
    %cst_124 = arith.constant dense<0.000000e+00> : vector<128xf32>
    %204 = vector.multi_reduction <add>, %203, %cst_124 [0] : vector<8x128xf32> to vector<128xf32>
    %205 = vector.shape_cast %204 : vector<128xf32> to vector<1x128xf32>
    %cst_125 = arith.constant 8.000000e+00 : f32
    %206 = vector.broadcast %cst_125 : f32 to vector<1x128xf32>
    %207 = arith.divf %205, %206 : vector<1x128xf32>
    %208 = vector.broadcast %200 : vector<1x128xf32> to vector<8x128xf32>
    %209 = arith.subf %196, %208 : vector<8x128xf32>
    %cst_126 = arith.constant 9.99999974E-6 : f32
    %210 = vector.broadcast %cst_126 : f32 to vector<1x128xf32>
    %211 = arith.addf %207, %210 : vector<1x128xf32>
    %212 = math.rsqrt %211 : vector<1x128xf32>
    %213 = vector.broadcast %212 : vector<1x128xf32> to vector<8x128xf32>
    %214 = arith.mulf %209, %213 : vector<8x128xf32>
    %c0_127 = arith.constant 0 : index
    %c0_128 = arith.constant 0 : index
    %215 = vector.load %arg19[%c0_127, %c0_128] : memref<8x128xf32, #tpu.memory_space<vmem>>, vector<8x128xf32>
    tpu.vector_store %arg19[%c0_127, %c0_128], %214 {strides = array<i32>} : memref<8x128xf32, #tpu.memory_space<vmem>>, vector<8x128xf32>,
    return
  }
  func.func @transform_0(%arg0: i32) -> (i32, i32) {
    %c0_i32 = arith.constant 0 : i32
    %c0_i32_0 = arith.constant 0 : i32
    %c0_i32_1 = arith.constant 0 : i32
    return %c0_i32, %c0_i32_0 : i32, i32
  }
  func.func @transform_1(%arg0: i32) -> (i32, i32, i32) {
    %c0_i32 = arith.constant 0 : i32
    %c0_i32_0 = arith.constant 0 : i32
    %c0_i32_1 = arith.constant 0 : i32
    %c0_i32_2 = arith.constant 0 : i32
    return %c0_i32, %c0_i32_0, %c0_i32_1 : i32, i32, i32
  }
  func.func @transform_2(%arg0: i32) -> (i32, i32) {
    %c0_i32 = arith.constant 0 : i32
    %c0_i32_0 = arith.constant 0 : i32
    %c0_i32_1 = arith.constant 0 : i32
    return %c0_i32, %c0_i32_0 : i32, i32
  }
  func.func @transform_3(%arg0: i32) -> (i32, i32) {
    %c0_i32 = arith.constant 0 : i32
    %c0_i32_0 = arith.constant 0 : i32
    %c0_i32_1 = arith.constant 0 : i32
    return %c0_i32, %c0_i32_0 : i32, i32
  }
  func.func @transform_4(%arg0: i32) -> (i32, i32) {
    %c0_i32 = arith.constant 0 : i32
    %c0_i32_0 = arith.constant 0 : i32
    %c0_i32_1 = arith.constant 0 : i32
    return %c0_i32, %c0_i32_0 : i32, i32
  }
  func.func @transform_5(%arg0: i32) -> (i32, i32) {
    %c0_i32 = arith.constant 0 : i32
    %c0_i32_0 = arith.constant 0 : i32
    %c0_i32_1 = arith.constant 0 : i32
    return %c0_i32, %c0_i32_0 : i32, i32
  }
  func.func @transform_6(%arg0: i32) -> (i32, i32, i32) {
    %c0_i32 = arith.constant 0 : i32
    %c0_i32_0 = arith.constant 0 : i32
    %c0_i32_1 = arith.constant 0 : i32
    %c0_i32_2 = arith.constant 0 : i32
    return %c0_i32, %c0_i32_0, %c0_i32_1 : i32, i32, i32
  }
  func.func @transform_7(%arg0: i32) -> (i32, i32) {
    %c0_i32 = arith.constant 0 : i32
    %c0_i32_0 = arith.constant 0 : i32
    %c0_i32_1 = arith.constant 0 : i32
    return %c0_i32, %c0_i32_0 : i32, i32
  }
  func.func @transform_8(%arg0: i32) -> (i32, i32) {
    %c0_i32 = arith.constant 0 : i32
    %c0_i32_0 = arith.constant 0 : i32
    %c0_i32_1 = arith.constant 0 : i32
    return %c0_i32, %c0_i32_0 : i32, i32
  }
  func.func @transform_9(%arg0: i32) -> (i32, i32) {
    %c0_i32 = arith.constant 0 : i32
    %c0_i32_0 = arith.constant 0 : i32
    %c0_i32_1 = arith.constant 0 : i32
    return %c0_i32, %c0_i32_0 : i32, i32
  }
  func.func @transform_10(%arg0: i32) -> (i32, i32) {
    %c0_i32 = arith.constant 0 : i32
    %c0_i32_0 = arith.constant 0 : i32
    %c0_i32_1 = arith.constant 0 : i32
    return %c0_i32, %c0_i32_0 : i32, i32
  }
  func.func @transform_11(%arg0: i32) -> (i32, i32, i32) {
    %c0_i32 = arith.constant 0 : i32
    %c0_i32_0 = arith.constant 0 : i32
    %c0_i32_1 = arith.constant 0 : i32
    %c0_i32_2 = arith.constant 0 : i32
    return %c0_i32, %c0_i32_0, %c0_i32_1 : i32, i32, i32
  }
  func.func @transform_12(%arg0: i32) -> (i32, i32) {
    %c0_i32 = arith.constant 0 : i32
    %c0_i32_0 = arith.constant 0 : i32
    %c0_i32_1 = arith.constant 0 : i32
    return %c0_i32, %c0_i32_0 : i32, i32
  }
  func.func @transform_13(%arg0: i32) -> (i32, i32) {
    %c0_i32 = arith.constant 0 : i32
    %c0_i32_0 = arith.constant 0 : i32
    %c0_i32_1 = arith.constant 0 : i32
    return %c0_i32, %c0_i32_0 : i32, i32
  }
  func.func @transform_14(%arg0: i32) -> (i32, i32) {
    %c0_i32 = arith.constant 0 : i32
    %c0_i32_0 = arith.constant 0 : i32
    %c0_i32_1 = arith.constant 0 : i32
    return %c0_i32, %c0_i32_0 : i32, i32
  }
  func.func @transform_15(%arg0: i32) -> (i32, i32) {
    %c0_i32 = arith.constant 0 : i32
    %c0_i32_0 = arith.constant 0 : i32
    %c0_i32_1 = arith.constant 0 : i32
    return %c0_i32, %c0_i32_0 : i32, i32
  }
  func.func @transform_16(%arg0: i32) -> (i32, i32) {
    %c0_i32 = arith.constant 0 : i32
    %c0_i32_0 = arith.constant 0 : i32
    %c0_i32_1 = arith.constant 0 : i32
    return %c0_i32, %c0_i32_0 : i32, i32
  }
  func.func @transform_17(%arg0: i32) -> (i32, i32) {
    %c0_i32 = arith.constant 0 : i32
    %c0_i32_0 = arith.constant 0 : i32
    %c0_i32_1 = arith.constant 0 : i32
    return %c0_i32, %c0_i32_0 : i32, i32
  }
  func.func @transform_18(%arg0: i32) -> (i32, i32) {
    %c0_i32 = arith.constant 0 : i32
    %c0_i32_0 = arith.constant 0 : i32
    %c0_i32_1 = arith.constant 0 : i32
    return %c0_i32, %c0_i32_0 : i32, i32
  }
}

</mosaic_0001>

<llo_original>
// kernel: forward.1
$region0: #{forward.1}
  #allocation0 [shape = 'u32[]', space=smem, size = 0x4, offset = 0x4, fixed_abs, tag = 'smem constant byte address 0x4 - core index']
  #allocation1 [shape = 'u32[144,128]{1,0:T(1,128)}', space=vmem, size = 0x12000, scoped, tag = 'internal scratch']
  %s0 = inlined_call_operand.vmem [shape: bf16[256,32], index: 0, kind: input, shape index: {}]
  %s1 = inlined_call_operand.hbm [shape: bf16[5,32,256], index: 1, kind: input, shape index: {}]
  %s2 = inlined_call_operand.hbm [shape: f32[1,256], index: 2, kind: input, shape index: {}]
  %s3 = inlined_call_operand.hbm [shape: bf16[256,128], index: 3, kind: input, shape index: {}]
  %s4 = inlined_call_operand.hbm [shape: bf16[112,252], index: 4, kind: input, shape index: {}]
  %s5 = inlined_call_operand.hbm [shape: f32[128,128], index: 5, kind: input, shape index: {}]
  %s6 = inlined_call_operand.hbm [shape: bf16[5,128,256], index: 6, kind: input, shape index: {}]
  %s7 = inlined_call_operand.hbm [shape: f32[1,256], index: 7, kind: input, shape index: {}]
  %s8 = inlined_call_operand.hbm [shape: bf16[256,128], index: 8, kind: input, shape index: {}]
  %s9 = inlined_call_operand.vmem [shape: bf16[40,108], index: 9, kind: input, shape index: {}]
  %s10 = inlined_call_operand.hbm [shape: f32[128,128], index: 10, kind: input, shape index: {}]
  %s11 = inlined_call_operand.vmem [shape: bf16[5,128,128], index: 11, kind: input, shape index: {}]
  %s12 = inlined_call_operand.hbm [shape: bf16[8,36], index: 12, kind: input, shape index: {}]
  %s13 = inlined_call_operand.vmem [shape: f32[1,128], index: 13, kind: input, shape index: {}]
  %s14 = inlined_call_operand.hbm [shape: bf16[128,128], index: 14, kind: input, shape index: {}]
  %s15 = inlined_call_operand.vmem [shape: f32[1,128], index: 15, kind: input, shape index: {}]
  %s16 = inlined_call_operand.vmem [shape: bf16[128,128], index: 16, kind: input, shape index: {}]
  %s17 = inlined_call_operand.vmem [shape: f32[1,128], index: 17, kind: input, shape index: {}]
  %s18 = inlined_call_operand.hbm [shape: f32[8,128], index: 18, kind: output, shape index: {}]
  %s19 = sld [smem:[#allocation0]]
  $region126: #{forward.1} parent=0
    _
  %s21 = ssub.s32 1, %s19
  %s22 = scalar_select 0, %s21, %s19
  $region1: #{forward.1} parent=0
    #allocation2 [shape = 'u8[81920]{0}', space=vmem, size = 0x14000, scoped, tag = 'input window, operand 1, single buffered']
    #allocation3 [shape = 's32[1]{0}', space=sflag, size = 0x4, scoped, tag = 'scoped memory for forward.1']
    #allocation4 [shape = 's32[1]{0}', space=sflag, size = 0x4, scoped, tag = 'scoped memory for forward.1']
    #allocation5 [shape = 'u8[1024]{0}', space=vmem, size = 0x400, scoped, tag = 'input window, operand 2, single buffered']
    #allocation6 [shape = 's32[1]{0}', space=sflag, size = 0x4, scoped, tag = 'scoped memory for forward.1']
    #allocation7 [shape = 'u8[65536]{0}', space=vmem, size = 0x10000, scoped, tag = 'input window, operand 3, single buffered']
    #allocation8 [shape = 'u8[57344]{0}', space=vmem, size = 0xe000, scoped, tag = 'input window, operand 4, single buffered']
    #allocation9 [shape = 's32[1]{0}', space=sflag, size = 0x4, scoped, tag = 'scoped memory for forward.1']
    #allocation10 [shape = 'u8[65536]{0}', space=vmem, size = 0x10000, scoped, tag = 'input window, operand 5, single buffered']
    #allocation11 [shape = 'u8[327680]{0}', space=vmem, size = 0x50000, scoped, tag = 'input window, operand 6, single buffered']
    #allocation12 [shape = 's32[1]{0}', space=sflag, size = 0x4, scoped, tag = 'scoped memory for forward.1']
    #allocation13 [shape = 'u8[1024]{0}', space=vmem, size = 0x400, scoped, tag = 'input window, operand 7, single buffered']
    #allocation14 [shape = 'u8[65536]{0}', space=vmem, size = 0x10000, scoped, tag = 'input window, operand 8, single buffered']
    #allocation15 [shape = 's32[1]{0}', space=sflag, size = 0x4, scoped, tag = 'scoped memory for forward.1']
    #allocation16 [shape = 'u8[65536]{0}', space=vmem, size = 0x10000, scoped, tag = 'input window, operand 10, single buffered']
    #allocation17 [shape = 'u8[2048]{0}', space=vmem, size = 0x800, scoped, tag = 'input window, operand 12, single buffered']
    #allocation18 [shape = 's32[1]{0}', space=sflag, size = 0x4, scoped, tag = 'scoped memory for forward.1']
    #allocation19 [shape = 'u8[32768]{0}', space=vmem, size = 0x8000, scoped, tag = 'input window, operand 14, single buffered']
    #allocation20 [shape = 'u8[4096]{0}', space=vmem, size = 0x1000, scoped, tag = 'output window, operand 0, single buffered']
    %23 = vsyncpa [#allocation3], 0
    %24 = vsyncpa [#allocation6], 0
    %25 = vsyncpa [#allocation9], 0
    %26 = vsyncpa [#allocation12], 0
    %27 = vsyncpa [#allocation15], 0
    %28 = vsyncpa [#allocation18], 0
    %29 = vsyncpa [#allocation4], 0
    // Predicated region
    $region2: #{forward.1} parent=1 // pred_check
      _
    $region3: #{forward.1} parent=1 // pred_check_branch
      %31 = sbr.rel (0) target = $region5
    $region4: #{forward.1} parent=1 // pred_region
      _
    $region5: #{forward.1} parent=1 // pred_fallthru
      _
    // Predicated region
    $region6: #{forward.1} parent=1 // pred_check
      _
    $region7: #{forward.1} parent=1 // pred_check_branch
      %33 = sbr.rel (0) target = $region9
    $region8: #{forward.1} parent=1 // pred_region
      %s35 = ssub.s32 2560, 2560
      %36 = vsyncadd [#allocation3], %s35
      %s37 = sshll.u32 [#allocation2], 4
      %s38 = int_to_ptr.vmem [resolvable:$true] %s37
      %43 = dma.hbm_to_vmem [thread:$0]  %s1, 2560, %s38, [#allocation3], 128, 128, 8
    $region9: #{forward.1} parent=1 // pred_fallthru
      _
    // Predicated region
    $region10: #{forward.1} parent=1 // pred_check
      _
    $region11: #{forward.1} parent=1 // pred_check_branch
      %45 = sbr.rel (0) target = $region13
    $region12: #{forward.1} parent=1 // pred_region
      %s47 = ssub.s32 32, 32
      %48 = vsyncadd [#allocation6], %s47
      %s50 = sshll.u32 [#allocation5], 4
      %s51 = int_to_ptr.vmem [resolvable:$true] %s50
      %53 = dma.hbm_to_vmem [thread:$0]  %s2, 32, %s51, [#allocation6]
    $region13: #{forward.1} parent=1 // pred_fallthru
      _
    // Predicated region
    $region14: #{forward.1} parent=1 // pred_check
      _
    $region15: #{forward.1} parent=1 // pred_check_branch
      %55 = sbr.rel (0) target = $region17
    $region16: #{forward.1} parent=1 // pred_region
      %s57 = ssub.s32 2048, 2048
      %58 = vsyncadd [#allocation6], %s57
      %s59 = sshll.u32 [#allocation7], 4
      %s60 = int_to_ptr.vmem [resolvable:$true] %s59
      %65 = dma.hbm_to_vmem [thread:$0]  %s3, 2048, %s60, [#allocation6], 64, 64, 4
    $region17: #{forward.1} parent=1 // pred_fallthru
      _
    // Predicated region
    $region18: #{forward.1} parent=1 // pred_check
      _
    $region19: #{forward.1} parent=1 // pred_check_branch
      %67 = sbr.rel (0) target = $region21
    $region20: #{forward.1} parent=1 // pred_region
      %s69 = ssub.s32 1792, 1792
      %70 = vsyncadd [#allocation9], %s69
      %s71 = sshll.u32 [#allocation8], 4
      %s72 = int_to_ptr.vmem [resolvable:$true] %s71
      %77 = dma.hbm_to_vmem [thread:$0]  %s4, 1792, %s72, [#allocation9], 128, 128, 8
    $region21: #{forward.1} parent=1 // pred_fallthru
      _
    // Predicated region
    $region22: #{forward.1} parent=1 // pred_check
      _
    $region23: #{forward.1} parent=1 // pred_check_branch
      %79 = sbr.rel (0) target = $region25
    $region24: #{forward.1} parent=1 // pred_region
      %s81 = ssub.s32 2048, 2048
      %82 = vsyncadd [#allocation9], %s81
      %s83 = sshll.u32 [#allocation10], 4
      %s84 = int_to_ptr.vmem [resolvable:$true] %s83
      %89 = dma.hbm_to_vmem [thread:$0]  %s5, 2048, %s84, [#allocation9], 128, 128, 8
    $region25: #{forward.1} parent=1 // pred_fallthru
      _
    // Predicated region
    $region26: #{forward.1} parent=1 // pred_check
      _
    $region27: #{forward.1} parent=1 // pred_check_branch
      %91 = sbr.rel (0) target = $region29
    $region28: #{forward.1} parent=1 // pred_region
      %s93 = ssub.s32 10240, 10240
      %94 = vsyncadd [#allocation12], %s93
      %s95 = sshll.u32 [#allocation11], 4
      %s96 = int_to_ptr.vmem [resolvable:$true] %s95
      %101 = dma.hbm_to_vmem [thread:$0]  %s6, 10240, %s96, [#allocation12], 128, 128, 8
    $region29: #{forward.1} parent=1 // pred_fallthru
      _
    // Predicated region
    $region30: #{forward.1} parent=1 // pred_check
      _
    $region31: #{forward.1} parent=1 // pred_check_branch
      %103 = sbr.rel (0) target = $region33
    $region32: #{forward.1} parent=1 // pred_region
      %s105 = ssub.s32 32, 32
      %106 = vsyncadd [#allocation12], %s105
      %s108 = sshll.u32 [#allocation13], 4
      %s109 = int_to_ptr.vmem [resolvable:$true] %s108
      %111 = dma.hbm_to_vmem [thread:$0]  %s7, 32, %s109, [#allocation12]
    $region33: #{forward.1} parent=1 // pred_fallthru
      _
    // Predicated region
    $region34: #{forward.1} parent=1 // pred_check
      _
    $region35: #{forward.1} parent=1 // pred_check_branch
      %113 = sbr.rel (0) target = $region37
    $region36: #{forward.1} parent=1 // pred_region
      %s115 = ssub.s32 2048, 2048
      %116 = vsyncadd [#allocation15], %s115
      %s117 = sshll.u32 [#allocation14], 4
      %s118 = int_to_ptr.vmem [resolvable:$true] %s117
      %123 = dma.hbm_to_vmem [thread:$0]  %s8, 2048, %s118, [#allocation15], 64, 64, 4
    $region37: #{forward.1} parent=1 // pred_fallthru
      _
    // Predicated region
    $region38: #{forward.1} parent=1 // pred_check
      _
    $region39: #{forward.1} parent=1 // pred_check_branch
      %125 = sbr.rel (0) target = $region41
    $region40: #{forward.1} parent=1 // pred_region
      _
    $region41: #{forward.1} parent=1 // pred_fallthru
      _
    // Predicated region
    $region42: #{forward.1} parent=1 // pred_check
      _
    $region43: #{forward.1} parent=1 // pred_check_branch
      %127 = sbr.rel (0) target = $region45
    $region44: #{forward.1} parent=1 // pred_region
      %s129 = ssub.s32 2048, 2048
      %130 = vsyncadd [#allocation15], %s129
      %s131 = sshll.u32 [#allocation16], 4
      %s132 = int_to_ptr.vmem [resolvable:$true] %s131
      %137 = dma.hbm_to_vmem [thread:$0]  %s10, 2048, %s132, [#allocation15], 128, 128, 8
    $region45: #{forward.1} parent=1 // pred_fallthru
      _
    // Predicated region
    $region46: #{forward.1} parent=1 // pred_check
      _
    $region47: #{forward.1} parent=1 // pred_check_branch
      %139 = sbr.rel (0) target = $region49
    $region48: #{forward.1} parent=1 // pred_region
      _
    $region49: #{forward.1} parent=1 // pred_fallthru
      _
    // Predicated region
    $region50: #{forward.1} parent=1 // pred_check
      _
    $region51: #{forward.1} parent=1 // pred_check_branch
      %141 = sbr.rel (0) target = $region53
    $region52: #{forward.1} parent=1 // pred_region
      %s143 = ssub.s32 64, 64
      %144 = vsyncadd [#allocation18], %s143
      %s146 = sshll.u32 [#allocation17], 4
      %s147 = int_to_ptr.vmem [resolvable:$true] %s146
      %149 = dma.hbm_to_vmem [thread:$0]  %s12, 64, %s147, [#allocation18]
    $region53: #{forward.1} parent=1 // pred_fallthru
      _
    // Predicated region
    $region54: #{forward.1} parent=1 // pred_check
      _
    $region55: #{forward.1} parent=1 // pred_check_branch
      %151 = sbr.rel (0) target = $region57
    $region56: #{forward.1} parent=1 // pred_region
      _
    $region57: #{forward.1} parent=1 // pred_fallthru
      _
    // Predicated region
    $region58: #{forward.1} parent=1 // pred_check
      _
    $region59: #{forward.1} parent=1 // pred_check_branch
      %153 = sbr.rel (0) target = $region61
    $region60: #{forward.1} parent=1 // pred_region
      %s155 = ssub.s32 1024, 1024
      %156 = vsyncadd [#allocation18], %s155
      %s157 = sshll.u32 [#allocation19], 4
      %s158 = int_to_ptr.vmem [resolvable:$true] %s157
      %163 = dma.hbm_to_vmem [thread:$0]  %s14, 1024, %s158, [#allocation18], 64, 64, 4
    $region61: #{forward.1} parent=1 // pred_fallthru
      _
    // Predicated region
    $region62: #{forward.1} parent=1 // pred_check
      _
    $region63: #{forward.1} parent=1 // pred_check_branch
      %165 = sbr.rel (0) target = $region65
    $region64: #{forward.1} parent=1 // pred_region
      _
    $region65: #{forward.1} parent=1 // pred_fallthru
      _
    // Predicated region
    $region66: #{forward.1} parent=1 // pred_check
      _
    $region67: #{forward.1} parent=1 // pred_check_branch
      %167 = sbr.rel (0) target = $region69
    $region68: #{forward.1} parent=1 // pred_region
      _
    $region69: #{forward.1} parent=1 // pred_fallthru
      _
    // Predicated region
    $region70: #{forward.1} parent=1 // pred_check
      _
    $region71: #{forward.1} parent=1 // pred_check_branch
      %169 = sbr.rel (0) target = $region73
    $region72: #{forward.1} parent=1 // pred_region
      _
    $region73: #{forward.1} parent=1 // pred_fallthru
      _
    // Predicated region
    $region74: #{forward.1} parent=1 // pred_check
      _
    $region75: #{forward.1} parent=1 // pred_check_branch
      %171 = sbr.rel (0) target = $region77
    $region76: #{forward.1} parent=1 // pred_region
      %172 = dma.done [#allocation3], 2560
    $region77: #{forward.1} parent=1 // pred_fallthru
      _
    // Predicated region
    $region78: #{forward.1} parent=1 // pred_check
      _
    $region79: #{forward.1} parent=1 // pred_check_branch
      %174 = sbr.rel (0) target = $region81
    $region80: #{forward.1} parent=1 // pred_region
      %175 = dma.done [#allocation6], 32
    $region81: #{forward.1} parent=1 // pred_fallthru
      _
    // Predicated region
    $region82: #{forward.1} parent=1 // pred_check
      _
    $region83: #{forward.1} parent=1 // pred_check_branch
      %177 = sbr.rel (0) target = $region85
    $region84: #{forward.1} parent=1 // pred_region
      %178 = dma.done [#allocation6], 2048
    $region85: #{forward.1} parent=1 // pred_fallthru
      _
    // Predicated region
    $region86: #{forward.1} parent=1 // pred_check
      _
    $region87: #{forward.1} parent=1 // pred_check_branch
      %180 = sbr.rel (0) target = $region89
    $region88: #{forward.1} parent=1 // pred_region
      %181 = dma.done [#allocation9], 1792
    $region89: #{forward.1} parent=1 // pred_fallthru
      _
    // Predicated region
    $region90: #{forward.1} parent=1 // pred_check
      _
    $region91: #{forward.1} parent=1 // pred_check_branch
      %183 = sbr.rel (0) target = $region93
    $region92: #{forward.1} parent=1 // pred_region
      %184 = dma.done [#allocation9], 2048
    $region93: #{forward.1} parent=1 // pred_fallthru
      _
    // Predicated region
    $region94: #{forward.1} parent=1 // pred_check
      _
    $region95: #{forward.1} parent=1 // pred_check_branch
      %186 = sbr.rel (0) target = $region97
    $region96: #{forward.1} parent=1 // pred_region
      %187 = dma.done [#allocation12], 10240
    $region97: #{forward.1} parent=1 // pred_fallthru
      _
    // Predicated region
    $region98: #{forward.1} parent=1 // pred_check
      _
    $region99: #{forward.1} parent=1 // pred_check_branch
      %189 = sbr.rel (0) target = $region101
    $region100: #{forward.1} parent=1 // pred_region
      %190 = dma.done [#allocation12], 32
    $region101: #{forward.1} parent=1 // pred_fallthru
      _
    // Predicated region
    $region102: #{forward.1} parent=1 // pred_check
      _
    $region103: #{forward.1} parent=1 // pred_check_branch
      %192 = sbr.rel (0) target = $region105
    $region104: #{forward.1} parent=1 // pred_region
      %193 = dma.done [#allocation15], 2048
    $region105: #{forward.1} parent=1 // pred_fallthru
      _
    // Predicated region
    $region106: #{forward.1} parent=1 // pred_check
      _
    $region107: #{forward.1} parent=1 // pred_check_branch
      %195 = sbr.rel (0) target = $region109
    $region108: #{forward.1} parent=1 // pred_region
      %196 = dma.done [#allocation15], 2048
    $region109: #{forward.1} parent=1 // pred_fallthru
      _
    // Predicated region
    $region110: #{forward.1} parent=1 // pred_check
      _
    $region111: #{forward.1} parent=1 // pred_check_branch
      %198 = sbr.rel (0) target = $region113
    $region112: #{forward.1} parent=1 // pred_region
      %199 = dma.done [#allocation18], 64
    $region113: #{forward.1} parent=1 // pred_fallthru
      _
    // Predicated region
    $region114: #{forward.1} parent=1 // pred_check
      _
    $region115: #{forward.1} parent=1 // pred_check_branch
      %201 = sbr.rel (0) target = $region117
    $region116: #{forward.1} parent=1 // pred_region
      %202 = dma.done [#allocation18], 1024
    $region117: #{forward.1} parent=1 // pred_fallthru
      _
    %v204 = vld [vmem:[%s0] sm:$0xf]
    %v205 = vld [vmem:[%s0 + $0x4] sm:$0xf]
    %v206 = vld [vmem:[%s0 + $0x8] sm:$0xf]
    %v207 = vld [vmem:[%s0 + $0xc] sm:$0xf]
    %v208 = vld [vmem:[%s0 + $0x10] sm:$0xf]
    %v209 = vld [vmem:[%s0 + $0x14] sm:$0xf]
    %v210 = vld [vmem:[%s0 + $0x18] sm:$0xf]
    %v211 = vld [vmem:[%s0 + $0x1c] sm:$0xf]
    %v212 = vld [vmem:[%s0 + $0x20] sm:$0xf]
    %v213 = vld [vmem:[%s0 + $0x24] sm:$0xf]
    %v214 = vld [vmem:[%s0 + $0x28] sm:$0xf]
    %v215 = vld [vmem:[%s0 + $0x2c] sm:$0xf]
    %v216 = vld [vmem:[%s0 + $0x30] sm:$0xf]
    %v217 = vld [vmem:[%s0 + $0x34] sm:$0xf]
    %v218 = vld [vmem:[%s0 + $0x38] sm:$0xf]
    %v219 = vld [vmem:[%s0 + $0x3c] sm:$0xf]
    %v220 = vld [vmem:[%s0 + $0x40] sm:$0xf]
    %v221 = vld [vmem:[%s0 + $0x44] sm:$0xf]
    %v222 = vld [vmem:[%s0 + $0x48] sm:$0xf]
    %v223 = vld [vmem:[%s0 + $0x4c] sm:$0xf]
    %v224 = vld [vmem:[%s0 + $0x50] sm:$0xf]
    %v225 = vld [vmem:[%s0 + $0x54] sm:$0xf]
    %v226 = vld [vmem:[%s0 + $0x58] sm:$0xf]
    %v227 = vld [vmem:[%s0 + $0x5c] sm:$0xf]
    %v228 = vld [vmem:[%s0 + $0x60] sm:$0xf]
    %v229 = vld [vmem:[%s0 + $0x64] sm:$0xf]
    %v230 = vld [vmem:[%s0 + $0x68] sm:$0xf]
    %v231 = vld [vmem:[%s0 + $0x6c] sm:$0xf]
    %v232 = vld [vmem:[%s0 + $0x70] sm:$0xf]
    %v233 = vld [vmem:[%s0 + $0x74] sm:$0xf]
    %v234 = vld [vmem:[%s0 + $0x78] sm:$0xf]
    %v235 = vld [vmem:[%s0 + $0x7c] sm:$0xf]
    %v236 = vld [vmem:[#allocation2] sm:$0xff]
    %v237 = vld [vmem:[#allocation2 + $0x8] sm:$0xff]
    %v238 = vld [vmem:[#allocation2 + $0x10] sm:$0xff]
    %v239 = vld [vmem:[#allocation2 + $0x18] sm:$0xff]
    %s240 = scalar_lea.vmem [#allocation2], 32
    %v241 = vld [vmem:[%s240] sm:$0xff]
    %v242 = vld [vmem:[%s240 + $0x8] sm:$0xff]
    %v243 = vld [vmem:[%s240 + $0x10] sm:$0xff]
    %v244 = vld [vmem:[%s240 + $0x18] sm:$0xff]
    %v277 = vunpack.c.l.b16 %v204
    %v278 = vunpack.c.l.b16 %v205
    %v279 = vunpack.c.l.b16 %v206
    %v280 = vunpack.c.l.b16 %v207
    %v281 = vunpack.c.l.b16 %v208
    %v282 = vunpack.c.l.b16 %v209
    %v283 = vunpack.c.l.b16 %v210
    %v284 = vunpack.c.l.b16 %v211
    %v285 = vunpack.c.l.b16 %v212
    %v286 = vunpack.c.l.b16 %v213
    %v287 = vunpack.c.l.b16 %v214
    %v288 = vunpack.c.l.b16 %v215
    %v289 = vunpack.c.l.b16 %v216
    %v290 = vunpack.c.l.b16 %v217
    %v291 = vunpack.c.l.b16 %v218
    %v292 = vunpack.c.l.b16 %v219
    %v293 = vunpack.c.l.b16 %v220
    %v294 = vunpack.c.l.b16 %v221
    %v295 = vunpack.c.l.b16 %v222
    %v296 = vunpack.c.l.b16 %v223
    %v297 = vunpack.c.l.b16 %v224
    %v298 = vunpack.c.l.b16 %v225
    %v299 = vunpack.c.l.b16 %v226
    %v300 = vunpack.c.l.b16 %v227
    %v301 = vunpack.c.l.b16 %v228
    %v302 = vunpack.c.l.b16 %v229
    %v303 = vunpack.c.l.b16 %v230
    %v304 = vunpack.c.l.b16 %v231
    %v305 = vunpack.c.l.b16 %v232
    %v306 = vunpack.c.l.b16 %v233
    %v307 = vunpack.c.l.b16 %v234
    %v308 = vunpack.c.l.b16 %v235
    %v309 = vpack.c.b16 %v278, %v277
    %v310 = vpack.c.b16 %v280, %v279
    %v311 = vpack.c.b16 %v282, %v281
    %v312 = vpack.c.b16 %v284, %v283
    %v313 = vpack.c.b16 %v286, %v285
    %v314 = vpack.c.b16 %v288, %v287
    %v315 = vpack.c.b16 %v290, %v289
    %v316 = vpack.c.b16 %v292, %v291
    %v317 = vpack.c.b16 %v294, %v293
    %v318 = vpack.c.b16 %v296, %v295
    %v319 = vpack.c.b16 %v298, %v297
    %v320 = vpack.c.b16 %v300, %v299
    %v321 = vpack.c.b16 %v302, %v301
    %v322 = vpack.c.b16 %v304, %v303
    %v323 = vpack.c.b16 %v306, %v305
    %v324 = vpack.c.b16 %v308, %v307
    %vm325 = vsmask.f32 7424
    %v327 = vshrl.u32 %v309, 16
    %v329 = vshll.u32 %v309, 16
    %v331 = vrot.slane %v329, 1
    %v332 = vor.u32 %v327, %v331
    %v334 = vshll.u32 %v310, 16
    %v336 = vrot.slane %v334, 1
    %v337 = vsel %vm325, %v332, %v336
    %v338 = vshrl.u32 %v310, 16
    %v340 = vor.u32 %v338, %v336
    %v342 = vshll.u32 %v311, 16
    %v344 = vrot.slane %v342, 1
    %v345 = vsel %vm325, %v340, %v344
    %v346 = vshrl.u32 %v311, 16
    %v348 = vor.u32 %v346, %v344
    %v350 = vshll.u32 %v312, 16
    %v352 = vrot.slane %v350, 1
    %v353 = vsel %vm325, %v348, %v352
    %v354 = vshrl.u32 %v312, 16
    %v356 = vor.u32 %v354, %v352
    %v358 = vshll.u32 %v313, 16
    %v360 = vrot.slane %v358, 1
    %v361 = vsel %vm325, %v356, %v360
    %v362 = vshrl.u32 %v313, 16
    %v364 = vor.u32 %v362, %v360
    %v366 = vshll.u32 %v314, 16
    %v368 = vrot.slane %v366, 1
    %v369 = vsel %vm325, %v364, %v368
    %v370 = vshrl.u32 %v314, 16
    %v372 = vor.u32 %v370, %v368
    %v374 = vshll.u32 %v315, 16
    %v376 = vrot.slane %v374, 1
    %v377 = vsel %vm325, %v372, %v376
    %v378 = vshrl.u32 %v315, 16
    %v380 = vor.u32 %v378, %v376
    %v382 = vshll.u32 %v316, 16
    %v384 = vrot.slane %v382, 1
    %v385 = vsel %vm325, %v380, %v384
    %v386 = vshrl.u32 %v316, 16
    %v388 = vor.u32 %v386, %v384
    %v390 = vshll.u32 %v317, 16
    %v392 = vrot.slane %v390, 1
    %v393 = vsel %vm325, %v388, %v392
    %v394 = vshrl.u32 %v317, 16
    %v396 = vor.u32 %v394, %v392
    %v398 = vshll.u32 %v318, 16
    %v400 = vrot.slane %v398, 1
    %v401 = vsel %vm325, %v396, %v400
    %v402 = vshrl.u32 %v318, 16
    %v404 = vor.u32 %v402, %v400
    %v406 = vshll.u32 %v319, 16
    %v408 = vrot.slane %v406, 1
    %v409 = vsel %vm325, %v404, %v408
    %v410 = vshrl.u32 %v319, 16
    %v412 = vor.u32 %v410, %v408
    %v414 = vshll.u32 %v320, 16
    %v416 = vrot.slane %v414, 1
    %v417 = vsel %vm325, %v412, %v416
    %v418 = vshrl.u32 %v320, 16
    %v420 = vor.u32 %v418, %v416
    %v422 = vshll.u32 %v321, 16
    %v424 = vrot.slane %v422, 1
    %v425 = vsel %vm325, %v420, %v424
    %v426 = vshrl.u32 %v321, 16
    %v428 = vor.u32 %v426, %v424
    %v430 = vshll.u32 %v322, 16
    %v432 = vrot.slane %v430, 1
    %v433 = vsel %vm325, %v428, %v432
    %v434 = vshrl.u32 %v322, 16
    %v436 = vor.u32 %v434, %v432
    %v438 = vshll.u32 %v323, 16
    %v440 = vrot.slane %v438, 1
    %v441 = vsel %vm325, %v436, %v440
    %v442 = vshrl.u32 %v323, 16
    %v444 = vor.u32 %v442, %v440
    %v446 = vshll.u32 %v324, 16
    %v448 = vrot.slane %v446, 1
    %v449 = vsel %vm325, %v444, %v448
    %v450 = vshrl.u32 %v324, 16
    %v452 = vor.u32 %v450, %v448
    %v457 = vunpack.c.l.b16 %v241
    %v458 = vunpack.c.h.b16 %v241
    %v459 = vunpack.c.l.b16 %v242
    %v460 = vunpack.c.h.b16 %v242
    %v461 = vunpack.c.l.b16 %v243
    %v462 = vunpack.c.h.b16 %v243
    %v463 = vunpack.c.l.b16 %v244
    %v464 = vunpack.c.h.b16 %v244
    %v465 = vpack.c.b16 %v459, %v457
    %v466 = vpack.c.b16 %v460, %v458
    %v467 = vpack.c.b16 %v463, %v461
    %v468 = vpack.c.b16 %v464, %v462
    %vm473 = vcmask 261120
    %v475 = vsel %vm473, %v337, 0
    %v478 = vsel %vm473, %v345, 0
    %v481 = vsel %vm473, %v353, 0
    %v484 = vsel %vm473, %v361, 0
    %v487 = vsel %vm473, %v369, 0
    %v490 = vsel %vm473, %v377, 0
    %v493 = vsel %vm473, %v385, 0
    %v496 = vsel %vm473, %v393, 0
    %v499 = vsel %vm473, %v401, 0
    %v502 = vsel %vm473, %v409, 0
    %v505 = vsel %vm473, %v417, 0
    %v508 = vsel %vm473, %v425, 0
    %v511 = vsel %vm473, %v433, 0
    %v514 = vsel %vm473, %v441, 0
    %v517 = vsel %vm473, %v449, 0
    %v520 = vsel %vm473, %v452, 0
    %522 = vmatprep.subr.bf16.mxu0 0
    %523 = vmatpush1.bf16.msra.mxu0 0
    %524 = vmatprep.subr.bf16.mxu0 0
    %525 = vmatpush1.bf16.msra.mxu0 0
    %526 = vmatprep.subr.bf16.mxu0 0
    %527 = vmatpush1.bf16.msra.mxu0 0
    %528 = vmatprep.subr.bf16.mxu0 0
    %529 = vmatpush1.bf16.msra.mxu0 0
    %530 = vmatprep.subr.bf16.mxu0 0
    %531 = vmatpush1.bf16.msra.mxu0 0
    %532 = vmatprep.subr.bf16.mxu0 0
    %533 = vmatpush1.bf16.msra.mxu0 0
    %534 = vmatprep.subr.bf16.mxu0 %v468
    %535 = vmatpush1.bf16.msra.mxu0 %v467
    %536 = vmatprep.subr.bf16.mxu0 %v466
    %537 = vmatpush1.bf16.msra.mxu0 %v465
    %538 = vmatprep.subr.bf16.mxu0 0
    %539 = vmatpush2.bf16.msra.mxu0 0
    %540 = vmatprep.subr.bf16.mxu0 0
    %541 = vmatpush2.bf16.msra.mxu0 0
    %542 = vmatprep.subr.bf16.mxu0 0
    %543 = vmatpush2.bf16.msra.mxu0 0
    %544 = vmatprep.subr.bf16.mxu0 0
    %545 = vmatpush2.bf16.msra.mxu0 0
    %546 = vmatprep.subr.bf16.mxu0 0
    %547 = vmatpush2.bf16.msra.mxu0 0
    %548 = vmatprep.subr.bf16.mxu0 0
    %549 = vmatpush2.bf16.msra.mxu0 0
    %550 = vmatprep.subr.bf16.mxu0 0
    %551 = vmatpush2.bf16.msra.mxu0 0
    %552 = vmatprep.subr.bf16.mxu0 0
    %553 = vmatpush2.bf16.msra.mxu0 0
    %554 = vmatprep.mubr.bf16.mxu0 0
    %555 = vmatmul.mubr.bf16.gmra.mxu0 %v475
    %v556 = vpop.f32.mrf.mxu0
    %v557 = vadd.f32 0.0, %v556
    %v558 = vpop.f32.mrf.mxu0
    %v559 = vadd.f32 0.0, %v558
    %v560 = vpop.f32.mrf.mxu0
    %v561 = vadd.f32 0.0, %v560
    %v562 = vpop.f32.mrf.mxu0
    %v563 = vadd.f32 0.0, %v562
    %564 = vmatprep.mubr.bf16.mxu0 0
    %565 = vmatmul.mubr.bf16.gmra.mxu0 %v478
    %v566 = vpop.f32.mrf.mxu0
    %v567 = vadd.f32 0.0, %v566
    %v568 = vpop.f32.mrf.mxu0
    %v569 = vadd.f32 0.0, %v568
    %v570 = vpop.f32.mrf.mxu0
    %v571 = vadd.f32 0.0, %v570
    %v572 = vpop.f32.mrf.mxu0
    %v573 = vadd.f32 0.0, %v572
    %574 = vmatprep.mubr.bf16.mxu0 0
    %575 = vmatmul.mubr.bf16.gmra.mxu0 %v481
    %v576 = vpop.f32.mrf.mxu0
    %v577 = vadd.f32 0.0, %v576
    %v578 = vpop.f32.mrf.mxu0
    %v579 = vadd.f32 0.0, %v578
    %v580 = vpop.f32.mrf.mxu0
    %v581 = vadd.f32 0.0, %v580
    %v582 = vpop.f32.mrf.mxu0
    %v583 = vadd.f32 0.0, %v582
    %584 = vmatprep.mubr.bf16.mxu0 0
    %585 = vmatmul.mubr.bf16.gmra.mxu0 %v484
    %v586 = vpop.f32.mrf.mxu0
    %v587 = vadd.f32 0.0, %v586
    %v588 = vpop.f32.mrf.mxu0
    %v589 = vadd.f32 0.0, %v588
    %v590 = vpop.f32.mrf.mxu0
    %v591 = vadd.f32 0.0, %v590
    %v592 = vpop.f32.mrf.mxu0
    %v593 = vadd.f32 0.0, %v592
    %594 = vmatprep.mubr.bf16.mxu0 0
    %595 = vmatmul.mubr.bf16.gmra.mxu0 %v487
    %v596 = vpop.f32.mrf.mxu0
    %v597 = vadd.f32 0.0, %v596
    %v598 = vpop.f32.mrf.mxu0
    %v599 = vadd.f32 0.0, %v598
    %v600 = vpop.f32.mrf.mxu0
    %v601 = vadd.f32 0.0, %v600
    %v602 = vpop.f32.mrf.mxu0
    %v603 = vadd.f32 0.0, %v602
    %604 = vmatprep.mubr.bf16.mxu0 0
    %605 = vmatmul.mubr.bf16.gmra.mxu0 %v490
    %v606 = vpop.f32.mrf.mxu0
    %v607 = vadd.f32 0.0, %v606
    %v608 = vpop.f32.mrf.mxu0
    %v609 = vadd.f32 0.0, %v608
    %v610 = vpop.f32.mrf.mxu0
    %v611 = vadd.f32 0.0, %v610
    %v612 = vpop.f32.mrf.mxu0
    %v613 = vadd.f32 0.0, %v612
    %614 = vmatprep.mubr.bf16.mxu0 0
    %615 = vmatmul.mubr.bf16.gmra.mxu0 %v493
    %v616 = vpop.f32.mrf.mxu0
    %v617 = vadd.f32 0.0, %v616
    %v618 = vpop.f32.mrf.mxu0
    %v619 = vadd.f32 0.0, %v618
    %v620 = vpop.f32.mrf.mxu0
    %v621 = vadd.f32 0.0, %v620
    %v622 = vpop.f32.mrf.mxu0
    %v623 = vadd.f32 0.0, %v622
    %624 = vmatprep.mubr.bf16.mxu0 0
    %625 = vmatmul.mubr.bf16.gmra.mxu0 %v496
    %v626 = vpop.f32.mrf.mxu0
    %v627 = vadd.f32 0.0, %v626
    %v628 = vpop.f32.mrf.mxu0
    %v629 = vadd.f32 0.0, %v628
    %v630 = vpop.f32.mrf.mxu0
    %v631 = vadd.f32 0.0, %v630
    %v632 = vpop.f32.mrf.mxu0
    %v633 = vadd.f32 0.0, %v632
    %634 = vmatprep.mubr.bf16.mxu0 0
    %635 = vmatmul.mubr.bf16.gmra.mxu0 %v499
    %v636 = vpop.f32.mrf.mxu0
    %v637 = vadd.f32 0.0, %v636
    %v638 = vpop.f32.mrf.mxu0
    %v639 = vadd.f32 0.0, %v638
    %v640 = vpop.f32.mrf.mxu0
    %v641 = vadd.f32 0.0, %v640
    %v642 = vpop.f32.mrf.mxu0
    %v643 = vadd.f32 0.0, %v642
    %644 = vmatprep.mubr.bf16.mxu0 0
    %645 = vmatmul.mubr.bf16.gmra.mxu0 %v502
    %v646 = vpop.f32.mrf.mxu0
    %v647 = vadd.f32 0.0, %v646
    %v648 = vpop.f32.mrf.mxu0
    %v649 = vadd.f32 0.0, %v648
    %v650 = vpop.f32.mrf.mxu0
    %v651 = vadd.f32 0.0, %v650
    %v652 = vpop.f32.mrf.mxu0
    %v653 = vadd.f32 0.0, %v652
    %654 = vmatprep.mubr.bf16.mxu0 0
    %655 = vmatmul.mubr.bf16.gmra.mxu0 %v505
    %v656 = vpop.f32.mrf.mxu0
    %v657 = vadd.f32 0.0, %v656
    %v658 = vpop.f32.mrf.mxu0
    %v659 = vadd.f32 0.0, %v658
    %v660 = vpop.f32.mrf.mxu0
    %v661 = vadd.f32 0.0, %v660
    %v662 = vpop.f32.mrf.mxu0
    %v663 = vadd.f32 0.0, %v662
    %664 = vmatprep.mubr.bf16.mxu0 0
    %665 = vmatmul.mubr.bf16.gmra.mxu0 %v508
    %v666 = vpop.f32.mrf.mxu0
    %v667 = vadd.f32 0.0, %v666
    %v668 = vpop.f32.mrf.mxu0
    %v669 = vadd.f32 0.0, %v668
    %v670 = vpop.f32.mrf.mxu0
    %v671 = vadd.f32 0.0, %v670
    %v672 = vpop.f32.mrf.mxu0
    %v673 = vadd.f32 0.0, %v672
    %674 = vmatprep.mubr.bf16.mxu0 0
    %675 = vmatmul.mubr.bf16.gmra.mxu0 %v511
    %v676 = vpop.f32.mrf.mxu0
    %v677 = vadd.f32 0.0, %v676
    %v678 = vpop.f32.mrf.mxu0
    %v679 = vadd.f32 0.0, %v678
    %v680 = vpop.f32.mrf.mxu0
    %v681 = vadd.f32 0.0, %v680
    %v682 = vpop.f32.mrf.mxu0
    %v683 = vadd.f32 0.0, %v682
    %684 = vmatprep.mubr.bf16.mxu0 0
    %685 = vmatmul.mubr.bf16.gmra.mxu0 %v514
    %v686 = vpop.f32.mrf.mxu0
    %v687 = vadd.f32 0.0, %v686
    %v688 = vpop.f32.mrf.mxu0
    %v689 = vadd.f32 0.0, %v688
    %v690 = vpop.f32.mrf.mxu0
    %v691 = vadd.f32 0.0, %v690
    %v692 = vpop.f32.mrf.mxu0
    %v693 = vadd.f32 0.0, %v692
    %694 = vmatprep.mubr.bf16.mxu0 0
    %695 = vmatmul.mubr.bf16.gmra.mxu0 %v517
    %v696 = vpop.f32.mrf.mxu0
    %v697 = vadd.f32 0.0, %v696
    %v698 = vpop.f32.mrf.mxu0
    %v699 = vadd.f32 0.0, %v698
    %v700 = vpop.f32.mrf.mxu0
    %v701 = vadd.f32 0.0, %v700
    %v702 = vpop.f32.mrf.mxu0
    %v703 = vadd.f32 0.0, %v702
    %704 = vmatprep.mubr.bf16.mxu0 0
    %705 = vmatmul.mubr.bf16.gmra.mxu0 %v520
    %v706 = vpop.f32.mrf.mxu0
    %v707 = vadd.f32 0.0, %v706
    %v708 = vpop.f32.mrf.mxu0
    %v709 = vadd.f32 0.0, %v708
    %v710 = vpop.f32.mrf.mxu0
    %v711 = vadd.f32 0.0, %v710
    %v712 = vpop.f32.mrf.mxu0
    %v713 = vadd.f32 0.0, %v712
    %714 = vdwg.mxu0
    %v719 = vunpack.c.l.b16 %v236
    %v720 = vunpack.c.h.b16 %v236
    %v721 = vunpack.c.l.b16 %v237
    %v722 = vunpack.c.h.b16 %v237
    %v723 = vunpack.c.l.b16 %v238
    %v724 = vunpack.c.h.b16 %v238
    %v725 = vunpack.c.l.b16 %v239
    %v726 = vunpack.c.h.b16 %v239
    %v727 = vpack.c.b16 %v721, %v719
    %v728 = vpack.c.b16 %v722, %v720
    %v729 = vpack.c.b16 %v725, %v723
    %v730 = vpack.c.b16 %v726, %v724
    %v735 = vsel %vm473, %v309, 0
    %v737 = vsel %vm473, %v310, 0
    %v739 = vsel %vm473, %v311, 0
    %v741 = vsel %vm473, %v312, 0
    %v743 = vsel %vm473, %v313, 0
    %v745 = vsel %vm473, %v314, 0
    %v747 = vsel %vm473, %v315, 0
    %v749 = vsel %vm473, %v316, 0
    %v751 = vsel %vm473, %v317, 0
    %v753 = vsel %vm473, %v318, 0
    %v755 = vsel %vm473, %v319, 0
    %v757 = vsel %vm473, %v320, 0
    %v759 = vsel %vm473, %v321, 0
    %v761 = vsel %vm473, %v322, 0
    %v763 = vsel %vm473, %v323, 0
    %v765 = vsel %vm473, %v324, 0
    %767 = vmatprep.subr.bf16.mxu0 0
    %768 = vmatpush1.bf16.msra.mxu0 0
    %769 = vmatprep.subr.bf16.mxu0 0
    %770 = vmatpush1.bf16.msra.mxu0 0
    %771 = vmatprep.subr.bf16.mxu0 0
    %772 = vmatpush1.bf16.msra.mxu0 0
    %773 = vmatprep.subr.bf16.mxu0 0
    %774 = vmatpush1.bf16.msra.mxu0 0
    %775 = vmatprep.subr.bf16.mxu0 0
    %776 = vmatpush1.bf16.msra.mxu0 0
    %777 = vmatprep.subr.bf16.mxu0 0
    %778 = vmatpush1.bf16.msra.mxu0 0
    %779 = vmatprep.subr.bf16.mxu0 %v730
    %780 = vmatpush1.bf16.msra.mxu0 %v729
    %781 = vmatprep.subr.bf16.mxu0 %v728
    %782 = vmatpush1.bf16.msra.mxu0 %v727
    %783 = vmatprep.subr.bf16.mxu0 0
    %784 = vmatpush2.bf16.msra.mxu0 0
    %785 = vmatprep.subr.bf16.mxu0 0
    %786 = vmatpush2.bf16.msra.mxu0 0
    %787 = vmatprep.subr.bf16.mxu0 0
    %788 = vmatpush2.bf16.msra.mxu0 0
    %789 = vmatprep.subr.bf16.mxu0 0
    %790 = vmatpush2.bf16.msra.mxu0 0
    %791 = vmatprep.subr.bf16.mxu0 0
    %792 = vmatpush2.bf16.msra.mxu0 0
    %793 = vmatprep.subr.bf16.mxu0 0
    %794 = vmatpush2.bf16.msra.mxu0 0
    %795 = vmatprep.subr.bf16.mxu0 0
    %796 = vmatpush2.bf16.msra.mxu0 0
    %797 = vmatprep.subr.bf16.mxu0 0
    %798 = vmatpush2.bf16.msra.mxu0 0
    %799 = vmatprep.mubr.bf16.mxu0 0
    %800 = vmatmul.mubr.bf16.gmra.mxu0 %v735
    %v801 = vpop.f32.mrf.mxu0
    %v802 = vadd.f32 %v557, %v801
    %v803 = vpop.f32.mrf.mxu0
    %v804 = vadd.f32 %v559, %v803
    %v805 = vpop.f32.mrf.mxu0
    %v806 = vadd.f32 %v561, %v805
    %v807 = vpop.f32.mrf.mxu0
    %v808 = vadd.f32 %v563, %v807
    %809 = vmatprep.mubr.bf16.mxu0 0
    %810 = vmatmul.mubr.bf16.gmra.mxu0 %v737
    %v811 = vpop.f32.mrf.mxu0
    %v812 = vadd.f32 %v567, %v811
    %v813 = vpop.f32.mrf.mxu0
    %v814 = vadd.f32 %v569, %v813
    %v815 = vpop.f32.mrf.mxu0
    %v816 = vadd.f32 %v571, %v815
    %v817 = vpop.f32.mrf.mxu0
    %v818 = vadd.f32 %v573, %v817
    %819 = vmatprep.mubr.bf16.mxu0 0
    %820 = vmatmul.mubr.bf16.gmra.mxu0 %v739
    %v821 = vpop.f32.mrf.mxu0
    %v822 = vadd.f32 %v577, %v821
    %v823 = vpop.f32.mrf.mxu0
    %v824 = vadd.f32 %v579, %v823
    %v825 = vpop.f32.mrf.mxu0
    %v826 = vadd.f32 %v581, %v825
    %v827 = vpop.f32.mrf.mxu0
    %v828 = vadd.f32 %v583, %v827
    %829 = vmatprep.mubr.bf16.mxu0 0
    %830 = vmatmul.mubr.bf16.gmra.mxu0 %v741
    %v831 = vpop.f32.mrf.mxu0
    %v832 = vadd.f32 %v587, %v831
    %v833 = vpop.f32.mrf.mxu0
    %v834 = vadd.f32 %v589, %v833
    %v835 = vpop.f32.mrf.mxu0
    %v836 = vadd.f32 %v591, %v835
    %v837 = vpop.f32.mrf.mxu0
    %v838 = vadd.f32 %v593, %v837
    %839 = vmatprep.mubr.bf16.mxu0 0
    %840 = vmatmul.mubr.bf16.gmra.mxu0 %v743
    %v841 = vpop.f32.mrf.mxu0
    %v842 = vadd.f32 %v597, %v841
    %v843 = vpop.f32.mrf.mxu0
    %v844 = vadd.f32 %v599, %v843
    %v845 = vpop.f32.mrf.mxu0
    %v846 = vadd.f32 %v601, %v845
    %v847 = vpop.f32.mrf.mxu0
    %v848 = vadd.f32 %v603, %v847
    %849 = vmatprep.mubr.bf16.mxu0 0
    %850 = vmatmul.mubr.bf16.gmra.mxu0 %v745
    %v851 = vpop.f32.mrf.mxu0
    %v852 = vadd.f32 %v607, %v851
    %v853 = vpop.f32.mrf.mxu0
    %v854 = vadd.f32 %v609, %v853
    %v855 = vpop.f32.mrf.mxu0
    %v856 = vadd.f32 %v611, %v855
    %v857 = vpop.f32.mrf.mxu0
    %v858 = vadd.f32 %v613, %v857
    %859 = vmatprep.mubr.bf16.mxu0 0
    %860 = vmatmul.mubr.bf16.gmra.mxu0 %v747
    %v861 = vpop.f32.mrf.mxu0
    %v862 = vadd.f32 %v617, %v861
    %v863 = vpop.f32.mrf.mxu0
    %v864 = vadd.f32 %v619, %v863
    %v865 = vpop.f32.mrf.mxu0
    %v866 = vadd.f32 %v621, %v865
    %v867 = vpop.f32.mrf.mxu0
    %v868 = vadd.f32 %v623, %v867
    %869 = vmatprep.mubr.bf16.mxu0 0
    %870 = vmatmul.mubr.bf16.gmra.mxu0 %v749
    %v871 = vpop.f32.mrf.mxu0
    %v872 = vadd.f32 %v627, %v871
    %v873 = vpop.f32.mrf.mxu0
    %v874 = vadd.f32 %v629, %v873
    %v875 = vpop.f32.mrf.mxu0
    %v876 = vadd.f32 %v631, %v875
    %v877 = vpop.f32.mrf.mxu0
    %v878 = vadd.f32 %v633, %v877
    %879 = vmatprep.mubr.bf16.mxu0 0
    %880 = vmatmul.mubr.bf16.gmra.mxu0 %v751
    %v881 = vpop.f32.mrf.mxu0
    %v882 = vadd.f32 %v637, %v881
    %v883 = vpop.f32.mrf.mxu0
    %v884 = vadd.f32 %v639, %v883
    %v885 = vpop.f32.mrf.mxu0
    %v886 = vadd.f32 %v641, %v885
    %v887 = vpop.f32.mrf.mxu0
    %v888 = vadd.f32 %v643, %v887
    %889 = vmatprep.mubr.bf16.mxu0 0
    %890 = vmatmul.mubr.bf16.gmra.mxu0 %v753
    %v891 = vpop.f32.mrf.mxu0
    %v892 = vadd.f32 %v647, %v891
    %v893 = vpop.f32.mrf.mxu0
    %v894 = vadd.f32 %v649, %v893
    %v895 = vpop.f32.mrf.mxu0
    %v896 = vadd.f32 %v651, %v895
    %v897 = vpop.f32.mrf.mxu0
    %v898 = vadd.f32 %v653, %v897
    %899 = vmatprep.mubr.bf16.mxu0 0
    %900 = vmatmul.mubr.bf16.gmra.mxu0 %v755
    %v901 = vpop.f32.mrf.mxu0
    %v902 = vadd.f32 %v657, %v901
    %v903 = vpop.f32.mrf.mxu0
    %v904 = vadd.f32 %v659, %v903
    %v905 = vpop.f32.mrf.mxu0
    %v906 = vadd.f32 %v661, %v905
    %v907 = vpop.f32.mrf.mxu0
    %v908 = vadd.f32 %v663, %v907
    %909 = vmatprep.mubr.bf16.mxu0 0
    %910 = vmatmul.mubr.bf16.gmra.mxu0 %v757
    %v911 = vpop.f32.mrf.mxu0
    %v912 = vadd.f32 %v667, %v911
    %v913 = vpop.f32.mrf.mxu0
    %v914 = vadd.f32 %v669, %v913
    %v915 = vpop.f32.mrf.mxu0
    %v916 = vadd.f32 %v671, %v915
    %v917 = vpop.f32.mrf.mxu0
    %v918 = vadd.f32 %v673, %v917
    %919 = vmatprep.mubr.bf16.mxu0 0
    %920 = vmatmul.mubr.bf16.gmra.mxu0 %v759
    %v921 = vpop.f32.mrf.mxu0
    %v922 = vadd.f32 %v677, %v921
    %v923 = vpop.f32.mrf.mxu0
    %v924 = vadd.f32 %v679, %v923
    %v925 = vpop.f32.mrf.mxu0
    %v926 = vadd.f32 %v681, %v925
    %v927 = vpop.f32.mrf.mxu0
    %v928 = vadd.f32 %v683, %v927
    %929 = vmatprep.mubr.bf16.mxu0 0
    %930 = vmatmul.mubr.bf16.gmra.mxu0 %v761
    %v931 = vpop.f32.mrf.mxu0
    %v932 = vadd.f32 %v687, %v931
    %v933 = vpop.f32.mrf.mxu0
    %v934 = vadd.f32 %v689, %v933
    %v935 = vpop.f32.mrf.mxu0
    %v936 = vadd.f32 %v691, %v935
    %v937 = vpop.f32.mrf.mxu0
    %v938 = vadd.f32 %v693, %v937
    %939 = vmatprep.mubr.bf16.mxu0 0
    %940 = vmatmul.mubr.bf16.gmra.mxu0 %v763
    %v941 = vpop.f32.mrf.mxu0
    %v942 = vadd.f32 %v697, %v941
    %v943 = vpop.f32.mrf.mxu0
    %v944 = vadd.f32 %v699, %v943
    %v945 = vpop.f32.mrf.mxu0
    %v946 = vadd.f32 %v701, %v945
    %v947 = vpop.f32.mrf.mxu0
    %v948 = vadd.f32 %v703, %v947
    %949 = vmatprep.mubr.bf16.mxu0 0
    %950 = vmatmul.mubr.bf16.gmra.mxu0 %v765
    %v951 = vpop.f32.mrf.mxu0
    %v952 = vadd.f32 %v707, %v951
    %v953 = vpop.f32.mrf.mxu0
    %v954 = vadd.f32 %v709, %v953
    %v955 = vpop.f32.mrf.mxu0
    %v956 = vadd.f32 %v711, %v955
    %v957 = vpop.f32.mrf.mxu0
    %v958 = vadd.f32 %v713, %v957
    %959 = vdwg.mxu0
    %s960 = scalar_lea.vmem [#allocation2], 64
    %v961 = vld [vmem:[%s960] sm:$0xff]
    %v962 = vld [vmem:[%s960 + $0x8] sm:$0xff]
    %v963 = vld [vmem:[%s960 + $0x10] sm:$0xff]
    %v964 = vld [vmem:[%s960 + $0x18] sm:$0xff]
    %vm965 = vcmask 1046528
    %v966 = vrot.slane %v309, 1
    %v967 = vrot.slane %v310, 1
    %v968 = vsel %vm965, %v966, %v967
    %v969 = vrot.slane %v311, 1
    %v970 = vsel %vm965, %v967, %v969
    %v971 = vrot.slane %v312, 1
    %v972 = vsel %vm965, %v969, %v971
    %v973 = vrot.slane %v313, 1
    %v974 = vsel %vm965, %v971, %v973
    %v975 = vrot.slane %v314, 1
    %v976 = vsel %vm965, %v973, %v975
    %v977 = vrot.slane %v315, 1
    %v978 = vsel %vm965, %v975, %v977
    %v979 = vrot.slane %v316, 1
    %v980 = vsel %vm965, %v977, %v979
    %v981 = vrot.slane %v317, 1
    %v982 = vsel %vm965, %v979, %v981
    %v983 = vrot.slane %v318, 1
    %v984 = vsel %vm965, %v981, %v983
    %v985 = vrot.slane %v319, 1
    %v986 = vsel %vm965, %v983, %v985
    %v987 = vrot.slane %v320, 1
    %v988 = vsel %vm965, %v985, %v987
    %v989 = vrot.slane %v321, 1
    %v990 = vsel %vm965, %v987, %v989
    %v991 = vrot.slane %v322, 1
    %v992 = vsel %vm965, %v989, %v991
    %v993 = vrot.slane %v323, 1
    %v994 = vsel %vm965, %v991, %v993
    %v995 = vrot.slane %v324, 1
    %v996 = vsel %vm965, %v993, %v995
    %v1001 = vunpack.c.l.b16 %v961
    %v1002 = vunpack.c.h.b16 %v961
    %v1003 = vunpack.c.l.b16 %v962
    %v1004 = vunpack.c.h.b16 %v962
    %v1005 = vunpack.c.l.b16 %v963
    %v1006 = vunpack.c.h.b16 %v963
    %v1007 = vunpack.c.l.b16 %v964
    %v1008 = vunpack.c.h.b16 %v964
    %v1009 = vpack.c.b16 %v1003, %v1001
    %v1010 = vpack.c.b16 %v1004, %v1002
    %v1011 = vpack.c.b16 %v1007, %v1005
    %v1012 = vpack.c.b16 %v1008, %v1006
    %v1018 = vsel %vm473, %v968, 0
    %v1021 = vsel %vm473, %v970, 0
    %v1024 = vsel %vm473, %v972, 0
    %v1027 = vsel %vm473, %v974, 0
    %v1030 = vsel %vm473, %v976, 0
    %v1033 = vsel %vm473, %v978, 0
    %v1036 = vsel %vm473, %v980, 0
    %v1039 = vsel %vm473, %v982, 0
    %v1042 = vsel %vm473, %v984, 0
    %v1045 = vsel %vm473, %v986, 0
    %v1048 = vsel %vm473, %v988, 0
    %v1051 = vsel %vm473, %v990, 0
    %v1054 = vsel %vm473, %v992, 0
    %v1057 = vsel %vm473, %v994, 0
    %v1060 = vsel %vm473, %v996, 0
    %v1063 = vsel %vm473, %v995, 0
    %1065 = vmatprep.subr.bf16.mxu0 0
    %1066 = vmatpush1.bf16.msra.mxu0 0
    %1067 = vmatprep.subr.bf16.mxu0 0
    %1068 = vmatpush1.bf16.msra.mxu0 0
    %1069 = vmatprep.subr.bf16.mxu0 0
    %1070 = vmatpush1.bf16.msra.mxu0 0
    %1071 = vmatprep.subr.bf16.mxu0 0
    %1072 = vmatpush1.bf16.msra.mxu0 0
    %1073 = vmatprep.subr.bf16.mxu0 0
    %1074 = vmatpush1.bf16.msra.mxu0 0
    %1075 = vmatprep.subr.bf16.mxu0 0
    %1076 = vmatpush1.bf16.msra.mxu0 0
    %1077 = vmatprep.subr.bf16.mxu0 %v1012
    %1078 = vmatpush1.bf16.msra.mxu0 %v1011
    %1079 = vmatprep.subr.bf16.mxu0 %v1010
    %1080 = vmatpush1.bf16.msra.mxu0 %v1009
    %1081 = vmatprep.subr.bf16.mxu0 0
    %1082 = vmatpush2.bf16.msra.mxu0 0
    %1083 = vmatprep.subr.bf16.mxu0 0
    %1084 = vmatpush2.bf16.msra.mxu0 0
    %1085 = vmatprep.subr.bf16.mxu0 0
    %1086 = vmatpush2.bf16.msra.mxu0 0
    %1087 = vmatprep.subr.bf16.mxu0 0
    %1088 = vmatpush2.bf16.msra.mxu0 0
    %1089 = vmatprep.subr.bf16.mxu0 0
    %1090 = vmatpush2.bf16.msra.mxu0 0
    %1091 = vmatprep.subr.bf16.mxu0 0
    %1092 = vmatpush2.bf16.msra.mxu0 0
    %1093 = vmatprep.subr.bf16.mxu0 0
    %1094 = vmatpush2.bf16.msra.mxu0 0
    %1095 = vmatprep.subr.bf16.mxu0 0
    %1096 = vmatpush2.bf16.msra.mxu0 0
    %1097 = vmatprep.mubr.bf16.mxu0 0
    %1098 = vmatmul.mubr.bf16.gmra.mxu0 %v1018
    %v1099 = vpop.f32.mrf.mxu0
    %v1100 = vadd.f32 0.0, %v1099
    %v1101 = vpop.f32.mrf.mxu0
    %v1102 = vadd.f32 0.0, %v1101
    %v1103 = vpop.f32.mrf.mxu0
    %v1104 = vadd.f32 0.0, %v1103
    %v1105 = vpop.f32.mrf.mxu0
    %v1106 = vadd.f32 0.0, %v1105
    %1107 = vmatprep.mubr.bf16.mxu0 0
    %1108 = vmatmul.mubr.bf16.gmra.mxu0 %v1021
    %v1109 = vpop.f32.mrf.mxu0
    %v1110 = vadd.f32 0.0, %v1109
    %v1111 = vpop.f32.mrf.mxu0
    %v1112 = vadd.f32 0.0, %v1111
    %v1113 = vpop.f32.mrf.mxu0
    %v1114 = vadd.f32 0.0, %v1113
    %v1115 = vpop.f32.mrf.mxu0
    %v1116 = vadd.f32 0.0, %v1115
    %1117 = vmatprep.mubr.bf16.mxu0 0
    %1118 = vmatmul.mubr.bf16.gmra.mxu0 %v1024
    %v1119 = vpop.f32.mrf.mxu0
    %v1120 = vadd.f32 0.0, %v1119
    %v1121 = vpop.f32.mrf.mxu0
    %v1122 = vadd.f32 0.0, %v1121
    %v1123 = vpop.f32.mrf.mxu0
    %v1124 = vadd.f32 0.0, %v1123
    %v1125 = vpop.f32.mrf.mxu0
    %v1126 = vadd.f32 0.0, %v1125
    %1127 = vmatprep.mubr.bf16.mxu0 0
    %1128 = vmatmul.mubr.bf16.gmra.mxu0 %v1027
    %v1129 = vpop.f32.mrf.mxu0
    %v1130 = vadd.f32 0.0, %v1129
    %v1131 = vpop.f32.mrf.mxu0
    %v1132 = vadd.f32 0.0, %v1131
    %v1133 = vpop.f32.mrf.mxu0
    %v1134 = vadd.f32 0.0, %v1133
    %v1135 = vpop.f32.mrf.mxu0
    %v1136 = vadd.f32 0.0, %v1135
    %1137 = vmatprep.mubr.bf16.mxu0 0
    %1138 = vmatmul.mubr.bf16.gmra.mxu0 %v1030
    %v1139 = vpop.f32.mrf.mxu0
    %v1140 = vadd.f32 0.0, %v1139
    %v1141 = vpop.f32.mrf.mxu0
    %v1142 = vadd.f32 0.0, %v1141
    %v1143 = vpop.f32.mrf.mxu0
    %v1144 = vadd.f32 0.0, %v1143
    %v1145 = vpop.f32.mrf.mxu0
    %v1146 = vadd.f32 0.0, %v1145
    %1147 = vmatprep.mubr.bf16.mxu0 0
    %1148 = vmatmul.mubr.bf16.gmra.mxu0 %v1033
    %v1149 = vpop.f32.mrf.mxu0
    %v1150 = vadd.f32 0.0, %v1149
    %v1151 = vpop.f32.mrf.mxu0
    %v1152 = vadd.f32 0.0, %v1151
    %v1153 = vpop.f32.mrf.mxu0
    %v1154 = vadd.f32 0.0, %v1153
    %v1155 = vpop.f32.mrf.mxu0
    %v1156 = vadd.f32 0.0, %v1155
    %1157 = vmatprep.mubr.bf16.mxu0 0
    %1158 = vmatmul.mubr.bf16.gmra.mxu0 %v1036
    %v1159 = vpop.f32.mrf.mxu0
    %v1160 = vadd.f32 0.0, %v1159
    %v1161 = vpop.f32.mrf.mxu0
    %v1162 = vadd.f32 0.0, %v1161
    %v1163 = vpop.f32.mrf.mxu0
    %v1164 = vadd.f32 0.0, %v1163
    %v1165 = vpop.f32.mrf.mxu0
    %v1166 = vadd.f32 0.0, %v1165
    %1167 = vmatprep.mubr.bf16.mxu0 0
    %1168 = vmatmul.mubr.bf16.gmra.mxu0 %v1039
    %v1169 = vpop.f32.mrf.mxu0
    %v1170 = vadd.f32 0.0, %v1169
    %v1171 = vpop.f32.mrf.mxu0
    %v1172 = vadd.f32 0.0, %v1171
    %v1173 = vpop.f32.mrf.mxu0
    %v1174 = vadd.f32 0.0, %v1173
    %v1175 = vpop.f32.mrf.mxu0
    %v1176 = vadd.f32 0.0, %v1175
    %1177 = vmatprep.mubr.bf16.mxu0 0
    %1178 = vmatmul.mubr.bf16.gmra.mxu0 %v1042
    %v1179 = vpop.f32.mrf.mxu0
    %v1180 = vadd.f32 0.0, %v1179
    %v1181 = vpop.f32.mrf.mxu0
    %v1182 = vadd.f32 0.0, %v1181
    %v1183 = vpop.f32.mrf.mxu0
    %v1184 = vadd.f32 0.0, %v1183
    %v1185 = vpop.f32.mrf.mxu0
    %v1186 = vadd.f32 0.0, %v1185
    %1187 = vmatprep.mubr.bf16.mxu0 0
    %1188 = vmatmul.mubr.bf16.gmra.mxu0 %v1045
    %v1189 = vpop.f32.mrf.mxu0
    %v1190 = vadd.f32 0.0, %v1189
    %v1191 = vpop.f32.mrf.mxu0
    %v1192 = vadd.f32 0.0, %v1191
    %v1193 = vpop.f32.mrf.mxu0
    %v1194 = vadd.f32 0.0, %v1193
    %v1195 = vpop.f32.mrf.mxu0
    %v1196 = vadd.f32 0.0, %v1195
    %1197 = vmatprep.mubr.bf16.mxu0 0
    %1198 = vmatmul.mubr.bf16.gmra.mxu0 %v1048
    %v1199 = vpop.f32.mrf.mxu0
    %v1200 = vadd.f32 0.0, %v1199
    %v1201 = vpop.f32.mrf.mxu0
    %v1202 = vadd.f32 0.0, %v1201
    %v1203 = vpop.f32.mrf.mxu0
    %v1204 = vadd.f32 0.0, %v1203
    %v1205 = vpop.f32.mrf.mxu0
    %v1206 = vadd.f32 0.0, %v1205
    %1207 = vmatprep.mubr.bf16.mxu0 0
    %1208 = vmatmul.mubr.bf16.gmra.mxu0 %v1051
    %v1209 = vpop.f32.mrf.mxu0
    %v1210 = vadd.f32 0.0, %v1209
    %v1211 = vpop.f32.mrf.mxu0
    %v1212 = vadd.f32 0.0, %v1211
    %v1213 = vpop.f32.mrf.mxu0
    %v1214 = vadd.f32 0.0, %v1213
    %v1215 = vpop.f32.mrf.mxu0
    %v1216 = vadd.f32 0.0, %v1215
    %1217 = vmatprep.mubr.bf16.mxu0 0
    %1218 = vmatmul.mubr.bf16.gmra.mxu0 %v1054
    %v1219 = vpop.f32.mrf.mxu0
    %v1220 = vadd.f32 0.0, %v1219
    %v1221 = vpop.f32.mrf.mxu0
    %v1222 = vadd.f32 0.0, %v1221
    %v1223 = vpop.f32.mrf.mxu0
    %v1224 = vadd.f32 0.0, %v1223
    %v1225 = vpop.f32.mrf.mxu0
    %v1226 = vadd.f32 0.0, %v1225
    %1227 = vmatprep.mubr.bf16.mxu0 0
    %1228 = vmatmul.mubr.bf16.gmra.mxu0 %v1057
    %v1229 = vpop.f32.mrf.mxu0
    %v1230 = vadd.f32 0.0, %v1229
    %v1231 = vpop.f32.mrf.mxu0
    %v1232 = vadd.f32 0.0, %v1231
    %v1233 = vpop.f32.mrf.mxu0
    %v1234 = vadd.f32 0.0, %v1233
    %v1235 = vpop.f32.mrf.mxu0
    %v1236 = vadd.f32 0.0, %v1235
    %1237 = vmatprep.mubr.bf16.mxu0 0
    %1238 = vmatmul.mubr.bf16.gmra.mxu0 %v1060
    %v1239 = vpop.f32.mrf.mxu0
    %v1240 = vadd.f32 0.0, %v1239
    %v1241 = vpop.f32.mrf.mxu0
    %v1242 = vadd.f32 0.0, %v1241
    %v1243 = vpop.f32.mrf.mxu0
    %v1244 = vadd.f32 0.0, %v1243
    %v1245 = vpop.f32.mrf.mxu0
    %v1246 = vadd.f32 0.0, %v1245
    %1247 = vmatprep.mubr.bf16.mxu0 0
    %1248 = vmatmul.mubr.bf16.gmra.mxu0 %v1063
    %v1249 = vpop.f32.mrf.mxu0
    %v1250 = vadd.f32 0.0, %v1249
    %v1251 = vpop.f32.mrf.mxu0
    %v1252 = vadd.f32 0.0, %v1251
    %v1253 = vpop.f32.mrf.mxu0
    %v1254 = vadd.f32 0.0, %v1253
    %v1255 = vpop.f32.mrf.mxu0
    %v1256 = vadd.f32 0.0, %v1255
    %1257 = vdwg.mxu0
    %v1258 = vadd.f32 %v802, %v1100
    %v1259 = vadd.f32 %v804, %v1102
    %v1260 = vadd.f32 %v806, %v1104
    %v1261 = vadd.f32 %v808, %v1106
    %v1262 = vadd.f32 %v812, %v1110
    %v1263 = vadd.f32 %v814, %v1112
    %v1264 = vadd.f32 %v816, %v1114
    %v1265 = vadd.f32 %v818, %v1116
    %v1266 = vadd.f32 %v822, %v1120
    %v1267 = vadd.f32 %v824, %v1122
    %v1268 = vadd.f32 %v826, %v1124
    %v1269 = vadd.f32 %v828, %v1126
    %v1270 = vadd.f32 %v832, %v1130
    %v1271 = vadd.f32 %v834, %v1132
    %v1272 = vadd.f32 %v836, %v1134
    %v1273 = vadd.f32 %v838, %v1136
    %v1274 = vadd.f32 %v842, %v1140
    %v1275 = vadd.f32 %v844, %v1142
    %v1276 = vadd.f32 %v846, %v1144
    %v1277 = vadd.f32 %v848, %v1146
    %v1278 = vadd.f32 %v852, %v1150
    %v1279 = vadd.f32 %v854, %v1152
    %v1280 = vadd.f32 %v856, %v1154
    %v1281 = vadd.f32 %v858, %v1156
    %v1282 = vadd.f32 %v862, %v1160
    %v1283 = vadd.f32 %v864, %v1162
    %v1284 = vadd.f32 %v866, %v1164
    %v1285 = vadd.f32 %v868, %v1166
    %v1286 = vadd.f32 %v872, %v1170
    %v1287 = vadd.f32 %v874, %v1172
    %v1288 = vadd.f32 %v876, %v1174
    %v1289 = vadd.f32 %v878, %v1176
    %v1290 = vadd.f32 %v882, %v1180
    %v1291 = vadd.f32 %v884, %v1182
    %v1292 = vadd.f32 %v886, %v1184
    %v1293 = vadd.f32 %v888, %v1186
    %v1294 = vadd.f32 %v892, %v1190
    %v1295 = vadd.f32 %v894, %v1192
    %v1296 = vadd.f32 %v896, %v1194
    %v1297 = vadd.f32 %v898, %v1196
    %v1298 = vadd.f32 %v902, %v1200
    %v1299 = vadd.f32 %v904, %v1202
    %v1300 = vadd.f32 %v906, %v1204
    %v1301 = vadd.f32 %v908, %v1206
    %v1302 = vadd.f32 %v912, %v1210
    %v1303 = vadd.f32 %v914, %v1212
    %v1304 = vadd.f32 %v916, %v1214
    %v1305 = vadd.f32 %v918, %v1216
    %v1306 = vadd.f32 %v922, %v1220
    %v1307 = vadd.f32 %v924, %v1222
    %v1308 = vadd.f32 %v926, %v1224
    %v1309 = vadd.f32 %v928, %v1226
    %v1310 = vadd.f32 %v932, %v1230
    %v1311 = vadd.f32 %v934, %v1232
    %v1312 = vadd.f32 %v936, %v1234
    %v1313 = vadd.f32 %v938, %v1236
    %v1314 = vadd.f32 %v942, %v1240
    %v1315 = vadd.f32 %v944, %v1242
    %v1316 = vadd.f32 %v946, %v1244
    %v1317 = vadd.f32 %v948, %v1246
    %v1318 = vadd.f32 %v952, %v1250
    %v1319 = vadd.f32 %v954, %v1252
    %v1320 = vadd.f32 %v956, %v1254
    %v1321 = vadd.f32 %v958, %v1256
    %s1322 = scalar_lea.vmem [#allocation2], 96
    %v1323 = vld [vmem:[%s1322] sm:$0xff]
    %v1324 = vld [vmem:[%s1322 + $0x8] sm:$0xff]
    %v1325 = vld [vmem:[%s1322 + $0x10] sm:$0xff]
    %v1326 = vld [vmem:[%s1322 + $0x18] sm:$0xff]
    %vm1327 = vsmask.f32 6400
    %v1328 = vrot.slane %v327, 1
    %v1329 = vrot.slane %v329, 2
    %v1330 = vor.u32 %v1328, %v1329
    %v1331 = vrot.slane %v338, 1
    %v1332 = vrot.slane %v334, 2
    %v1333 = vor.u32 %v1331, %v1332
    %v1334 = vsel %vm1327, %v1330, %v1333
    %v1335 = vrot.slane %v346, 1
    %v1336 = vrot.slane %v342, 2
    %v1337 = vor.u32 %v1335, %v1336
    %v1338 = vsel %vm1327, %v1333, %v1337
    %v1339 = vrot.slane %v354, 1
    %v1340 = vrot.slane %v350, 2
    %v1341 = vor.u32 %v1339, %v1340
    %v1342 = vsel %vm1327, %v1337, %v1341
    %v1343 = vrot.slane %v362, 1
    %v1344 = vrot.slane %v358, 2
    %v1345 = vor.u32 %v1343, %v1344
    %v1346 = vsel %vm1327, %v1341, %v1345
    %v1347 = vrot.slane %v370, 1
    %v1348 = vrot.slane %v366, 2
    %v1349 = vor.u32 %v1347, %v1348
    %v1350 = vsel %vm1327, %v1345, %v1349
    %v1351 = vrot.slane %v378, 1
    %v1352 = vrot.slane %v374, 2
    %v1353 = vor.u32 %v1351, %v1352
    %v1354 = vsel %vm1327, %v1349, %v1353
    %v1355 = vrot.slane %v386, 1
    %v1356 = vrot.slane %v382, 2
    %v1357 = vor.u32 %v1355, %v1356
    %v1358 = vsel %vm1327, %v1353, %v1357
    %v1359 = vrot.slane %v394, 1
    %v1360 = vrot.slane %v390, 2
    %v1361 = vor.u32 %v1359, %v1360
    %v1362 = vsel %vm1327, %v1357, %v1361
    %v1363 = vrot.slane %v402, 1
    %v1364 = vrot.slane %v398, 2
    %v1365 = vor.u32 %v1363, %v1364
    %v1366 = vsel %vm1327, %v1361, %v1365
    %v1367 = vrot.slane %v410, 1
    %v1368 = vrot.slane %v406, 2
    %v1369 = vor.u32 %v1367, %v1368
    %v1370 = vsel %vm1327, %v1365, %v1369
    %v1371 = vrot.slane %v418, 1
    %v1372 = vrot.slane %v414, 2
    %v1373 = vor.u32 %v1371, %v1372
    %v1374 = vsel %vm1327, %v1369, %v1373
    %v1375 = vrot.slane %v426, 1
    %v1376 = vrot.slane %v422, 2
    %v1377 = vor.u32 %v1375, %v1376
    %v1378 = vsel %vm1327, %v1373, %v1377
    %v1379 = vrot.slane %v434, 1
    %v1380 = vrot.slane %v430, 2
    %v1381 = vor.u32 %v1379, %v1380
    %v1382 = vsel %vm1327, %v1377, %v1381
    %v1383 = vrot.slane %v442, 1
    %v1384 = vrot.slane %v438, 2
    %v1385 = vor.u32 %v1383, %v1384
    %v1386 = vsel %vm1327, %v1381, %v1385
    %v1387 = vrot.slane %v450, 1
    %v1388 = vrot.slane %v446, 2
    %v1389 = vor.u32 %v1387, %v1388
    %v1390 = vsel %vm1327, %v1385, %v1389
    %v1395 = vunpack.c.l.b16 %v1323
    %v1396 = vunpack.c.h.b16 %v1323
    %v1397 = vunpack.c.l.b16 %v1324
    %v1398 = vunpack.c.h.b16 %v1324
    %v1399 = vunpack.c.l.b16 %v1325
    %v1400 = vunpack.c.h.b16 %v1325
    %v1401 = vunpack.c.l.b16 %v1326
    %v1402 = vunpack.c.h.b16 %v1326
    %v1403 = vpack.c.b16 %v1397, %v1395
    %v1404 = vpack.c.b16 %v1398, %v1396
    %v1405 = vpack.c.b16 %v1401, %v1399
    %v1406 = vpack.c.b16 %v1402, %v1400
    %v1412 = vsel %vm473, %v1334, 0
    %v1415 = vsel %vm473, %v1338, 0
    %v1418 = vsel %vm473, %v1342, 0
    %v1421 = vsel %vm473, %v1346, 0
    %v1424 = vsel %vm473, %v1350, 0
    %v1427 = vsel %vm473, %v1354, 0
    %v1430 = vsel %vm473, %v1358, 0
    %v1433 = vsel %vm473, %v1362, 0
    %v1436 = vsel %vm473, %v1366, 0
    %v1439 = vsel %vm473, %v1370, 0
    %v1442 = vsel %vm473, %v1374, 0
    %v1445 = vsel %vm473, %v1378, 0
    %v1448 = vsel %vm473, %v1382, 0
    %v1451 = vsel %vm473, %v1386, 0
    %v1454 = vsel %vm473, %v1390, 0
    %v1457 = vsel %vm473, %v1389, 0
    %1459 = vmatprep.subr.bf16.mxu0 0
    %1460 = vmatpush1.bf16.msra.mxu0 0
    %1461 = vmatprep.subr.bf16.mxu0 0
    %1462 = vmatpush1.bf16.msra.mxu0 0
    %1463 = vmatprep.subr.bf16.mxu0 0
    %1464 = vmatpush1.bf16.msra.mxu0 0
    %1465 = vmatprep.subr.bf16.mxu0 0
    %1466 = vmatpush1.bf16.msra.mxu0 0
    %1467 = vmatprep.subr.bf16.mxu0 0
    %1468 = vmatpush1.bf16.msra.mxu0 0
    %1469 = vmatprep.subr.bf16.mxu0 0
    %1470 = vmatpush1.bf16.msra.mxu0 0
    %1471 = vmatprep.subr.bf16.mxu0 %v1406
    %1472 = vmatpush1.bf16.msra.mxu0 %v1405
    %1473 = vmatprep.subr.bf16.mxu0 %v1404
    %1474 = vmatpush1.bf16.msra.mxu0 %v1403
    %1475 = vmatprep.subr.bf16.mxu0 0
    %1476 = vmatpush2.bf16.msra.mxu0 0
    %1477 = vmatprep.subr.bf16.mxu0 0
    %1478 = vmatpush2.bf16.msra.mxu0 0
    %1479 = vmatprep.subr.bf16.mxu0 0
    %1480 = vmatpush2.bf16.msra.mxu0 0
    %1481 = vmatprep.subr.bf16.mxu0 0
    %1482 = vmatpush2.bf16.msra.mxu0 0
    %1483 = vmatprep.subr.bf16.mxu0 0
    %1484 = vmatpush2.bf16.msra.mxu0 0
    %1485 = vmatprep.subr.bf16.mxu0 0
    %1486 = vmatpush2.bf16.msra.mxu0 0
    %1487 = vmatprep.subr.bf16.mxu0 0
    %1488 = vmatpush2.bf16.msra.mxu0 0
    %1489 = vmatprep.subr.bf16.mxu0 0
    %1490 = vmatpush2.bf16.msra.mxu0 0
    %1491 = vmatprep.mubr.bf16.mxu0 0
    %1492 = vmatmul.mubr.bf16.gmra.mxu0 %v1412
    %v1493 = vpop.f32.mrf.mxu0
    %v1494 = vadd.f32 0.0, %v1493
    %v1495 = vpop.f32.mrf.mxu0
    %v1496 = vadd.f32 0.0, %v1495
    %v1497 = vpop.f32.mrf.mxu0
    %v1498 = vadd.f32 0.0, %v1497
    %v1499 = vpop.f32.mrf.mxu0
    %v1500 = vadd.f32 0.0, %v1499
    %1501 = vmatprep.mubr.bf16.mxu0 0
    %1502 = vmatmul.mubr.bf16.gmra.mxu0 %v1415
    %v1503 = vpop.f32.mrf.mxu0
    %v1504 = vadd.f32 0.0, %v1503
    %v1505 = vpop.f32.mrf.mxu0
    %v1506 = vadd.f32 0.0, %v1505
    %v1507 = vpop.f32.mrf.mxu0
    %v1508 = vadd.f32 0.0, %v1507
    %v1509 = vpop.f32.mrf.mxu0
    %v1510 = vadd.f32 0.0, %v1509
    %1511 = vmatprep.mubr.bf16.mxu0 0
    %1512 = vmatmul.mubr.bf16.gmra.mxu0 %v1418
    %v1513 = vpop.f32.mrf.mxu0
    %v1514 = vadd.f32 0.0, %v1513
    %v1515 = vpop.f32.mrf.mxu0
    %v1516 = vadd.f32 0.0, %v1515
    %v1517 = vpop.f32.mrf.mxu0
    %v1518 = vadd.f32 0.0, %v1517
    %v1519 = vpop.f32.mrf.mxu0
    %v1520 = vadd.f32 0.0, %v1519
    %1521 = vmatprep.mubr.bf16.mxu0 0
    %1522 = vmatmul.mubr.bf16.gmra.mxu0 %v1421
    %v1523 = vpop.f32.mrf.mxu0
    %v1524 = vadd.f32 0.0, %v1523
    %v1525 = vpop.f32.mrf.mxu0
    %v1526 = vadd.f32 0.0, %v1525
    %v1527 = vpop.f32.mrf.mxu0
    %v1528 = vadd.f32 0.0, %v1527
    %v1529 = vpop.f32.mrf.mxu0
    %v1530 = vadd.f32 0.0, %v1529
    %1531 = vmatprep.mubr.bf16.mxu0 0
    %1532 = vmatmul.mubr.bf16.gmra.mxu0 %v1424
    %v1533 = vpop.f32.mrf.mxu0
    %v1534 = vadd.f32 0.0, %v1533
    %v1535 = vpop.f32.mrf.mxu0
    %v1536 = vadd.f32 0.0, %v1535
    %v1537 = vpop.f32.mrf.mxu0
    %v1538 = vadd.f32 0.0, %v1537
    %v1539 = vpop.f32.mrf.mxu0
    %v1540 = vadd.f32 0.0, %v1539
    %1541 = vmatprep.mubr.bf16.mxu0 0
    %1542 = vmatmul.mubr.bf16.gmra.mxu0 %v1427
    %v1543 = vpop.f32.mrf.mxu0
    %v1544 = vadd.f32 0.0, %v1543
    %v1545 = vpop.f32.mrf.mxu0
    %v1546 = vadd.f32 0.0, %v1545
    %v1547 = vpop.f32.mrf.mxu0
    %v1548 = vadd.f32 0.0, %v1547
    %v1549 = vpop.f32.mrf.mxu0
    %v1550 = vadd.f32 0.0, %v1549
    %1551 = vmatprep.mubr.bf16.mxu0 0
    %1552 = vmatmul.mubr.bf16.gmra.mxu0 %v1430
    %v1553 = vpop.f32.mrf.mxu0
    %v1554 = vadd.f32 0.0, %v1553
    %v1555 = vpop.f32.mrf.mxu0
    %v1556 = vadd.f32 0.0, %v1555
    %v1557 = vpop.f32.mrf.mxu0
    %v1558 = vadd.f32 0.0, %v1557
    %v1559 = vpop.f32.mrf.mxu0
    %v1560 = vadd.f32 0.0, %v1559
    %1561 = vmatprep.mubr.bf16.mxu0 0
    %1562 = vmatmul.mubr.bf16.gmra.mxu0 %v1433
    %v1563 = vpop.f32.mrf.mxu0
    %v1564 = vadd.f32 0.0, %v1563
    %v1565 = vpop.f32.mrf.mxu0
    %v1566 = vadd.f32 0.0, %v1565
    %v1567 = vpop.f32.mrf.mxu0
    %v1568 = vadd.f32 0.0, %v1567
    %v1569 = vpop.f32.mrf.mxu0
    %v1570 = vadd.f32 0.0, %v1569
    %1571 = vmatprep.mubr.bf16.mxu0 0
    %1572 = vmatmul.mubr.bf16.gmra.mxu0 %v1436
    %v1573 = vpop.f32.mrf.mxu0
    %v1574 = vadd.f32 0.0, %v1573
    %v1575 = vpop.f32.mrf.mxu0
    %v1576 = vadd.f32 0.0, %v1575
    %v1577 = vpop.f32.mrf.mxu0
    %v1578 = vadd.f32 0.0, %v1577
    %v1579 = vpop.f32.mrf.mxu0
    %v1580 = vadd.f32 0.0, %v1579
    %1581 = vmatprep.mubr.bf16.mxu0 0
    %1582 = vmatmul.mubr.bf16.gmra.mxu0 %v1439
    %v1583 = vpop.f32.mrf.mxu0
    %v1584 = vadd.f32 0.0, %v1583
    %v1585 = vpop.f32.mrf.mxu0
    %v1586 = vadd.f32 0.0, %v1585
    %v1587 = vpop.f32.mrf.mxu0
    %v1588 = vadd.f32 0.0, %v1587
    %v1589 = vpop.f32.mrf.mxu0
    %v1590 = vadd.f32 0.0, %v1589
    %1591 = vmatprep.mubr.bf16.mxu0 0
    %1592 = vmatmul.mubr.bf16.gmra.mxu0 %v1442
    %v1593 = vpop.f32.mrf.mxu0
    %v1594 = vadd.f32 0.0, %v1593
    %v1595 = vpop.f32.mrf.mxu0
    %v1596 = vadd.f32 0.0, %v1595
    %v1597 = vpop.f32.mrf.mxu0
    %v1598 = vadd.f32 0.0, %v1597
    %v1599 = vpop.f32.mrf.mxu0
    %v1600 = vadd.f32 0.0, %v1599
    %1601 = vmatprep.mubr.bf16.mxu0 0
    %1602 = vmatmul.mubr.bf16.gmra.mxu0 %v1445
    %v1603 = vpop.f32.mrf.mxu0
    %v1604 = vadd.f32 0.0, %v1603
    %v1605 = vpop.f32.mrf.mxu0
    %v1606 = vadd.f32 0.0, %v1605
    %v1607 = vpop.f32.mrf.mxu0
    %v1608 = vadd.f32 0.0, %v1607
    %v1609 = vpop.f32.mrf.mxu0
    %v1610 = vadd.f32 0.0, %v1609
    %1611 = vmatprep.mubr.bf16.mxu0 0
    %1612 = vmatmul.mubr.bf16.gmra.mxu0 %v1448
    %v1613 = vpop.f32.mrf.mxu0
    %v1614 = vadd.f32 0.0, %v1613
    %v1615 = vpop.f32.mrf.mxu0
    %v1616 = vadd.f32 0.0, %v1615
    %v1617 = vpop.f32.mrf.mxu0
    %v1618 = vadd.f32 0.0, %v1617
    %v1619 = vpop.f32.mrf.mxu0
    %v1620 = vadd.f32 0.0, %v1619
    %1621 = vmatprep.mubr.bf16.mxu0 0
    %1622 = vmatmul.mubr.bf16.gmra.mxu0 %v1451
    %v1623 = vpop.f32.mrf.mxu0
    %v1624 = vadd.f32 0.0, %v1623
    %v1625 = vpop.f32.mrf.mxu0
    %v1626 = vadd.f32 0.0, %v1625
    %v1627 = vpop.f32.mrf.mxu0
    %v1628 = vadd.f32 0.0, %v1627
    %v1629 = vpop.f32.mrf.mxu0
    %v1630 = vadd.f32 0.0, %v1629
    %1631 = vmatprep.mubr.bf16.mxu0 0
    %1632 = vmatmul.mubr.bf16.gmra.mxu0 %v1454
    %v1633 = vpop.f32.mrf.mxu0
    %v1634 = vadd.f32 0.0, %v1633
    %v1635 = vpop.f32.mrf.mxu0
    %v1636 = vadd.f32 0.0, %v1635
    %v1637 = vpop.f32.mrf.mxu0
    %v1638 = vadd.f32 0.0, %v1637
    %v1639 = vpop.f32.mrf.mxu0
    %v1640 = vadd.f32 0.0, %v1639
    %1641 = vmatprep.mubr.bf16.mxu0 0
    %1642 = vmatmul.mubr.bf16.gmra.mxu0 %v1457
    %v1643 = vpop.f32.mrf.mxu0
    %v1644 = vadd.f32 0.0, %v1643
    %v1645 = vpop.f32.mrf.mxu0
    %v1646 = vadd.f32 0.0, %v1645
    %v1647 = vpop.f32.mrf.mxu0
    %v1648 = vadd.f32 0.0, %v1647
    %v1649 = vpop.f32.mrf.mxu0
    %v1650 = vadd.f32 0.0, %v1649
    %1651 = vdwg.mxu0
    %v1652 = vadd.f32 %v1258, %v1494
    %v1653 = vadd.f32 %v1259, %v1496
    %v1654 = vadd.f32 %v1260, %v1498
    %v1655 = vadd.f32 %v1261, %v1500
    %v1656 = vadd.f32 %v1262, %v1504
    %v1657 = vadd.f32 %v1263, %v1506
    %v1658 = vadd.f32 %v1264, %v1508
    %v1659 = vadd.f32 %v1265, %v1510
    %v1660 = vadd.f32 %v1266, %v1514
    %v1661 = vadd.f32 %v1267, %v1516
    %v1662 = vadd.f32 %v1268, %v1518
    %v1663 = vadd.f32 %v1269, %v1520
    %v1664 = vadd.f32 %v1270, %v1524
    %v1665 = vadd.f32 %v1271, %v1526
    %v1666 = vadd.f32 %v1272, %v1528
    %v1667 = vadd.f32 %v1273, %v1530
    %v1668 = vadd.f32 %v1274, %v1534
    %v1669 = vadd.f32 %v1275, %v1536
    %v1670 = vadd.f32 %v1276, %v1538
    %v1671 = vadd.f32 %v1277, %v1540
    %v1672 = vadd.f32 %v1278, %v1544
    %v1673 = vadd.f32 %v1279, %v1546
    %v1674 = vadd.f32 %v1280, %v1548
    %v1675 = vadd.f32 %v1281, %v1550
    %v1676 = vadd.f32 %v1282, %v1554
    %v1677 = vadd.f32 %v1283, %v1556
    %v1678 = vadd.f32 %v1284, %v1558
    %v1679 = vadd.f32 %v1285, %v1560
    %v1680 = vadd.f32 %v1286, %v1564
    %v1681 = vadd.f32 %v1287, %v1566
    %v1682 = vadd.f32 %v1288, %v1568
    %v1683 = vadd.f32 %v1289, %v1570
    %v1684 = vadd.f32 %v1290, %v1574
    %v1685 = vadd.f32 %v1291, %v1576
    %v1686 = vadd.f32 %v1292, %v1578
    %v1687 = vadd.f32 %v1293, %v1580
    %v1688 = vadd.f32 %v1294, %v1584
    %v1689 = vadd.f32 %v1295, %v1586
    %v1690 = vadd.f32 %v1296, %v1588
    %v1691 = vadd.f32 %v1297, %v1590
    %v1692 = vadd.f32 %v1298, %v1594
    %v1693 = vadd.f32 %v1299, %v1596
    %v1694 = vadd.f32 %v1300, %v1598
    %v1695 = vadd.f32 %v1301, %v1600
    %v1696 = vadd.f32 %v1302, %v1604
    %v1697 = vadd.f32 %v1303, %v1606
    %v1698 = vadd.f32 %v1304, %v1608
    %v1699 = vadd.f32 %v1305, %v1610
    %v1700 = vadd.f32 %v1306, %v1614
    %v1701 = vadd.f32 %v1307, %v1616
    %v1702 = vadd.f32 %v1308, %v1618
    %v1703 = vadd.f32 %v1309, %v1620
    %v1704 = vadd.f32 %v1310, %v1624
    %v1705 = vadd.f32 %v1311, %v1626
    %v1706 = vadd.f32 %v1312, %v1628
    %v1707 = vadd.f32 %v1313, %v1630
    %v1708 = vadd.f32 %v1314, %v1634
    %v1709 = vadd.f32 %v1315, %v1636
    %v1710 = vadd.f32 %v1316, %v1638
    %v1711 = vadd.f32 %v1317, %v1640
    %v1712 = vadd.f32 %v1318, %v1644
    %v1713 = vadd.f32 %v1319, %v1646
    %v1714 = vadd.f32 %v1320, %v1648
    %v1715 = vadd.f32 %v1321, %v1650
    %s1716 = scalar_lea.vmem [#allocation2], 128
    %v1717 = vld [vmem:[%s1716] sm:$0xff]
    %v1718 = vld [vmem:[%s1716 + $0x8] sm:$0xff]
    %v1719 = vld [vmem:[%s1716 + $0x10] sm:$0xff]
    %v1720 = vld [vmem:[%s1716 + $0x18] sm:$0xff]
    %vm1721 = vcmask 1045504
    %v1722 = vrot.slane %v309, 2
    %v1723 = vrot.slane %v310, 2
    %v1724 = vsel %vm1721, %v1722, %v1723
    %v1725 = vrot.slane %v311, 2
    %v1726 = vsel %vm1721, %v1723, %v1725
    %v1727 = vrot.slane %v312, 2
    %v1728 = vsel %vm1721, %v1725, %v1727
    %v1729 = vrot.slane %v313, 2
    %v1730 = vsel %vm1721, %v1727, %v1729
    %v1731 = vrot.slane %v314, 2
    %v1732 = vsel %vm1721, %v1729, %v1731
    %v1733 = vrot.slane %v315, 2
    %v1734 = vsel %vm1721, %v1731, %v1733
    %v1735 = vrot.slane %v316, 2
    %v1736 = vsel %vm1721, %v1733, %v1735
    %v1737 = vrot.slane %v317, 2
    %v1738 = vsel %vm1721, %v1735, %v1737
    %v1739 = vrot.slane %v318, 2
    %v1740 = vsel %vm1721, %v1737, %v1739
    %v1741 = vrot.slane %v319, 2
    %v1742 = vsel %vm1721, %v1739, %v1741
    %v1743 = vrot.slane %v320, 2
    %v1744 = vsel %vm1721, %v1741, %v1743
    %v1745 = vrot.slane %v321, 2
    %v1746 = vsel %vm1721, %v1743, %v1745
    %v1747 = vrot.slane %v322, 2
    %v1748 = vsel %vm1721, %v1745, %v1747
    %v1749 = vrot.slane %v323, 2
    %v1750 = vsel %vm1721, %v1747, %v1749
    %v1751 = vrot.slane %v324, 2
    %v1752 = vsel %vm1721, %v1749, %v1751
    %v1757 = vunpack.c.l.b16 %v1717
    %v1758 = vunpack.c.h.b16 %v1717
    %v1759 = vunpack.c.l.b16 %v1718
    %v1760 = vunpack.c.h.b16 %v1718
    %v1761 = vunpack.c.l.b16 %v1719
    %v1762 = vunpack.c.h.b16 %v1719
    %v1763 = vunpack.c.l.b16 %v1720
    %v1764 = vunpack.c.h.b16 %v1720
    %v1765 = vpack.c.b16 %v1759, %v1757
    %v1766 = vpack.c.b16 %v1760, %v1758
    %v1767 = vpack.c.b16 %v1763, %v1761
    %v1768 = vpack.c.b16 %v1764, %v1762
    %v1774 = vsel %vm473, %v1724, 0
    %v1777 = vsel %vm473, %v1726, 0
    %v1780 = vsel %vm473, %v1728, 0
    %v1783 = vsel %vm473, %v1730, 0
    %v1786 = vsel %vm473, %v1732, 0
    %v1789 = vsel %vm473, %v1734, 0
    %v1792 = vsel %vm473, %v1736, 0
    %v1795 = vsel %vm473, %v1738, 0
    %v1798 = vsel %vm473, %v1740, 0
    %v1801 = vsel %vm473, %v1742, 0
    %v1804 = vsel %vm473, %v1744, 0
    %v1807 = vsel %vm473, %v1746, 0
    %v1810 = vsel %vm473, %v1748, 0
    %v1813 = vsel %vm473, %v1750, 0
    %v1816 = vsel %vm473, %v1752, 0
    %v1819 = vsel %vm473, %v1751, 0
    %1821 = vmatprep.subr.bf16.mxu0 0
    %1822 = vmatpush1.bf16.msra.mxu0 0
    %1823 = vmatprep.subr.bf16.mxu0 0
    %1824 = vmatpush1.bf16.msra.mxu0 0
    %1825 = vmatprep.subr.bf16.mxu0 0
    %1826 = vmatpush1.bf16.msra.mxu0 0
    %1827 = vmatprep.subr.bf16.mxu0 0
    %1828 = vmatpush1.bf16.msra.mxu0 0
    %1829 = vmatprep.subr.bf16.mxu0 0
    %1830 = vmatpush1.bf16.msra.mxu0 0
    %1831 = vmatprep.subr.bf16.mxu0 0
    %1832 = vmatpush1.bf16.msra.mxu0 0
    %1833 = vmatprep.subr.bf16.mxu0 %v1768
    %1834 = vmatpush1.bf16.msra.mxu0 %v1767
    %1835 = vmatprep.subr.bf16.mxu0 %v1766
    %1836 = vmatpush1.bf16.msra.mxu0 %v1765
    %1837 = vmatprep.subr.bf16.mxu0 0
    %1838 = vmatpush2.bf16.msra.mxu0 0
    %1839 = vmatprep.subr.bf16.mxu0 0
    %1840 = vmatpush2.bf16.msra.mxu0 0
    %1841 = vmatprep.subr.bf16.mxu0 0
    %1842 = vmatpush2.bf16.msra.mxu0 0
    %1843 = vmatprep.subr.bf16.mxu0 0
    %1844 = vmatpush2.bf16.msra.mxu0 0
    %1845 = vmatprep.subr.bf16.mxu0 0
    %1846 = vmatpush2.bf16.msra.mxu0 0
    %1847 = vmatprep.subr.bf16.mxu0 0
    %1848 = vmatpush2.bf16.msra.mxu0 0
    %1849 = vmatprep.subr.bf16.mxu0 0
    %1850 = vmatpush2.bf16.msra.mxu0 0
    %1851 = vmatprep.subr.bf16.mxu0 0
    %1852 = vmatpush2.bf16.msra.mxu0 0
    %1853 = vmatprep.mubr.bf16.mxu0 0
    %1854 = vmatmul.mubr.bf16.gmra.mxu0 %v1774
    %v1855 = vpop.f32.mrf.mxu0
    %v1856 = vadd.f32 0.0, %v1855
    %v1857 = vpop.f32.mrf.mxu0
    %v1858 = vadd.f32 0.0, %v1857
    %v1859 = vpop.f32.mrf.mxu0
    %v1860 = vadd.f32 0.0, %v1859
    %v1861 = vpop.f32.mrf.mxu0
    %v1862 = vadd.f32 0.0, %v1861
    %1863 = vmatprep.mubr.bf16.mxu0 0
    %1864 = vmatmul.mubr.bf16.gmra.mxu0 %v1777
    %v1865 = vpop.f32.mrf.mxu0
    %v1866 = vadd.f32 0.0, %v1865
    %v1867 = vpop.f32.mrf.mxu0
    %v1868 = vadd.f32 0.0, %v1867
    %v1869 = vpop.f32.mrf.mxu0
    %v1870 = vadd.f32 0.0, %v1869
    %v1871 = vpop.f32.mrf.mxu0
    %v1872 = vadd.f32 0.0, %v1871
    %1873 = vmatprep.mubr.bf16.mxu0 0
    %1874 = vmatmul.mubr.bf16.gmra.mxu0 %v1780
    %v1875 = vpop.f32.mrf.mxu0
    %v1876 = vadd.f32 0.0, %v1875
    %v1877 = vpop.f32.mrf.mxu0
    %v1878 = vadd.f32 0.0, %v1877
    %v1879 = vpop.f32.mrf.mxu0
    %v1880 = vadd.f32 0.0, %v1879
    %v1881 = vpop.f32.mrf.mxu0
    %v1882 = vadd.f32 0.0, %v1881
    %1883 = vmatprep.mubr.bf16.mxu0 0
    %1884 = vmatmul.mubr.bf16.gmra.mxu0 %v1783
    %v1885 = vpop.f32.mrf.mxu0
    %v1886 = vadd.f32 0.0, %v1885
    %v1887 = vpop.f32.mrf.mxu0
    %v1888 = vadd.f32 0.0, %v1887
    %v1889 = vpop.f32.mrf.mxu0
    %v1890 = vadd.f32 0.0, %v1889
    %v1891 = vpop.f32.mrf.mxu0
    %v1892 = vadd.f32 0.0, %v1891
    %1893 = vmatprep.mubr.bf16.mxu0 0
    %1894 = vmatmul.mubr.bf16.gmra.mxu0 %v1786
    %v1895 = vpop.f32.mrf.mxu0
    %v1896 = vadd.f32 0.0, %v1895
    %v1897 = vpop.f32.mrf.mxu0
    %v1898 = vadd.f32 0.0, %v1897
    %v1899 = vpop.f32.mrf.mxu0
    %v1900 = vadd.f32 0.0, %v1899
    %v1901 = vpop.f32.mrf.mxu0
    %v1902 = vadd.f32 0.0, %v1901
    %1903 = vmatprep.mubr.bf16.mxu0 0
    %1904 = vmatmul.mubr.bf16.gmra.mxu0 %v1789
    %v1905 = vpop.f32.mrf.mxu0
    %v1906 = vadd.f32 0.0, %v1905
    %v1907 = vpop.f32.mrf.mxu0
    %v1908 = vadd.f32 0.0, %v1907
    %v1909 = vpop.f32.mrf.mxu0
    %v1910 = vadd.f32 0.0, %v1909
    %v1911 = vpop.f32.mrf.mxu0
    %v1912 = vadd.f32 0.0, %v1911
    %1913 = vmatprep.mubr.bf16.mxu0 0
    %1914 = vmatmul.mubr.bf16.gmra.mxu0 %v1792
    %v1915 = vpop.f32.mrf.mxu0
    %v1916 = vadd.f32 0.0, %v1915
    %v1917 = vpop.f32.mrf.mxu0
    %v1918 = vadd.f32 0.0, %v1917
    %v1919 = vpop.f32.mrf.mxu0
    %v1920 = vadd.f32 0.0, %v1919
    %v1921 = vpop.f32.mrf.mxu0
    %v1922 = vadd.f32 0.0, %v1921
    %1923 = vmatprep.mubr.bf16.mxu0 0
    %1924 = vmatmul.mubr.bf16.gmra.mxu0 %v1795
    %v1925 = vpop.f32.mrf.mxu0
    %v1926 = vadd.f32 0.0, %v1925
    %v1927 = vpop.f32.mrf.mxu0
    %v1928 = vadd.f32 0.0, %v1927
    %v1929 = vpop.f32.mrf.mxu0
    %v1930 = vadd.f32 0.0, %v1929
    %v1931 = vpop.f32.mrf.mxu0
    %v1932 = vadd.f32 0.0, %v1931
    %1933 = vmatprep.mubr.bf16.mxu0 0
    %1934 = vmatmul.mubr.bf16.gmra.mxu0 %v1798
    %v1935 = vpop.f32.mrf.mxu0
    %v1936 = vadd.f32 0.0, %v1935
    %v1937 = vpop.f32.mrf.mxu0
    %v1938 = vadd.f32 0.0, %v1937
    %v1939 = vpop.f32.mrf.mxu0
    %v1940 = vadd.f32 0.0, %v1939
    %v1941 = vpop.f32.mrf.mxu0
    %v1942 = vadd.f32 0.0, %v1941
    %1943 = vmatprep.mubr.bf16.mxu0 0
    %1944 = vmatmul.mubr.bf16.gmra.mxu0 %v1801
    %v1945 = vpop.f32.mrf.mxu0
    %v1946 = vadd.f32 0.0, %v1945
    %v1947 = vpop.f32.mrf.mxu0
    %v1948 = vadd.f32 0.0, %v1947
    %v1949 = vpop.f32.mrf.mxu0
    %v1950 = vadd.f32 0.0, %v1949
    %v1951 = vpop.f32.mrf.mxu0
    %v1952 = vadd.f32 0.0, %v1951
    %1953 = vmatprep.mubr.bf16.mxu0 0
    %1954 = vmatmul.mubr.bf16.gmra.mxu0 %v1804
    %v1955 = vpop.f32.mrf.mxu0
    %v1956 = vadd.f32 0.0, %v1955
    %v1957 = vpop.f32.mrf.mxu0
    %v1958 = vadd.f32 0.0, %v1957
    %v1959 = vpop.f32.mrf.mxu0
    %v1960 = vadd.f32 0.0, %v1959
    %v1961 = vpop.f32.mrf.mxu0
    %v1962 = vadd.f32 0.0, %v1961
    %1963 = vmatprep.mubr.bf16.mxu0 0
    %1964 = vmatmul.mubr.bf16.gmra.mxu0 %v1807
    %v1965 = vpop.f32.mrf.mxu0
    %v1966 = vadd.f32 0.0, %v1965
    %v1967 = vpop.f32.mrf.mxu0
    %v1968 = vadd.f32 0.0, %v1967
    %v1969 = vpop.f32.mrf.mxu0
    %v1970 = vadd.f32 0.0, %v1969
    %v1971 = vpop.f32.mrf.mxu0
    %v1972 = vadd.f32 0.0, %v1971
    %1973 = vmatprep.mubr.bf16.mxu0 0
    %1974 = vmatmul.mubr.bf16.gmra.mxu0 %v1810
    %v1975 = vpop.f32.mrf.mxu0
    %v1976 = vadd.f32 0.0, %v1975
    %v1977 = vpop.f32.mrf.mxu0
    %v1978 = vadd.f32 0.0, %v1977
    %v1979 = vpop.f32.mrf.mxu0
    %v1980 = vadd.f32 0.0, %v1979
    %v1981 = vpop.f32.mrf.mxu0
    %v1982 = vadd.f32 0.0, %v1981
    %1983 = vmatprep.mubr.bf16.mxu0 0
    %1984 = vmatmul.mubr.bf16.gmra.mxu0 %v1813
    %v1985 = vpop.f32.mrf.mxu0
    %v1986 = vadd.f32 0.0, %v1985
    %v1987 = vpop.f32.mrf.mxu0
    %v1988 = vadd.f32 0.0, %v1987
    %v1989 = vpop.f32.mrf.mxu0
    %v1990 = vadd.f32 0.0, %v1989
    %v1991 = vpop.f32.mrf.mxu0
    %v1992 = vadd.f32 0.0, %v1991
    %1993 = vmatprep.mubr.bf16.mxu0 0
    %1994 = vmatmul.mubr.bf16.gmra.mxu0 %v1816
    %v1995 = vpop.f32.mrf.mxu0
    %v1996 = vadd.f32 0.0, %v1995
    %v1997 = vpop.f32.mrf.mxu0
    %v1998 = vadd.f32 0.0, %v1997
    %v1999 = vpop.f32.mrf.mxu0
    %v2000 = vadd.f32 0.0, %v1999
    %v2001 = vpop.f32.mrf.mxu0
    %v2002 = vadd.f32 0.0, %v2001
    %2003 = vmatprep.mubr.bf16.mxu0 0
    %2004 = vmatmul.mubr.bf16.gmra.mxu0 %v1819
    %v2005 = vpop.f32.mrf.mxu0
    %v2006 = vadd.f32 0.0, %v2005
    %v2007 = vpop.f32.mrf.mxu0
    %v2008 = vadd.f32 0.0, %v2007
    %v2009 = vpop.f32.mrf.mxu0
    %v2010 = vadd.f32 0.0, %v2009
    %v2011 = vpop.f32.mrf.mxu0
    %v2012 = vadd.f32 0.0, %v2011
    %2013 = vdwg.mxu0
    %v2014 = vadd.f32 %v1652, %v1856
    %v2015 = vadd.f32 %v1653, %v1858
    %v2016 = vadd.f32 %v1654, %v1860
    %v2017 = vadd.f32 %v1655, %v1862
    %v2018 = vadd.f32 %v1656, %v1866
    %v2019 = vadd.f32 %v1657, %v1868
    %v2020 = vadd.f32 %v1658, %v1870
    %v2021 = vadd.f32 %v1659, %v1872
    %v2022 = vadd.f32 %v1660, %v1876
    %v2023 = vadd.f32 %v1661, %v1878
    %v2024 = vadd.f32 %v1662, %v1880
    %v2025 = vadd.f32 %v1663, %v1882
    %v2026 = vadd.f32 %v1664, %v1886
    %v2027 = vadd.f32 %v1665, %v1888
    %v2028 = vadd.f32 %v1666, %v1890
    %v2029 = vadd.f32 %v1667, %v1892
    %v2030 = vadd.f32 %v1668, %v1896
    %v2031 = vadd.f32 %v1669, %v1898
    %v2032 = vadd.f32 %v1670, %v1900
    %v2033 = vadd.f32 %v1671, %v1902
    %v2034 = vadd.f32 %v1672, %v1906
    %v2035 = vadd.f32 %v1673, %v1908
    %v2036 = vadd.f32 %v1674, %v1910
    %v2037 = vadd.f32 %v1675, %v1912
    %v2038 = vadd.f32 %v1676, %v1916
    %v2039 = vadd.f32 %v1677, %v1918
    %v2040 = vadd.f32 %v1678, %v1920
    %v2041 = vadd.f32 %v1679, %v1922
    %v2042 = vadd.f32 %v1680, %v1926
    %v2043 = vadd.f32 %v1681, %v1928
    %v2044 = vadd.f32 %v1682, %v1930
    %v2045 = vadd.f32 %v1683, %v1932
    %v2046 = vadd.f32 %v1684, %v1936
    %v2047 = vadd.f32 %v1685, %v1938
    %v2048 = vadd.f32 %v1686, %v1940
    %v2049 = vadd.f32 %v1687, %v1942
    %v2050 = vadd.f32 %v1688, %v1946
    %v2051 = vadd.f32 %v1689, %v1948
    %v2052 = vadd.f32 %v1690, %v1950
    %v2053 = vadd.f32 %v1691, %v1952
    %v2054 = vadd.f32 %v1692, %v1956
    %v2055 = vadd.f32 %v1693, %v1958
    %v2056 = vadd.f32 %v1694, %v1960
    %v2057 = vadd.f32 %v1695, %v1962
    %v2058 = vadd.f32 %v1696, %v1966
    %v2059 = vadd.f32 %v1697, %v1968
    %v2060 = vadd.f32 %v1698, %v1970
    %v2061 = vadd.f32 %v1699, %v1972
    %v2062 = vadd.f32 %v1700, %v1976
    %v2063 = vadd.f32 %v1701, %v1978
    %v2064 = vadd.f32 %v1702, %v1980
    %v2065 = vadd.f32 %v1703, %v1982
    %v2066 = vadd.f32 %v1704, %v1986
    %v2067 = vadd.f32 %v1705, %v1988
    %v2068 = vadd.f32 %v1706, %v1990
    %v2069 = vadd.f32 %v1707, %v1992
    %v2070 = vadd.f32 %v1708, %v1996
    %v2071 = vadd.f32 %v1709, %v1998
    %v2072 = vadd.f32 %v1710, %v2000
    %v2073 = vadd.f32 %v1711, %v2002
    %v2074 = vadd.f32 %v1712, %v2006
    %v2075 = vadd.f32 %v1713, %v2008
    %v2076 = vadd.f32 %v1714, %v2010
    %v2077 = vadd.f32 %v1715, %v2012
    %v2078 = vld [vmem:[#allocation5] sm:$0x3]
    %v2080 = vlaneseq
    %v2081 = vshrl.u32 %v2080, 7
    %v2082 = vsub.s32 0, %v2081
    %v2083 = vrot.slane %v2078, %v2082
    %v2084 = vlaneseq
    %v2085 = vshrl.u32 %v2084, 7
    %v2086 = vsub.s32 1, %v2085
    %v2087 = vrot.slane %v2078, %v2086
    %v2090 = vadd.f32 %v2014, %v2083
    %v2091 = vadd.f32 %v2015, %v2087
    %v2092 = vadd.f32 %v2016, %v2083
    %v2093 = vadd.f32 %v2017, %v2087
    %v2094 = vadd.f32 %v2018, %v2083
    %v2095 = vadd.f32 %v2019, %v2087
    %v2096 = vadd.f32 %v2020, %v2083
    %v2097 = vadd.f32 %v2021, %v2087
    %v2098 = vadd.f32 %v2022, %v2083
    %v2099 = vadd.f32 %v2023, %v2087
    %v2100 = vadd.f32 %v2024, %v2083
    %v2101 = vadd.f32 %v2025, %v2087
    %v2102 = vadd.f32 %v2026, %v2083
    %v2103 = vadd.f32 %v2027, %v2087
    %v2104 = vadd.f32 %v2028, %v2083
    %v2105 = vadd.f32 %v2029, %v2087
    %v2106 = vadd.f32 %v2030, %v2083
    %v2107 = vadd.f32 %v2031, %v2087
    %v2108 = vadd.f32 %v2032, %v2083
    %v2109 = vadd.f32 %v2033, %v2087
    %v2110 = vadd.f32 %v2034, %v2083
    %v2111 = vadd.f32 %v2035, %v2087
    %v2112 = vadd.f32 %v2036, %v2083
    %v2113 = vadd.f32 %v2037, %v2087
    %v2114 = vadd.f32 %v2038, %v2083
    %v2115 = vadd.f32 %v2039, %v2087
    %v2116 = vadd.f32 %v2040, %v2083
    %v2117 = vadd.f32 %v2041, %v2087
    %v2118 = vadd.f32 %v2042, %v2083
    %v2119 = vadd.f32 %v2043, %v2087
    %v2120 = vadd.f32 %v2044, %v2083
    %v2121 = vadd.f32 %v2045, %v2087
    %v2122 = vadd.f32 %v2046, %v2083
    %v2123 = vadd.f32 %v2047, %v2087
    %v2124 = vadd.f32 %v2048, %v2083
    %v2125 = vadd.f32 %v2049, %v2087
    %v2126 = vadd.f32 %v2050, %v2083
    %v2127 = vadd.f32 %v2051, %v2087
    %v2128 = vadd.f32 %v2052, %v2083
    %v2129 = vadd.f32 %v2053, %v2087
    %v2130 = vadd.f32 %v2054, %v2083
    %v2131 = vadd.f32 %v2055, %v2087
    %v2132 = vadd.f32 %v2056, %v2083
    %v2133 = vadd.f32 %v2057, %v2087
    %v2134 = vadd.f32 %v2058, %v2083
    %v2135 = vadd.f32 %v2059, %v2087
    %v2136 = vadd.f32 %v2060, %v2083
    %v2137 = vadd.f32 %v2061, %v2087
    %v2138 = vadd.f32 %v2062, %v2083
    %v2139 = vadd.f32 %v2063, %v2087
    %v2140 = vadd.f32 %v2064, %v2083
    %v2141 = vadd.f32 %v2065, %v2087
    %v2142 = vadd.f32 %v2066, %v2083
    %v2143 = vadd.f32 %v2067, %v2087
    %v2144 = vadd.f32 %v2068, %v2083
    %v2145 = vadd.f32 %v2069, %v2087
    %v2146 = vadd.f32 %v2070, %v2083
    %v2147 = vadd.f32 %v2071, %v2087
    %v2148 = vadd.f32 %v2072, %v2083
    %v2149 = vadd.f32 %v2073, %v2087
    %v2150 = vadd.f32 %v2074, %v2083
    %v2151 = vadd.f32 %v2075, %v2087
    %v2152 = vadd.f32 %v2076, %v2083
    %v2153 = vadd.f32 %v2077, %v2087
    %v2154 = vmax.f32 %v2090, 0.0
    %v2155 = vmax.f32 %v2091, 0.0
    %v2156 = vmax.f32 %v2092, 0.0
    %v2157 = vmax.f32 %v2093, 0.0
    %v2158 = vmax.f32 %v2094, 0.0
    %v2159 = vmax.f32 %v2095, 0.0
    %v2160 = vmax.f32 %v2096, 0.0
    %v2161 = vmax.f32 %v2097, 0.0
    %v2162 = vmax.f32 %v2098, 0.0
    %v2163 = vmax.f32 %v2099, 0.0
    %v2164 = vmax.f32 %v2100, 0.0
    %v2165 = vmax.f32 %v2101, 0.0
    %v2166 = vmax.f32 %v2102, 0.0
    %v2167 = vmax.f32 %v2103, 0.0
    %v2168 = vmax.f32 %v2104, 0.0
    %v2169 = vmax.f32 %v2105, 0.0
    %v2170 = vmax.f32 %v2106, 0.0
    %v2171 = vmax.f32 %v2107, 0.0
    %v2172 = vmax.f32 %v2108, 0.0
    %v2173 = vmax.f32 %v2109, 0.0
    %v2174 = vmax.f32 %v2110, 0.0
    %v2175 = vmax.f32 %v2111, 0.0
    %v2176 = vmax.f32 %v2112, 0.0
    %v2177 = vmax.f32 %v2113, 0.0
    %v2178 = vmax.f32 %v2114, 0.0
    %v2179 = vmax.f32 %v2115, 0.0
    %v2180 = vmax.f32 %v2116, 0.0
    %v2181 = vmax.f32 %v2117, 0.0
    %v2182 = vmax.f32 %v2118, 0.0
    %v2183 = vmax.f32 %v2119, 0.0
    %v2184 = vmax.f32 %v2120, 0.0
    %v2185 = vmax.f32 %v2121, 0.0
    %v2186 = vmax.f32 %v2122, 0.0
    %v2187 = vmax.f32 %v2123, 0.0
    %v2188 = vmax.f32 %v2124, 0.0
    %v2189 = vmax.f32 %v2125, 0.0
    %v2190 = vmax.f32 %v2126, 0.0
    %v2191 = vmax.f32 %v2127, 0.0
    %v2192 = vmax.f32 %v2128, 0.0
    %v2193 = vmax.f32 %v2129, 0.0
    %v2194 = vmax.f32 %v2130, 0.0
    %v2195 = vmax.f32 %v2131, 0.0
    %v2196 = vmax.f32 %v2132, 0.0
    %v2197 = vmax.f32 %v2133, 0.0
    %v2198 = vmax.f32 %v2134, 0.0
    %v2199 = vmax.f32 %v2135, 0.0
    %v2200 = vmax.f32 %v2136, 0.0
    %v2201 = vmax.f32 %v2137, 0.0
    %v2202 = vmax.f32 %v2138, 0.0
    %v2203 = vmax.f32 %v2139, 0.0
    %v2204 = vmax.f32 %v2140, 0.0
    %v2205 = vmax.f32 %v2141, 0.0
    %v2206 = vmax.f32 %v2142, 0.0
    %v2207 = vmax.f32 %v2143, 0.0
    %v2208 = vmax.f32 %v2144, 0.0
    %v2209 = vmax.f32 %v2145, 0.0
    %v2210 = vmax.f32 %v2146, 0.0
    %v2211 = vmax.f32 %v2147, 0.0
    %v2212 = vmax.f32 %v2148, 0.0
    %v2213 = vmax.f32 %v2149, 0.0
    %v2214 = vmax.f32 %v2150, 0.0
    %v2215 = vmax.f32 %v2151, 0.0
    %v2216 = vmax.f32 %v2152, 0.0
    %v2217 = vmax.f32 %v2153, 0.0
    %v2218 = vpack.c.bf16 %v2156, %v2154
    %v2219 = vpack.c.bf16 %v2157, %v2155
    %v2220 = vpack.c.bf16 %v2160, %v2158
    %v2221 = vpack.c.bf16 %v2161, %v2159
    %v2222 = vpack.c.bf16 %v2164, %v2162
    %v2223 = vpack.c.bf16 %v2165, %v2163
    %v2224 = vpack.c.bf16 %v2168, %v2166
    %v2225 = vpack.c.bf16 %v2169, %v2167
    %v2226 = vpack.c.bf16 %v2172, %v2170
    %v2227 = vpack.c.bf16 %v2173, %v2171
    %v2228 = vpack.c.bf16 %v2176, %v2174
    %v2229 = vpack.c.bf16 %v2177, %v2175
    %v2230 = vpack.c.bf16 %v2180, %v2178
    %v2231 = vpack.c.bf16 %v2181, %v2179
    %v2232 = vpack.c.bf16 %v2184, %v2182
    %v2233 = vpack.c.bf16 %v2185, %v2183
    %v2234 = vpack.c.bf16 %v2188, %v2186
    %v2235 = vpack.c.bf16 %v2189, %v2187
    %v2236 = vpack.c.bf16 %v2192, %v2190
    %v2237 = vpack.c.bf16 %v2193, %v2191
    %v2238 = vpack.c.bf16 %v2196, %v2194
    %v2239 = vpack.c.bf16 %v2197, %v2195
    %v2240 = vpack.c.bf16 %v2200, %v2198
    %v2241 = vpack.c.bf16 %v2201, %v2199
    %v2242 = vpack.c.bf16 %v2204, %v2202
    %v2243 = vpack.c.bf16 %v2205, %v2203
    %v2244 = vpack.c.bf16 %v2208, %v2206
    %v2245 = vpack.c.bf16 %v2209, %v2207
    %v2246 = vpack.c.bf16 %v2212, %v2210
    %v2247 = vpack.c.bf16 %v2213, %v2211
    %v2248 = vpack.c.bf16 %v2216, %v2214
    %v2249 = vpack.c.bf16 %v2217, %v2215
    %v2250 = vld [vmem:[#allocation7] sm:$0xf]
    %v2251 = vld [vmem:[#allocation7 + $0x4] sm:$0xf]
    %v2252 = vld [vmem:[#allocation7 + $0x8] sm:$0xf]
    %v2253 = vld [vmem:[#allocation7 + $0xc] sm:$0xf]
    %v2254 = vld [vmem:[#allocation7 + $0x10] sm:$0xf]
    %v2255 = vld [vmem:[#allocation7 + $0x14] sm:$0xf]
    %v2256 = vld [vmem:[#allocation7 + $0x18] sm:$0xf]
    %v2257 = vld [vmem:[#allocation7 + $0x1c] sm:$0xf]
    %v2258 = vld [vmem:[#allocation7 + $0x20] sm:$0xf]
    %v2259 = vld [vmem:[#allocation7 + $0x24] sm:$0xf]
    %v2260 = vld [vmem:[#allocation7 + $0x28] sm:$0xf]
    %v2261 = vld [vmem:[#allocation7 + $0x2c] sm:$0xf]
    %v2262 = vld [vmem:[#allocation7 + $0x30] sm:$0xf]
    %v2263 = vld [vmem:[#allocation7 + $0x34] sm:$0xf]
    %v2264 = vld [vmem:[#allocation7 + $0x38] sm:$0xf]
    %v2265 = vld [vmem:[#allocation7 + $0x3c] sm:$0xf]
    %v2266 = vld [vmem:[#allocation7 + $0x40] sm:$0xf]
    %v2267 = vld [vmem:[#allocation7 + $0x44] sm:$0xf]
    %v2268 = vld [vmem:[#allocation7 + $0x48] sm:$0xf]
    %v2269 = vld [vmem:[#allocation7 + $0x4c] sm:$0xf]
    %v2270 = vld [vmem:[#allocation7 + $0x50] sm:$0xf]
    %v2271 = vld [vmem:[#allocation7 + $0x54] sm:$0xf]
    %v2272 = vld [vmem:[#allocation7 + $0x58] sm:$0xf]
    %v2273 = vld [vmem:[#allocation7 + $0x5c] sm:$0xf]
    %v2274 = vld [vmem:[#allocation7 + $0x60] sm:$0xf]
    %v2275 = vld [vmem:[#allocation7 + $0x64] sm:$0xf]
    %v2276 = vld [vmem:[#allocation7 + $0x68] sm:$0xf]
    %v2277 = vld [vmem:[#allocation7 + $0x6c] sm:$0xf]
    %v2278 = vld [vmem:[#allocation7 + $0x70] sm:$0xf]
    %v2279 = vld [vmem:[#allocation7 + $0x74] sm:$0xf]
    %v2280 = vld [vmem:[#allocation7 + $0x78] sm:$0xf]
    %v2281 = vld [vmem:[#allocation7 + $0x7c] sm:$0xf]
    %v2314 = vunpack.c.l.b16 %v2250
    %v2315 = vunpack.c.l.b16 %v2251
    %v2316 = vunpack.c.l.b16 %v2252
    %v2317 = vunpack.c.l.b16 %v2253
    %v2318 = vunpack.c.l.b16 %v2254
    %v2319 = vunpack.c.l.b16 %v2255
    %v2320 = vunpack.c.l.b16 %v2256
    %v2321 = vunpack.c.l.b16 %v2257
    %v2322 = vunpack.c.l.b16 %v2258
    %v2323 = vunpack.c.l.b16 %v2259
    %v2324 = vunpack.c.l.b16 %v2260
    %v2325 = vunpack.c.l.b16 %v2261
    %v2326 = vunpack.c.l.b16 %v2262
    %v2327 = vunpack.c.l.b16 %v2263
    %v2328 = vunpack.c.l.b16 %v2264
    %v2329 = vunpack.c.l.b16 %v2265
    %v2330 = vunpack.c.l.b16 %v2266
    %v2331 = vunpack.c.l.b16 %v2267
    %v2332 = vunpack.c.l.b16 %v2268
    %v2333 = vunpack.c.l.b16 %v2269
    %v2334 = vunpack.c.l.b16 %v2270
    %v2335 = vunpack.c.l.b16 %v2271
    %v2336 = vunpack.c.l.b16 %v2272
    %v2337 = vunpack.c.l.b16 %v2273
    %v2338 = vunpack.c.l.b16 %v2274
    %v2339 = vunpack.c.l.b16 %v2275
    %v2340 = vunpack.c.l.b16 %v2276
    %v2341 = vunpack.c.l.b16 %v2277
    %v2342 = vunpack.c.l.b16 %v2278
    %v2343 = vunpack.c.l.b16 %v2279
    %v2344 = vunpack.c.l.b16 %v2280
    %v2345 = vunpack.c.l.b16 %v2281
    %v2346 = vpack.c.b16 %v2315, %v2314
    %v2347 = vpack.c.b16 %v2317, %v2316
    %v2348 = vpack.c.b16 %v2319, %v2318
    %v2349 = vpack.c.b16 %v2321, %v2320
    %v2350 = vpack.c.b16 %v2323, %v2322
    %v2351 = vpack.c.b16 %v2325, %v2324
    %v2352 = vpack.c.b16 %v2327, %v2326
    %v2353 = vpack.c.b16 %v2329, %v2328
    %v2354 = vpack.c.b16 %v2331, %v2330
    %v2355 = vpack.c.b16 %v2333, %v2332
    %v2356 = vpack.c.b16 %v2335, %v2334
    %v2357 = vpack.c.b16 %v2337, %v2336
    %v2358 = vpack.c.b16 %v2339, %v2338
    %v2359 = vpack.c.b16 %v2341, %v2340
    %v2360 = vpack.c.b16 %v2343, %v2342
    %v2361 = vpack.c.b16 %v2345, %v2344
    %2378 = vmatprep.subr.bf16.mxu0 0
    %2379 = vmatpush1.bf16.msra.mxu0 %v2353
    %2380 = vmatprep.subr.bf16.mxu0 0
    %2381 = vmatpush1.bf16.msra.mxu0 %v2352
    %2382 = vmatprep.subr.bf16.mxu0 0
    %2383 = vmatpush1.bf16.msra.mxu0 %v2351
    %2384 = vmatprep.subr.bf16.mxu0 0
    %2385 = vmatpush1.bf16.msra.mxu0 %v2350
    %2386 = vmatprep.subr.bf16.mxu0 0
    %2387 = vmatpush1.bf16.msra.mxu0 %v2349
    %2388 = vmatprep.subr.bf16.mxu0 0
    %2389 = vmatpush1.bf16.msra.mxu0 %v2348
    %2390 = vmatprep.subr.bf16.mxu0 0
    %2391 = vmatpush1.bf16.msra.mxu0 %v2347
    %2392 = vmatprep.subr.bf16.mxu0 0
    %2393 = vmatpush1.bf16.msra.mxu0 %v2346
    %2394 = vmatprep.subr.bf16.mxu0 0
    %2395 = vmatpush2.bf16.msra.mxu0 %v2361
    %2396 = vmatprep.subr.bf16.mxu0 0
    %2397 = vmatpush2.bf16.msra.mxu0 %v2360
    %2398 = vmatprep.subr.bf16.mxu0 0
    %2399 = vmatpush2.bf16.msra.mxu0 %v2359
    %2400 = vmatprep.subr.bf16.mxu0 0
    %2401 = vmatpush2.bf16.msra.mxu0 %v2358
    %2402 = vmatprep.subr.bf16.mxu0 0
    %2403 = vmatpush2.bf16.msra.mxu0 %v2357
    %2404 = vmatprep.subr.bf16.mxu0 0
    %2405 = vmatpush2.bf16.msra.mxu0 %v2356
    %2406 = vmatprep.subr.bf16.mxu0 0
    %2407 = vmatpush2.bf16.msra.mxu0 %v2355
    %2408 = vmatprep.subr.bf16.mxu0 0
    %2409 = vmatpush2.bf16.msra.mxu0 %v2354
    %2410 = vmatprep.mubr.bf16.mxu0 %v2219
    %2411 = vmatmul.mubr.bf16.gmra.mxu0 %v2218
    %v2412 = vpop.f32.mrf.mxu0
    %v2413 = vadd.f32 0.0, %v2412
    %v2414 = vpop.f32.mrf.mxu0
    %v2415 = vpop.f32.mrf.mxu0
    %v2416 = vadd.f32 0.0, %v2415
    %v2417 = vpop.f32.mrf.mxu0
    %2418 = vmatprep.mubr.bf16.mxu0 %v2221
    %2419 = vmatmul.mubr.bf16.gmra.mxu0 %v2220
    %v2420 = vpop.f32.mrf.mxu0
    %v2421 = vadd.f32 0.0, %v2420
    %v2422 = vpop.f32.mrf.mxu0
    %v2423 = vpop.f32.mrf.mxu0
    %v2424 = vadd.f32 0.0, %v2423
    %v2425 = vpop.f32.mrf.mxu0
    %2426 = vmatprep.mubr.bf16.mxu0 %v2223
    %2427 = vmatmul.mubr.bf16.gmra.mxu0 %v2222
    %v2428 = vpop.f32.mrf.mxu0
    %v2429 = vadd.f32 0.0, %v2428
    %v2430 = vpop.f32.mrf.mxu0
    %v2431 = vpop.f32.mrf.mxu0
    %v2432 = vadd.f32 0.0, %v2431
    %v2433 = vpop.f32.mrf.mxu0
    %2434 = vmatprep.mubr.bf16.mxu0 %v2225
    %2435 = vmatmul.mubr.bf16.gmra.mxu0 %v2224
    %v2436 = vpop.f32.mrf.mxu0
    %v2437 = vadd.f32 0.0, %v2436
    %v2438 = vpop.f32.mrf.mxu0
    %v2439 = vpop.f32.mrf.mxu0
    %v2440 = vadd.f32 0.0, %v2439
    %v2441 = vpop.f32.mrf.mxu0
    %2442 = vmatprep.mubr.bf16.mxu0 %v2227
    %2443 = vmatmul.mubr.bf16.gmra.mxu0 %v2226
    %v2444 = vpop.f32.mrf.mxu0
    %v2445 = vadd.f32 0.0, %v2444
    %v2446 = vpop.f32.mrf.mxu0
    %v2447 = vpop.f32.mrf.mxu0
    %v2448 = vadd.f32 0.0, %v2447
    %v2449 = vpop.f32.mrf.mxu0
    %2450 = vmatprep.mubr.bf16.mxu0 %v2229
    %2451 = vmatmul.mubr.bf16.gmra.mxu0 %v2228
    %v2452 = vpop.f32.mrf.mxu0
    %v2453 = vadd.f32 0.0, %v2452
    %v2454 = vpop.f32.mrf.mxu0
    %v2455 = vpop.f32.mrf.mxu0
    %v2456 = vadd.f32 0.0, %v2455
    %v2457 = vpop.f32.mrf.mxu0
    %2458 = vmatprep.mubr.bf16.mxu0 %v2231
    %2459 = vmatmul.mubr.bf16.gmra.mxu0 %v2230
    %v2460 = vpop.f32.mrf.mxu0
    %v2461 = vadd.f32 0.0, %v2460
    %v2462 = vpop.f32.mrf.mxu0
    %v2463 = vpop.f32.mrf.mxu0
    %v2464 = vadd.f32 0.0, %v2463
    %v2465 = vpop.f32.mrf.mxu0
    %2466 = vmatprep.mubr.bf16.mxu0 %v2233
    %2467 = vmatmul.mubr.bf16.gmra.mxu0 %v2232
    %v2468 = vpop.f32.mrf.mxu0
    %v2469 = vadd.f32 0.0, %v2468
    %v2470 = vpop.f32.mrf.mxu0
    %v2471 = vpop.f32.mrf.mxu0
    %v2472 = vadd.f32 0.0, %v2471
    %v2473 = vpop.f32.mrf.mxu0
    %2474 = vmatprep.mubr.bf16.mxu0 %v2235
    %2475 = vmatmul.mubr.bf16.gmra.mxu0 %v2234
    %v2476 = vpop.f32.mrf.mxu0
    %v2477 = vadd.f32 0.0, %v2476
    %v2478 = vpop.f32.mrf.mxu0
    %v2479 = vpop.f32.mrf.mxu0
    %v2480 = vadd.f32 0.0, %v2479
    %v2481 = vpop.f32.mrf.mxu0
    %2482 = vmatprep.mubr.bf16.mxu0 %v2237
    %2483 = vmatmul.mubr.bf16.gmra.mxu0 %v2236
    %v2484 = vpop.f32.mrf.mxu0
    %v2485 = vadd.f32 0.0, %v2484
    %v2486 = vpop.f32.mrf.mxu0
    %v2487 = vpop.f32.mrf.mxu0
    %v2488 = vadd.f32 0.0, %v2487
    %v2489 = vpop.f32.mrf.mxu0
    %2490 = vmatprep.mubr.bf16.mxu0 %v2239
    %2491 = vmatmul.mubr.bf16.gmra.mxu0 %v2238
    %v2492 = vpop.f32.mrf.mxu0
    %v2493 = vadd.f32 0.0, %v2492
    %v2494 = vpop.f32.mrf.mxu0
    %v2495 = vpop.f32.mrf.mxu0
    %v2496 = vadd.f32 0.0, %v2495
    %v2497 = vpop.f32.mrf.mxu0
    %2498 = vmatprep.mubr.bf16.mxu0 %v2241
    %2499 = vmatmul.mubr.bf16.gmra.mxu0 %v2240
    %v2500 = vpop.f32.mrf.mxu0
    %v2501 = vadd.f32 0.0, %v2500
    %v2502 = vpop.f32.mrf.mxu0
    %v2503 = vpop.f32.mrf.mxu0
    %v2504 = vadd.f32 0.0, %v2503
    %v2505 = vpop.f32.mrf.mxu0
    %2506 = vmatprep.mubr.bf16.mxu0 %v2243
    %2507 = vmatmul.mubr.bf16.gmra.mxu0 %v2242
    %v2508 = vpop.f32.mrf.mxu0
    %v2509 = vadd.f32 0.0, %v2508
    %v2510 = vpop.f32.mrf.mxu0
    %v2511 = vpop.f32.mrf.mxu0
    %v2512 = vadd.f32 0.0, %v2511
    %v2513 = vpop.f32.mrf.mxu0
    %2514 = vmatprep.mubr.bf16.mxu0 %v2245
    %2515 = vmatmul.mubr.bf16.gmra.mxu0 %v2244
    %v2516 = vpop.f32.mrf.mxu0
    %v2517 = vadd.f32 0.0, %v2516
    %v2518 = vpop.f32.mrf.mxu0
    %v2519 = vpop.f32.mrf.mxu0
    %v2520 = vadd.f32 0.0, %v2519
    %v2521 = vpop.f32.mrf.mxu0
    %2522 = vmatprep.mubr.bf16.mxu0 %v2247
    %2523 = vmatmul.mubr.bf16.gmra.mxu0 %v2246
    %v2524 = vpop.f32.mrf.mxu0
    %v2525 = vadd.f32 0.0, %v2524
    %v2526 = vpop.f32.mrf.mxu0
    %v2527 = vpop.f32.mrf.mxu0
    %v2528 = vadd.f32 0.0, %v2527
    %v2529 = vpop.f32.mrf.mxu0
    %2530 = vmatprep.mubr.bf16.mxu0 %v2249
    %2531 = vmatmul.mubr.bf16.gmra.mxu0 %v2248
    %v2532 = vpop.f32.mrf.mxu0
    %v2533 = vadd.f32 0.0, %v2532
    %v2534 = vpop.f32.mrf.mxu0
    %v2535 = vpop.f32.mrf.mxu0
    %v2536 = vadd.f32 0.0, %v2535
    %v2537 = vpop.f32.mrf.mxu0
    %2538 = vdwg.mxu0
    %v2539 = vpack.c.bf16 %v2416, %v2413
    %v2540 = vpack.c.bf16 %v2424, %v2421
    %v2541 = vpack.c.bf16 %v2432, %v2429
    %v2542 = vpack.c.bf16 %v2440, %v2437
    %v2543 = vpack.c.bf16 %v2448, %v2445
    %v2544 = vpack.c.bf16 %v2456, %v2453
    %v2545 = vpack.c.bf16 %v2464, %v2461
    %v2546 = vpack.c.bf16 %v2472, %v2469
    %v2547 = vpack.c.bf16 %v2480, %v2477
    %v2548 = vpack.c.bf16 %v2488, %v2485
    %v2549 = vpack.c.bf16 %v2496, %v2493
    %v2550 = vpack.c.bf16 %v2504, %v2501
    %v2551 = vpack.c.bf16 %v2512, %v2509
    %v2552 = vpack.c.bf16 %v2520, %v2517
    %v2553 = vpack.c.bf16 %v2528, %v2525
    %v2554 = vpack.c.bf16 %v2536, %v2533
    %v2555 = vld [vmem:[#allocation8] sm:$0xff]
    %v2556 = vld [vmem:[#allocation8 + $0x8] sm:$0xff]
    %v2557 = vld [vmem:[#allocation8 + $0x10] sm:$0xff]
    %v2558 = vld [vmem:[#allocation8 + $0x18] sm:$0xff]
    %v2559 = vld [vmem:[#allocation8 + $0x20] sm:$0xff]
    %v2560 = vld [vmem:[#allocation8 + $0x28] sm:$0xff]
    %v2561 = vld [vmem:[#allocation8 + $0x30] sm:$0xff]
    %v2562 = vld [vmem:[#allocation8 + $0x38] sm:$0xff]
    %v2563 = vld [vmem:[#allocation8 + $0x40] sm:$0xff]
    %v2564 = vld [vmem:[#allocation8 + $0x48] sm:$0xff]
    %v2565 = vld [vmem:[#allocation8 + $0x50] sm:$0xff]
    %v2566 = vld [vmem:[#allocation8 + $0x58] sm:$0xff]
    %v2567 = vld [vmem:[#allocation8 + $0x60] sm:$0xff]
    %v2568 = vld [vmem:[#allocation8 + $0x68] sm:$0xff]
    %v2583 = vunpack.c.l.b16 %v2555
    %v2584 = vunpack.c.h.b16 %v2555
    %v2585 = vunpack.c.l.b16 %v2556
    %v2586 = vunpack.c.h.b16 %v2556
    %v2587 = vunpack.c.l.b16 %v2557
    %v2588 = vunpack.c.h.b16 %v2557
    %v2589 = vunpack.c.l.b16 %v2558
    %v2590 = vunpack.c.h.b16 %v2558
    %v2591 = vunpack.c.l.b16 %v2559
    %v2592 = vunpack.c.h.b16 %v2559
    %v2593 = vunpack.c.l.b16 %v2560
    %v2594 = vunpack.c.h.b16 %v2560
    %v2595 = vunpack.c.l.b16 %v2561
    %v2596 = vunpack.c.h.b16 %v2561
    %v2597 = vunpack.c.l.b16 %v2562
    %v2598 = vunpack.c.h.b16 %v2562
    %v2599 = vunpack.c.l.b16 %v2563
    %v2600 = vunpack.c.h.b16 %v2563
    %v2601 = vunpack.c.l.b16 %v2564
    %v2602 = vunpack.c.h.b16 %v2564
    %v2603 = vunpack.c.l.b16 %v2565
    %v2604 = vunpack.c.h.b16 %v2565
    %v2605 = vunpack.c.l.b16 %v2566
    %v2606 = vunpack.c.h.b16 %v2566
    %v2607 = vunpack.c.l.b16 %v2567
    %v2608 = vunpack.c.h.b16 %v2567
    %v2609 = vunpack.c.l.b16 %v2568
    %v2610 = vunpack.c.h.b16 %v2568
    %v2611 = vpack.c.b16 %v2585, %v2583
    %v2612 = vpack.c.b16 %v2586, %v2584
    %v2613 = vpack.c.b16 %v2589, %v2587
    %v2614 = vpack.c.b16 %v2590, %v2588
    %v2615 = vpack.c.b16 %v2593, %v2591
    %v2616 = vpack.c.b16 %v2594, %v2592
    %v2617 = vpack.c.b16 %v2597, %v2595
    %v2618 = vpack.c.b16 %v2598, %v2596
    %v2619 = vpack.c.b16 %v2601, %v2599
    %v2620 = vpack.c.b16 %v2602, %v2600
    %v2621 = vpack.c.b16 %v2605, %v2603
    %v2622 = vpack.c.b16 %v2606, %v2604
    %v2623 = vpack.c.b16 %v2609, %v2607
    %v2624 = vpack.c.b16 %v2610, %v2608
    %vm2632 = vcmask 1014784
    %v2634 = vsel %vm2632, %v2612, 0
    %v2637 = vsel %vm2632, %v2614, 0
    %v2640 = vsel %vm2632, %v2616, 0
    %v2643 = vsel %vm2632, %v2618, 0
    %v2646 = vsel %vm2632, %v2620, 0
    %v2649 = vsel %vm2632, %v2622, 0
    %v2652 = vsel %vm2632, %v2624, 0
    %vm2654 = vcmask 1045504
    %v2656 = vsel %vm2654, %v2554, 0
    %2658 = vmatprep.subr.bf16.mxu0 0
    %2659 = vmatpush1.bf16.msra.mxu0 %v2546
    %2660 = vmatprep.subr.bf16.mxu0 0
    %2661 = vmatpush1.bf16.msra.mxu0 %v2545
    %2662 = vmatprep.subr.bf16.mxu0 0
    %2663 = vmatpush1.bf16.msra.mxu0 %v2544
    %2664 = vmatprep.subr.bf16.mxu0 0
    %2665 = vmatpush1.bf16.msra.mxu0 %v2543
    %2666 = vmatprep.subr.bf16.mxu0 0
    %2667 = vmatpush1.bf16.msra.mxu0 %v2542
    %2668 = vmatprep.subr.bf16.mxu0 0
    %2669 = vmatpush1.bf16.msra.mxu0 %v2541
    %2670 = vmatprep.subr.bf16.mxu0 0
    %2671 = vmatpush1.bf16.msra.mxu0 %v2540
    %2672 = vmatprep.subr.bf16.mxu0 0
    %2673 = vmatpush1.bf16.msra.mxu0 %v2539
    %2674 = vmatprep.subr.bf16.mxu0 0
    %2675 = vmatpush2.bf16.msra.mxu0 %v2656
    %2676 = vmatprep.subr.bf16.mxu0 0
    %2677 = vmatpush2.bf16.msra.mxu0 %v2553
    %2678 = vmatprep.subr.bf16.mxu0 0
    %2679 = vmatpush2.bf16.msra.mxu0 %v2552
    %2680 = vmatprep.subr.bf16.mxu0 0
    %2681 = vmatpush2.bf16.msra.mxu0 %v2551
    %2682 = vmatprep.subr.bf16.mxu0 0
    %2683 = vmatpush2.bf16.msra.mxu0 %v2550
    %2684 = vmatprep.subr.bf16.mxu0 0
    %2685 = vmatpush2.bf16.msra.mxu0 %v2549
    %2686 = vmatprep.subr.bf16.mxu0 0
    %2687 = vmatpush2.bf16.msra.mxu0 %v2548
    %2688 = vmatprep.subr.bf16.mxu0 0
    %2689 = vmatpush2.bf16.msra.mxu0 %v2547
    %2690 = vmatprep.mubr.bf16.mxu0 %v2634
    %2691 = vmatmul.mubr.bf16.gmra.mxu0 %v2611
    %v2692 = vpop.f32.mrf.mxu0
    %v2693 = vadd.f32 0.0, %v2692
    %v2694 = vpop.f32.mrf.mxu0
    %v2695 = vpop.f32.mrf.mxu0
    %v2696 = vadd.f32 0.0, %v2695
    %v2697 = vpop.f32.mrf.mxu0
    %2698 = vmatprep.mubr.bf16.mxu0 %v2637
    %2699 = vmatmul.mubr.bf16.gmra.mxu0 %v2613
    %v2700 = vpop.f32.mrf.mxu0
    %v2701 = vadd.f32 0.0, %v2700
    %v2702 = vpop.f32.mrf.mxu0
    %v2703 = vpop.f32.mrf.mxu0
    %v2704 = vadd.f32 0.0, %v2703
    %v2705 = vpop.f32.mrf.mxu0
    %2706 = vmatprep.mubr.bf16.mxu0 %v2640
    %2707 = vmatmul.mubr.bf16.gmra.mxu0 %v2615
    %v2708 = vpop.f32.mrf.mxu0
    %v2709 = vadd.f32 0.0, %v2708
    %v2710 = vpop.f32.mrf.mxu0
    %v2711 = vpop.f32.mrf.mxu0
    %v2712 = vadd.f32 0.0, %v2711
    %v2713 = vpop.f32.mrf.mxu0
    %2714 = vmatprep.mubr.bf16.mxu0 %v2643
    %2715 = vmatmul.mubr.bf16.gmra.mxu0 %v2617
    %v2716 = vpop.f32.mrf.mxu0
    %v2717 = vadd.f32 0.0, %v2716
    %v2718 = vpop.f32.mrf.mxu0
    %v2719 = vpop.f32.mrf.mxu0
    %v2720 = vadd.f32 0.0, %v2719
    %v2721 = vpop.f32.mrf.mxu0
    %2722 = vmatprep.mubr.bf16.mxu0 %v2646
    %2723 = vmatmul.mubr.bf16.gmra.mxu0 %v2619
    %v2724 = vpop.f32.mrf.mxu0
    %v2725 = vadd.f32 0.0, %v2724
    %v2726 = vpop.f32.mrf.mxu0
    %v2727 = vpop.f32.mrf.mxu0
    %v2728 = vadd.f32 0.0, %v2727
    %v2729 = vpop.f32.mrf.mxu0
    %2730 = vmatprep.mubr.bf16.mxu0 %v2649
    %2731 = vmatmul.mubr.bf16.gmra.mxu0 %v2621
    %v2732 = vpop.f32.mrf.mxu0
    %v2733 = vadd.f32 0.0, %v2732
    %v2734 = vpop.f32.mrf.mxu0
    %v2735 = vpop.f32.mrf.mxu0
    %v2736 = vadd.f32 0.0, %v2735
    %v2737 = vpop.f32.mrf.mxu0
    %2738 = vmatprep.mubr.bf16.mxu0 %v2652
    %2739 = vmatmul.mubr.bf16.gmra.mxu0 %v2623
    %v2740 = vpop.f32.mrf.mxu0
    %v2741 = vadd.f32 0.0, %v2740
    %v2742 = vpop.f32.mrf.mxu0
    %v2743 = vpop.f32.mrf.mxu0
    %v2744 = vadd.f32 0.0, %v2743
    %v2745 = vpop.f32.mrf.mxu0
    %2746 = vdwg.mxu0
    %v2747 = vld [vmem:[#allocation10] sm:$0xff]
    %v2748 = vld [vmem:[#allocation10 + $0x8] sm:$0xff]
    %v2749 = vld [vmem:[#allocation10 + $0x10] sm:$0xff]
    %v2750 = vld [vmem:[#allocation10 + $0x18] sm:$0xff]
    %v2751 = vld [vmem:[#allocation10 + $0x20] sm:$0xff]
    %v2752 = vld [vmem:[#allocation10 + $0x28] sm:$0xff]
    %v2753 = vld [vmem:[#allocation10 + $0x30] sm:$0xff]
    %v2754 = vld [vmem:[#allocation10 + $0x38] sm:$0xff]
    %v2755 = vld [vmem:[#allocation10 + $0x40] sm:$0xff]
    %v2756 = vld [vmem:[#allocation10 + $0x48] sm:$0xff]
    %v2757 = vld [vmem:[#allocation10 + $0x50] sm:$0xff]
    %v2758 = vld [vmem:[#allocation10 + $0x58] sm:$0xff]
    %v2759 = vld [vmem:[#allocation10 + $0x60] sm:$0xff]
    %v2760 = vld [vmem:[#allocation10 + $0x68] sm:$0xff]
    %v2761 = vld [vmem:[#allocation10 + $0x70] sm:$0xff]
    %v2762 = vld [vmem:[#allocation10 + $0x78] sm:$0xff]
    %2763 = vmatprep.subr.mxu0 0.0
    %2764 = vmatpush1.msra.mxu0 %v2762
    %2765 = vmatprep.subr.mxu0 0.0
    %2766 = vmatpush1.msra.mxu0 %v2761
    %2767 = vmatprep.subr.mxu0 0.0
    %2768 = vmatpush1.msra.mxu0 %v2760
    %2769 = vmatprep.subr.mxu0 0.0
    %2770 = vmatpush1.msra.mxu0 %v2759
    %2771 = vmatprep.subr.mxu0 0.0
    %2772 = vmatpush1.msra.mxu0 %v2758
    %2773 = vmatprep.subr.mxu0 0.0
    %2774 = vmatpush1.msra.mxu0 %v2757
    %2775 = vmatprep.subr.mxu0 0.0
    %2776 = vmatpush1.msra.mxu0 %v2756
    %2777 = vmatprep.subr.mxu0 0.0
    %2778 = vmatpush1.msra.mxu0 %v2755
    %2779 = vmatprep.subr.mxu0 0.0
    %2780 = vmatpush1.msra.mxu0 %v2754
    %2781 = vmatprep.subr.mxu0 0.0
    %2782 = vmatpush1.msra.mxu0 %v2753
    %2783 = vmatprep.subr.mxu0 0.0
    %2784 = vmatpush1.msra.mxu0 %v2752
    %2785 = vmatprep.subr.mxu0 0.0
    %2786 = vmatpush1.msra.mxu0 %v2751
    %2787 = vmatprep.subr.mxu0 0.0
    %2788 = vmatpush1.msra.mxu0 %v2750
    %2789 = vmatprep.subr.mxu0 0.0
    %2790 = vmatpush1.msra.mxu0 %v2749
    %2791 = vmatprep.subr.mxu0 0.0
    %2792 = vmatpush1.msra.mxu0 %v2748
    %2793 = vmatprep.subr.mxu0 0.0
    %2794 = vmatpush1.msra.mxu0 %v2747
    %2795 = vmatprep.subr.mxu0 0.0
    %2796 = vmatpush2.msra.mxu0 0.0
    %2797 = vmatprep.subr.mxu0 0.0
    %2798 = vmatpush2.msra.mxu0 0.0
    %2799 = vmatprep.subr.mxu0 0.0
    %2800 = vmatpush2.msra.mxu0 0.0
    %2801 = vmatprep.subr.mxu0 0.0
    %2802 = vmatpush2.msra.mxu0 0.0
    %2803 = vmatprep.subr.mxu0 0.0
    %2804 = vmatpush2.msra.mxu0 0.0
    %2805 = vmatprep.subr.mxu0 0.0
    %2806 = vmatpush2.msra.mxu0 0.0
    %2807 = vmatprep.subr.mxu0 0.0
    %2808 = vmatpush2.msra.mxu0 0.0
    %2809 = vmatprep.subr.mxu0 0.0
    %2810 = vmatpush2.msra.mxu0 0.0
    %2811 = vmatprep.subr.mxu0 0.0
    %2812 = vmatpush2.msra.mxu0 0.0
    %2813 = vmatprep.subr.mxu0 0.0
    %2814 = vmatpush2.msra.mxu0 0.0
    %2815 = vmatprep.subr.mxu0 0.0
    %2816 = vmatpush2.msra.mxu0 0.0
    %2817 = vmatprep.subr.mxu0 0.0
    %2818 = vmatpush2.msra.mxu0 0.0
    %2819 = vmatprep.subr.mxu0 0.0
    %2820 = vmatpush2.msra.mxu0 0.0
    %2821 = vmatprep.subr.mxu0 0.0
    %2822 = vmatpush2.msra.mxu0 0.0
    %2823 = vmatprep.subr.mxu0 0.0
    %2824 = vmatpush2.msra.mxu0 0.0
    %2825 = vmatprep.subr.mxu0 0.0
    %2826 = vmatpush2.msra.mxu0 0.0
    %2827 = vmatprep.mubr.f32.mxu0 0.0
    %2828 = vmatmul.mubr.f32.gmra.mxu0 %v2693
    %v2829 = vpop.f32.mrf.mxu0
    %v2830 = vadd.f32 0.0, %v2829
    %v2831 = vpop.f32.mrf.mxu0
    %2832 = vmatprep.mubr.f32.mxu0 0.0
    %2833 = vmatmul.mubr.f32.gmra.mxu0 %v2696
    %v2834 = vpop.f32.mrf.mxu0
    %v2835 = vadd.f32 0.0, %v2834
    %v2836 = vpop.f32.mrf.mxu0
    %2837 = vmatprep.mubr.f32.mxu0 0.0
    %2838 = vmatmul.mubr.f32.gmra.mxu0 %v2701
    %v2839 = vpop.f32.mrf.mxu0
    %v2840 = vadd.f32 0.0, %v2839
    %v2841 = vpop.f32.mrf.mxu0
    %2842 = vmatprep.mubr.f32.mxu0 0.0
    %2843 = vmatmul.mubr.f32.gmra.mxu0 %v2704
    %v2844 = vpop.f32.mrf.mxu0
    %v2845 = vadd.f32 0.0, %v2844
    %v2846 = vpop.f32.mrf.mxu0
    %2847 = vmatprep.mubr.f32.mxu0 0.0
    %2848 = vmatmul.mubr.f32.gmra.mxu0 %v2709
    %v2849 = vpop.f32.mrf.mxu0
    %v2850 = vadd.f32 0.0, %v2849
    %v2851 = vpop.f32.mrf.mxu0
    %2852 = vmatprep.mubr.f32.mxu0 0.0
    %2853 = vmatmul.mubr.f32.gmra.mxu0 %v2712
    %v2854 = vpop.f32.mrf.mxu0
    %v2855 = vadd.f32 0.0, %v2854
    %v2856 = vpop.f32.mrf.mxu0
    %2857 = vmatprep.mubr.f32.mxu0 0.0
    %2858 = vmatmul.mubr.f32.gmra.mxu0 %v2717
    %v2859 = vpop.f32.mrf.mxu0
    %v2860 = vadd.f32 0.0, %v2859
    %v2861 = vpop.f32.mrf.mxu0
    %2862 = vmatprep.mubr.f32.mxu0 0.0
    %2863 = vmatmul.mubr.f32.gmra.mxu0 %v2720
    %v2864 = vpop.f32.mrf.mxu0
    %v2865 = vadd.f32 0.0, %v2864
    %v2866 = vpop.f32.mrf.mxu0
    %2867 = vmatprep.mubr.f32.mxu0 0.0
    %2868 = vmatmul.mubr.f32.gmra.mxu0 %v2725
    %v2869 = vpop.f32.mrf.mxu0
    %v2870 = vadd.f32 0.0, %v2869
    %v2871 = vpop.f32.mrf.mxu0
    %2872 = vmatprep.mubr.f32.mxu0 0.0
    %2873 = vmatmul.mubr.f32.gmra.mxu0 %v2728
    %v2874 = vpop.f32.mrf.mxu0
    %v2875 = vadd.f32 0.0, %v2874
    %v2876 = vpop.f32.mrf.mxu0
    %2877 = vmatprep.mubr.f32.mxu0 0.0
    %2878 = vmatmul.mubr.f32.gmra.mxu0 %v2733
    %v2879 = vpop.f32.mrf.mxu0
    %v2880 = vadd.f32 0.0, %v2879
    %v2881 = vpop.f32.mrf.mxu0
    %2882 = vmatprep.mubr.f32.mxu0 0.0
    %2883 = vmatmul.mubr.f32.gmra.mxu0 %v2736
    %v2884 = vpop.f32.mrf.mxu0
    %v2885 = vadd.f32 0.0, %v2884
    %v2886 = vpop.f32.mrf.mxu0
    %2887 = vmatprep.mubr.f32.mxu0 0.0
    %2888 = vmatmul.mubr.f32.gmra.mxu0 %v2741
    %v2889 = vpop.f32.mrf.mxu0
    %v2890 = vadd.f32 0.0, %v2889
    %v2891 = vpop.f32.mrf.mxu0
    %2892 = vmatprep.mubr.f32.mxu0 0.0
    %2893 = vmatmul.mubr.f32.gmra.mxu0 %v2744
    %v2894 = vpop.f32.mrf.mxu0
    %v2895 = vadd.f32 0.0, %v2894
    %v2896 = vpop.f32.mrf.mxu0
    %2897 = vdwg.mxu0
    %v2898 = vadd.f32 %v2830, %v2835
    %v2899 = vadd.f32 %v2898, %v2840
    %v2900 = vadd.f32 %v2899, %v2845
    %v2901 = vadd.f32 %v2900, %v2850
    %v2902 = vadd.f32 %v2901, %v2855
    %v2903 = vadd.f32 %v2902, %v2860
    %v2904 = vadd.f32 %v2903, %v2865
    %v2905 = vadd.f32 %v2904, %v2870
    %v2906 = vadd.f32 %v2905, %v2875
    %v2907 = vadd.f32 %v2906, %v2880
    %v2908 = vadd.f32 %v2907, %v2885
    %v2909 = vadd.f32 %v2908, %v2890
    %v2910 = vadd.f32 %v2909, %v2895
    %v2911 = vrot.slane %v2910, 4
    %v2912 = vadd.f32 %v2910, %v2911
    %v2913 = vrot.slane %v2912, 2
    %v2914 = vadd.f32 %v2912, %v2913
    %v2915 = vrot.slane %v2914, 1
    %v2916 = vadd.f32 %v2914, %v2915
    %v2917 = vmul.f32 %v2693, %v2693
    %v2918 = vmul.f32 %v2696, %v2696
    %v2919 = vmul.f32 %v2701, %v2701
    %v2920 = vmul.f32 %v2704, %v2704
    %v2921 = vmul.f32 %v2709, %v2709
    %v2922 = vmul.f32 %v2712, %v2712
    %v2923 = vmul.f32 %v2717, %v2717
    %v2924 = vmul.f32 %v2720, %v2720
    %v2925 = vmul.f32 %v2725, %v2725
    %v2926 = vmul.f32 %v2728, %v2728
    %v2927 = vmul.f32 %v2733, %v2733
    %v2928 = vmul.f32 %v2736, %v2736
    %v2929 = vmul.f32 %v2741, %v2741
    %v2930 = vmul.f32 %v2744, %v2744
    %2931 = vmatprep.subr.mxu0 0.0
    %2932 = vmatpush1.msra.mxu0 %v2762
    %2933 = vmatprep.subr.mxu0 0.0
    %2934 = vmatpush1.msra.mxu0 %v2761
    %2935 = vmatprep.subr.mxu0 0.0
    %2936 = vmatpush1.msra.mxu0 %v2760
    %2937 = vmatprep.subr.mxu0 0.0
    %2938 = vmatpush1.msra.mxu0 %v2759
    %2939 = vmatprep.subr.mxu0 0.0
    %2940 = vmatpush1.msra.mxu0 %v2758
    %2941 = vmatprep.subr.mxu0 0.0
    %2942 = vmatpush1.msra.mxu0 %v2757
    %2943 = vmatprep.subr.mxu0 0.0
    %2944 = vmatpush1.msra.mxu0 %v2756
    %2945 = vmatprep.subr.mxu0 0.0
    %2946 = vmatpush1.msra.mxu0 %v2755
    %2947 = vmatprep.subr.mxu0 0.0
    %2948 = vmatpush1.msra.mxu0 %v2754
    %2949 = vmatprep.subr.mxu0 0.0
    %2950 = vmatpush1.msra.mxu0 %v2753
    %2951 = vmatprep.subr.mxu0 0.0
    %2952 = vmatpush1.msra.mxu0 %v2752
    %2953 = vmatprep.subr.mxu0 0.0
    %2954 = vmatpush1.msra.mxu0 %v2751
    %2955 = vmatprep.subr.mxu0 0.0
    %2956 = vmatpush1.msra.mxu0 %v2750
    %2957 = vmatprep.subr.mxu0 0.0
    %2958 = vmatpush1.msra.mxu0 %v2749
    %2959 = vmatprep.subr.mxu0 0.0
    %2960 = vmatpush1.msra.mxu0 %v2748
    %2961 = vmatprep.subr.mxu0 0.0
    %2962 = vmatpush1.msra.mxu0 %v2747
    %2963 = vmatprep.subr.mxu0 0.0
    %2964 = vmatpush2.msra.mxu0 0.0
    %2965 = vmatprep.subr.mxu0 0.0
    %2966 = vmatpush2.msra.mxu0 0.0
    %2967 = vmatprep.subr.mxu0 0.0
    %2968 = vmatpush2.msra.mxu0 0.0
    %2969 = vmatprep.subr.mxu0 0.0
    %2970 = vmatpush2.msra.mxu0 0.0
    %2971 = vmatprep.subr.mxu0 0.0
    %2972 = vmatpush2.msra.mxu0 0.0
    %2973 = vmatprep.subr.mxu0 0.0
    %2974 = vmatpush2.msra.mxu0 0.0
    %2975 = vmatprep.subr.mxu0 0.0
    %2976 = vmatpush2.msra.mxu0 0.0
    %2977 = vmatprep.subr.mxu0 0.0
    %2978 = vmatpush2.msra.mxu0 0.0
    %2979 = vmatprep.subr.mxu0 0.0
    %2980 = vmatpush2.msra.mxu0 0.0
    %2981 = vmatprep.subr.mxu0 0.0
    %2982 = vmatpush2.msra.mxu0 0.0
    %2983 = vmatprep.subr.mxu0 0.0
    %2984 = vmatpush2.msra.mxu0 0.0
    %2985 = vmatprep.subr.mxu0 0.0
    %2986 = vmatpush2.msra.mxu0 0.0
    %2987 = vmatprep.subr.mxu0 0.0
    %2988 = vmatpush2.msra.mxu0 0.0
    %2989 = vmatprep.subr.mxu0 0.0
    %2990 = vmatpush2.msra.mxu0 0.0
    %2991 = vmatprep.subr.mxu0 0.0
    %2992 = vmatpush2.msra.mxu0 0.0
    %2993 = vmatprep.subr.mxu0 0.0
    %2994 = vmatpush2.msra.mxu0 0.0
    %2995 = vmatprep.mubr.f32.mxu0 0.0
    %2996 = vmatmul.mubr.f32.gmra.mxu0 %v2917
    %v2997 = vpop.f32.mrf.mxu0
    %v2998 = vadd.f32 0.0, %v2997
    %v2999 = vpop.f32.mrf.mxu0
    %3000 = vmatprep.mubr.f32.mxu0 0.0
    %3001 = vmatmul.mubr.f32.gmra.mxu0 %v2918
    %v3002 = vpop.f32.mrf.mxu0
    %v3003 = vadd.f32 0.0, %v3002
    %v3004 = vpop.f32.mrf.mxu0
    %3005 = vmatprep.mubr.f32.mxu0 0.0
    %3006 = vmatmul.mubr.f32.gmra.mxu0 %v2919
    %v3007 = vpop.f32.mrf.mxu0
    %v3008 = vadd.f32 0.0, %v3007
    %v3009 = vpop.f32.mrf.mxu0
    %3010 = vmatprep.mubr.f32.mxu0 0.0
    %3011 = vmatmul.mubr.f32.gmra.mxu0 %v2920
    %v3012 = vpop.f32.mrf.mxu0
    %v3013 = vadd.f32 0.0, %v3012
    %v3014 = vpop.f32.mrf.mxu0
    %3015 = vmatprep.mubr.f32.mxu0 0.0
    %3016 = vmatmul.mubr.f32.gmra.mxu0 %v2921
    %v3017 = vpop.f32.mrf.mxu0
    %v3018 = vadd.f32 0.0, %v3017
    %v3019 = vpop.f32.mrf.mxu0
    %3020 = vmatprep.mubr.f32.mxu0 0.0
    %3021 = vmatmul.mubr.f32.gmra.mxu0 %v2922
    %v3022 = vpop.f32.mrf.mxu0
    %v3023 = vadd.f32 0.0, %v3022
    %v3024 = vpop.f32.mrf.mxu0
    %3025 = vmatprep.mubr.f32.mxu0 0.0
    %3026 = vmatmul.mubr.f32.gmra.mxu0 %v2923
    %v3027 = vpop.f32.mrf.mxu0
    %v3028 = vadd.f32 0.0, %v3027
    %v3029 = vpop.f32.mrf.mxu0
    %3030 = vmatprep.mubr.f32.mxu0 0.0
    %3031 = vmatmul.mubr.f32.gmra.mxu0 %v2924
    %v3032 = vpop.f32.mrf.mxu0
    %v3033 = vadd.f32 0.0, %v3032
    %v3034 = vpop.f32.mrf.mxu0
    %3035 = vmatprep.mubr.f32.mxu0 0.0
    %3036 = vmatmul.mubr.f32.gmra.mxu0 %v2925
    %v3037 = vpop.f32.mrf.mxu0
    %v3038 = vadd.f32 0.0, %v3037
    %v3039 = vpop.f32.mrf.mxu0
    %3040 = vmatprep.mubr.f32.mxu0 0.0
    %3041 = vmatmul.mubr.f32.gmra.mxu0 %v2926
    %v3042 = vpop.f32.mrf.mxu0
    %v3043 = vadd.f32 0.0, %v3042
    %v3044 = vpop.f32.mrf.mxu0
    %3045 = vmatprep.mubr.f32.mxu0 0.0
    %3046 = vmatmul.mubr.f32.gmra.mxu0 %v2927
    %v3047 = vpop.f32.mrf.mxu0
    %v3048 = vadd.f32 0.0, %v3047
    %v3049 = vpop.f32.mrf.mxu0
    %3050 = vmatprep.mubr.f32.mxu0 0.0
    %3051 = vmatmul.mubr.f32.gmra.mxu0 %v2928
    %v3052 = vpop.f32.mrf.mxu0
    %v3053 = vadd.f32 0.0, %v3052
    %v3054 = vpop.f32.mrf.mxu0
    %3055 = vmatprep.mubr.f32.mxu0 0.0
    %3056 = vmatmul.mubr.f32.gmra.mxu0 %v2929
    %v3057 = vpop.f32.mrf.mxu0
    %v3058 = vadd.f32 0.0, %v3057
    %v3059 = vpop.f32.mrf.mxu0
    %3060 = vmatprep.mubr.f32.mxu0 0.0
    %3061 = vmatmul.mubr.f32.gmra.mxu0 %v2930
    %v3062 = vpop.f32.mrf.mxu0
    %v3063 = vadd.f32 0.0, %v3062
    %v3064 = vpop.f32.mrf.mxu0
    %3065 = vdwg.mxu0
    %v3066 = vadd.f32 %v2998, %v3003
    %v3067 = vadd.f32 %v3066, %v3008
    %v3068 = vadd.f32 %v3067, %v3013
    %v3069 = vadd.f32 %v3068, %v3018
    %v3070 = vadd.f32 %v3069, %v3023
    %v3071 = vadd.f32 %v3070, %v3028
    %v3072 = vadd.f32 %v3071, %v3033
    %v3073 = vadd.f32 %v3072, %v3038
    %v3074 = vadd.f32 %v3073, %v3043
    %v3075 = vadd.f32 %v3074, %v3048
    %v3076 = vadd.f32 %v3075, %v3053
    %v3077 = vadd.f32 %v3076, %v3058
    %v3078 = vadd.f32 %v3077, %v3063
    %v3079 = vrot.slane %v3078, 4
    %v3080 = vadd.f32 %v3078, %v3079
    %v3081 = vrot.slane %v3080, 2
    %v3082 = vadd.f32 %v3080, %v3081
    %v3083 = vrot.slane %v3082, 1
    %v3084 = vadd.f32 %v3082, %v3083
    %v3085 = vmul.f32 %v2916, %v2916
    %v3086 = vsub.f32 %v3084, %v3085
    %v3087 = vmax.f32 %v3086, 0.0
    %v3088 = vsub.f32 %v2693, %v2916
    %v3089 = vsub.f32 %v2696, %v2916
    %v3090 = vsub.f32 %v2701, %v2916
    %v3091 = vsub.f32 %v2704, %v2916
    %v3092 = vsub.f32 %v2709, %v2916
    %v3093 = vsub.f32 %v2712, %v2916
    %v3094 = vsub.f32 %v2717, %v2916
    %v3095 = vsub.f32 %v2720, %v2916
    %v3096 = vsub.f32 %v2725, %v2916
    %v3097 = vsub.f32 %v2728, %v2916
    %v3098 = vsub.f32 %v2733, %v2916
    %v3099 = vsub.f32 %v2736, %v2916
    %v3100 = vsub.f32 %v2741, %v2916
    %v3101 = vsub.f32 %v2744, %v2916
    %v3102 = vadd.f32 %v3087, 1e-05
    %v3103 = vrsqrt.pop %v3102
    %v3104 = vmul.f32 %v3088, %v3103
    %v3105 = vmul.f32 %v3089, %v3103
    %v3106 = vmul.f32 %v3090, %v3103
    %v3107 = vmul.f32 %v3091, %v3103
    %v3108 = vmul.f32 %v3092, %v3103
    %v3109 = vmul.f32 %v3093, %v3103
    %v3110 = vmul.f32 %v3094, %v3103
    %v3111 = vmul.f32 %v3095, %v3103
    %v3112 = vmul.f32 %v3096, %v3103
    %v3113 = vmul.f32 %v3097, %v3103
    %v3114 = vmul.f32 %v3098, %v3103
    %v3115 = vmul.f32 %v3099, %v3103
    %v3116 = vmul.f32 %v3100, %v3103
    %v3117 = vmul.f32 %v3101, %v3103
    %v3118 = vpack.c.bf16 %v3105, %v3104
    %v3119 = vpack.c.bf16 %v3107, %v3106
    %v3120 = vpack.c.bf16 %v3109, %v3108
    %v3121 = vpack.c.bf16 %v3111, %v3110
    %v3122 = vpack.c.bf16 %v3113, %v3112
    %v3123 = vpack.c.bf16 %v3115, %v3114
    %v3124 = vpack.c.bf16 %v3117, %v3116
    %v3125 = vld [vmem:[#allocation11] sm:$0xff]
    %v3126 = vld [vmem:[#allocation11 + $0x8] sm:$0xff]
    %v3127 = vld [vmem:[#allocation11 + $0x10] sm:$0xff]
    %v3128 = vld [vmem:[#allocation11 + $0x18] sm:$0xff]
    %v3129 = vld [vmem:[#allocation11 + $0x20] sm:$0xff]
    %v3130 = vld [vmem:[#allocation11 + $0x28] sm:$0xff]
    %v3131 = vld [vmem:[#allocation11 + $0x30] sm:$0xff]
    %v3132 = vld [vmem:[#allocation11 + $0x38] sm:$0xff]
    %v3133 = vld [vmem:[#allocation11 + $0x40] sm:$0xff]
    %v3134 = vld [vmem:[#allocation11 + $0x48] sm:$0xff]
    %v3135 = vld [vmem:[#allocation11 + $0x50] sm:$0xff]
    %v3136 = vld [vmem:[#allocation11 + $0x58] sm:$0xff]
    %v3137 = vld [vmem:[#allocation11 + $0x60] sm:$0xff]
    %v3138 = vld [vmem:[#allocation11 + $0x68] sm:$0xff]
    %v3139 = vld [vmem:[#allocation11 + $0x70] sm:$0xff]
    %v3140 = vld [vmem:[#allocation11 + $0x78] sm:$0xff]
    %s3141 = scalar_lea.vmem [#allocation11], 128
    %v3142 = vld [vmem:[%s3141] sm:$0xff]
    %v3143 = vld [vmem:[%s3141 + $0x8] sm:$0xff]
    %v3144 = vld [vmem:[%s3141 + $0x10] sm:$0xff]
    %v3145 = vld [vmem:[%s3141 + $0x18] sm:$0xff]
    %v3146 = vld [vmem:[%s3141 + $0x20] sm:$0xff]
    %v3147 = vld [vmem:[%s3141 + $0x28] sm:$0xff]
    %v3148 = vld [vmem:[%s3141 + $0x30] sm:$0xff]
    %v3149 = vld [vmem:[%s3141 + $0x38] sm:$0xff]
    %v3150 = vld [vmem:[%s3141 + $0x40] sm:$0xff]
    %v3151 = vld [vmem:[%s3141 + $0x48] sm:$0xff]
    %v3152 = vld [vmem:[%s3141 + $0x50] sm:$0xff]
    %v3153 = vld [vmem:[%s3141 + $0x58] sm:$0xff]
    %v3154 = vld [vmem:[%s3141 + $0x60] sm:$0xff]
    %v3155 = vld [vmem:[%s3141 + $0x68] sm:$0xff]
    %v3156 = vld [vmem:[%s3141 + $0x70] sm:$0xff]
    %v3157 = vld [vmem:[%s3141 + $0x78] sm:$0xff]
    %v3159 = vshrl.u32 %v3118, 16
    %v3161 = vshll.u32 %v3118, 16
    %v3163 = vrot.slane %v3161, 1
    %v3164 = vor.u32 %v3159, %v3163
    %v3166 = vshll.u32 %v3119, 16
    %v3168 = vrot.slane %v3166, 1
    %v3169 = vsel %vm325, %v3164, %v3168
    %v3170 = vshrl.u32 %v3119, 16
    %v3172 = vor.u32 %v3170, %v3168
    %v3174 = vshll.u32 %v3120, 16
    %v3176 = vrot.slane %v3174, 1
    %v3177 = vsel %vm325, %v3172, %v3176
    %v3178 = vshrl.u32 %v3120, 16
    %v3180 = vor.u32 %v3178, %v3176
    %v3182 = vshll.u32 %v3121, 16
    %v3184 = vrot.slane %v3182, 1
    %v3185 = vsel %vm325, %v3180, %v3184
    %v3186 = vshrl.u32 %v3121, 16
    %v3188 = vor.u32 %v3186, %v3184
    %v3190 = vshll.u32 %v3122, 16
    %v3192 = vrot.slane %v3190, 1
    %v3193 = vsel %vm325, %v3188, %v3192
    %v3194 = vshrl.u32 %v3122, 16
    %v3196 = vor.u32 %v3194, %v3192
    %v3198 = vshll.u32 %v3123, 16
    %v3200 = vrot.slane %v3198, 1
    %v3201 = vsel %vm325, %v3196, %v3200
    %v3202 = vshrl.u32 %v3123, 16
    %v3204 = vor.u32 %v3202, %v3200
    %v3206 = vshll.u32 %v3124, 16
    %v3208 = vrot.slane %v3206, 1
    %v3209 = vsel %vm325, %v3204, %v3208
    %v3210 = vshrl.u32 %v3124, 16
    %v3212 = vor.u32 %v3210, %v3208
    %v3236 = vunpack.c.l.b16 %v3142
    %v3237 = vunpack.c.h.b16 %v3142
    %v3238 = vunpack.c.l.b16 %v3143
    %v3239 = vunpack.c.h.b16 %v3143
    %v3240 = vunpack.c.l.b16 %v3144
    %v3241 = vunpack.c.h.b16 %v3144
    %v3242 = vunpack.c.l.b16 %v3145
    %v3243 = vunpack.c.h.b16 %v3145
    %v3244 = vunpack.c.l.b16 %v3146
    %v3245 = vunpack.c.h.b16 %v3146
    %v3246 = vunpack.c.l.b16 %v3147
    %v3247 = vunpack.c.h.b16 %v3147
    %v3248 = vunpack.c.l.b16 %v3148
    %v3249 = vunpack.c.h.b16 %v3148
    %v3250 = vunpack.c.l.b16 %v3149
    %v3251 = vunpack.c.h.b16 %v3149
    %v3252 = vunpack.c.l.b16 %v3150
    %v3253 = vunpack.c.h.b16 %v3150
    %v3254 = vunpack.c.l.b16 %v3151
    %v3255 = vunpack.c.h.b16 %v3151
    %v3256 = vunpack.c.l.b16 %v3152
    %v3257 = vunpack.c.h.b16 %v3152
    %v3258 = vunpack.c.l.b16 %v3153
    %v3259 = vunpack.c.h.b16 %v3153
    %v3260 = vunpack.c.l.b16 %v3154
    %v3261 = vunpack.c.h.b16 %v3154
    %v3262 = vunpack.c.l.b16 %v3155
    %v3263 = vunpack.c.h.b16 %v3155
    %v3264 = vunpack.c.l.b16 %v3156
    %v3265 = vunpack.c.h.b16 %v3156
    %v3266 = vunpack.c.l.b16 %v3157
    %v3267 = vunpack.c.h.b16 %v3157
    %v3268 = vpack.c.b16 %v3238, %v3236
    %v3269 = vpack.c.b16 %v3239, %v3237
    %v3270 = vpack.c.b16 %v3242, %v3240
    %v3271 = vpack.c.b16 %v3243, %v3241
    %v3272 = vpack.c.b16 %v3246, %v3244
    %v3273 = vpack.c.b16 %v3247, %v3245
    %v3274 = vpack.c.b16 %v3250, %v3248
    %v3275 = vpack.c.b16 %v3251, %v3249
    %v3276 = vpack.c.b16 %v3254, %v3252
    %v3277 = vpack.c.b16 %v3255, %v3253
    %v3278 = vpack.c.b16 %v3258, %v3256
    %v3279 = vpack.c.b16 %v3259, %v3257
    %v3280 = vpack.c.b16 %v3262, %v3260
    %v3281 = vpack.c.b16 %v3263, %v3261
    %v3282 = vpack.c.b16 %v3266, %v3264
    %v3283 = vpack.c.b16 %v3267, %v3265
    %3300 = vmatprep.subr.bf16.mxu0 %v3283
    %3301 = vmatpush1.bf16.msra.mxu0 %v3282
    %3302 = vmatprep.subr.bf16.mxu0 %v3281
    %3303 = vmatpush1.bf16.msra.mxu0 %v3280
    %3304 = vmatprep.subr.bf16.mxu0 %v3279
    %3305 = vmatpush1.bf16.msra.mxu0 %v3278
    %3306 = vmatprep.subr.bf16.mxu0 %v3277
    %3307 = vmatpush1.bf16.msra.mxu0 %v3276
    %3308 = vmatprep.subr.bf16.mxu0 %v3275
    %3309 = vmatpush1.bf16.msra.mxu0 %v3274
    %3310 = vmatprep.subr.bf16.mxu0 %v3273
    %3311 = vmatpush1.bf16.msra.mxu0 %v3272
    %3312 = vmatprep.subr.bf16.mxu0 %v3271
    %3313 = vmatpush1.bf16.msra.mxu0 %v3270
    %3314 = vmatprep.subr.bf16.mxu0 %v3269
    %3315 = vmatpush1.bf16.msra.mxu0 %v3268
    %3316 = vmatprep.subr.bf16.mxu0 0
    %3317 = vmatpush2.bf16.msra.mxu0 0
    %3318 = vmatprep.subr.bf16.mxu0 0
    %3319 = vmatpush2.bf16.msra.mxu0 0
    %3320 = vmatprep.subr.bf16.mxu0 0
    %3321 = vmatpush2.bf16.msra.mxu0 0
    %3322 = vmatprep.subr.bf16.mxu0 0
    %3323 = vmatpush2.bf16.msra.mxu0 0
    %3324 = vmatprep.subr.bf16.mxu0 0
    %3325 = vmatpush2.bf16.msra.mxu0 0
    %3326 = vmatprep.subr.bf16.mxu0 0
    %3327 = vmatpush2.bf16.msra.mxu0 0
    %3328 = vmatprep.subr.bf16.mxu0 0
    %3329 = vmatpush2.bf16.msra.mxu0 0
    %3330 = vmatprep.subr.bf16.mxu0 0
    %3331 = vmatpush2.bf16.msra.mxu0 0
    %3332 = vmatprep.mubr.bf16.mxu0 0
    %3333 = vmatmul.mubr.bf16.gmra.mxu0 %v3169
    %v3334 = vpop.f32.mrf.mxu0
    %v3335 = vadd.f32 0.0, %v3334
    %v3336 = vpop.f32.mrf.mxu0
    %v3337 = vadd.f32 0.0, %v3336
    %v3338 = vpop.f32.mrf.mxu0
    %v3339 = vadd.f32 0.0, %v3338
    %v3340 = vpop.f32.mrf.mxu0
    %v3341 = vadd.f32 0.0, %v3340
    %3342 = vmatprep.mubr.bf16.mxu0 0
    %3343 = vmatmul.mubr.bf16.gmra.mxu0 %v3177
    %v3344 = vpop.f32.mrf.mxu0
    %v3345 = vadd.f32 0.0, %v3344
    %v3346 = vpop.f32.mrf.mxu0
    %v3347 = vadd.f32 0.0, %v3346
    %v3348 = vpop.f32.mrf.mxu0
    %v3349 = vadd.f32 0.0, %v3348
    %v3350 = vpop.f32.mrf.mxu0
    %v3351 = vadd.f32 0.0, %v3350
    %3352 = vmatprep.mubr.bf16.mxu0 0
    %3353 = vmatmul.mubr.bf16.gmra.mxu0 %v3185
    %v3354 = vpop.f32.mrf.mxu0
    %v3355 = vadd.f32 0.0, %v3354
    %v3356 = vpop.f32.mrf.mxu0
    %v3357 = vadd.f32 0.0, %v3356
    %v3358 = vpop.f32.mrf.mxu0
    %v3359 = vadd.f32 0.0, %v3358
    %v3360 = vpop.f32.mrf.mxu0
    %v3361 = vadd.f32 0.0, %v3360
    %3362 = vmatprep.mubr.bf16.mxu0 0
    %3363 = vmatmul.mubr.bf16.gmra.mxu0 %v3193
    %v3364 = vpop.f32.mrf.mxu0
    %v3365 = vadd.f32 0.0, %v3364
    %v3366 = vpop.f32.mrf.mxu0
    %v3367 = vadd.f32 0.0, %v3366
    %v3368 = vpop.f32.mrf.mxu0
    %v3369 = vadd.f32 0.0, %v3368
    %v3370 = vpop.f32.mrf.mxu0
    %v3371 = vadd.f32 0.0, %v3370
    %3372 = vmatprep.mubr.bf16.mxu0 0
    %3373 = vmatmul.mubr.bf16.gmra.mxu0 %v3201
    %v3374 = vpop.f32.mrf.mxu0
    %v3375 = vadd.f32 0.0, %v3374
    %v3376 = vpop.f32.mrf.mxu0
    %v3377 = vadd.f32 0.0, %v3376
    %v3378 = vpop.f32.mrf.mxu0
    %v3379 = vadd.f32 0.0, %v3378
    %v3380 = vpop.f32.mrf.mxu0
    %v3381 = vadd.f32 0.0, %v3380
    %3382 = vmatprep.mubr.bf16.mxu0 0
    %3383 = vmatmul.mubr.bf16.gmra.mxu0 %v3209
    %v3384 = vpop.f32.mrf.mxu0
    %v3385 = vadd.f32 0.0, %v3384
    %v3386 = vpop.f32.mrf.mxu0
    %v3387 = vadd.f32 0.0, %v3386
    %v3388 = vpop.f32.mrf.mxu0
    %v3389 = vadd.f32 0.0, %v3388
    %v3390 = vpop.f32.mrf.mxu0
    %v3391 = vadd.f32 0.0, %v3390
    %3392 = vmatprep.mubr.bf16.mxu0 0
    %3393 = vmatmul.mubr.bf16.gmra.mxu0 %v3212
    %v3394 = vpop.f32.mrf.mxu0
    %v3395 = vadd.f32 0.0, %v3394
    %v3396 = vpop.f32.mrf.mxu0
    %v3397 = vadd.f32 0.0, %v3396
    %v3398 = vpop.f32.mrf.mxu0
    %v3399 = vadd.f32 0.0, %v3398
    %v3400 = vpop.f32.mrf.mxu0
    %v3401 = vadd.f32 0.0, %v3400
    %3402 = vdwg.mxu0
    %v3419 = vunpack.c.l.b16 %v3125
    %v3420 = vunpack.c.h.b16 %v3125
    %v3421 = vunpack.c.l.b16 %v3126
    %v3422 = vunpack.c.h.b16 %v3126
    %v3423 = vunpack.c.l.b16 %v3127
    %v3424 = vunpack.c.h.b16 %v3127
    %v3425 = vunpack.c.l.b16 %v3128
    %v3426 = vunpack.c.h.b16 %v3128
    %v3427 = vunpack.c.l.b16 %v3129
    %v3428 = vunpack.c.h.b16 %v3129
    %v3429 = vunpack.c.l.b16 %v3130
    %v3430 = vunpack.c.h.b16 %v3130
    %v3431 = vunpack.c.l.b16 %v3131
    %v3432 = vunpack.c.h.b16 %v3131
    %v3433 = vunpack.c.l.b16 %v3132
    %v3434 = vunpack.c.h.b16 %v3132
    %v3435 = vunpack.c.l.b16 %v3133
    %v3436 = vunpack.c.h.b16 %v3133
    %v3437 = vunpack.c.l.b16 %v3134
    %v3438 = vunpack.c.h.b16 %v3134
    %v3439 = vunpack.c.l.b16 %v3135
    %v3440 = vunpack.c.h.b16 %v3135
    %v3441 = vunpack.c.l.b16 %v3136
    %v3442 = vunpack.c.h.b16 %v3136
    %v3443 = vunpack.c.l.b16 %v3137
    %v3444 = vunpack.c.h.b16 %v3137
    %v3445 = vunpack.c.l.b16 %v3138
    %v3446 = vunpack.c.h.b16 %v3138
    %v3447 = vunpack.c.l.b16 %v3139
    %v3448 = vunpack.c.h.b16 %v3139
    %v3449 = vunpack.c.l.b16 %v3140
    %v3450 = vunpack.c.h.b16 %v3140
    %v3451 = vpack.c.b16 %v3421, %v3419
    %v3452 = vpack.c.b16 %v3422, %v3420
    %v3453 = vpack.c.b16 %v3425, %v3423
    %v3454 = vpack.c.b16 %v3426, %v3424
    %v3455 = vpack.c.b16 %v3429, %v3427
    %v3456 = vpack.c.b16 %v3430, %v3428
    %v3457 = vpack.c.b16 %v3433, %v3431
    %v3458 = vpack.c.b16 %v3434, %v3432
    %v3459 = vpack.c.b16 %v3437, %v3435
    %v3460 = vpack.c.b16 %v3438, %v3436
    %v3461 = vpack.c.b16 %v3441, %v3439
    %v3462 = vpack.c.b16 %v3442, %v3440
    %v3463 = vpack.c.b16 %v3445, %v3443
    %v3464 = vpack.c.b16 %v3446, %v3444
    %v3465 = vpack.c.b16 %v3449, %v3447
    %v3466 = vpack.c.b16 %v3450, %v3448
    %3483 = vmatprep.subr.bf16.mxu0 %v3466
    %3484 = vmatpush1.bf16.msra.mxu0 %v3465
    %3485 = vmatprep.subr.bf16.mxu0 %v3464
    %3486 = vmatpush1.bf16.msra.mxu0 %v3463
    %3487 = vmatprep.subr.bf16.mxu0 %v3462
    %3488 = vmatpush1.bf16.msra.mxu0 %v3461
    %3489 = vmatprep.subr.bf16.mxu0 %v3460
    %3490 = vmatpush1.bf16.msra.mxu0 %v3459
    %3491 = vmatprep.subr.bf16.mxu0 %v3458
    %3492 = vmatpush1.bf16.msra.mxu0 %v3457
    %3493 = vmatprep.subr.bf16.mxu0 %v3456
    %3494 = vmatpush1.bf16.msra.mxu0 %v3455
    %3495 = vmatprep.subr.bf16.mxu0 %v3454
    %3496 = vmatpush1.bf16.msra.mxu0 %v3453
    %3497 = vmatprep.subr.bf16.mxu0 %v3452
    %3498 = vmatpush1.bf16.msra.mxu0 %v3451
    %3499 = vmatprep.subr.bf16.mxu0 0
    %3500 = vmatpush2.bf16.msra.mxu0 0
    %3501 = vmatprep.subr.bf16.mxu0 0
    %3502 = vmatpush2.bf16.msra.mxu0 0
    %3503 = vmatprep.subr.bf16.mxu0 0
    %3504 = vmatpush2.bf16.msra.mxu0 0
    %3505 = vmatprep.subr.bf16.mxu0 0
    %3506 = vmatpush2.bf16.msra.mxu0 0
    %3507 = vmatprep.subr.bf16.mxu0 0
    %3508 = vmatpush2.bf16.msra.mxu0 0
    %3509 = vmatprep.subr.bf16.mxu0 0
    %3510 = vmatpush2.bf16.msra.mxu0 0
    %3511 = vmatprep.subr.bf16.mxu0 0
    %3512 = vmatpush2.bf16.msra.mxu0 0
    %3513 = vmatprep.subr.bf16.mxu0 0
    %3514 = vmatpush2.bf16.msra.mxu0 0
    %3515 = vmatprep.mubr.bf16.mxu0 0
    %3516 = vmatmul.mubr.bf16.gmra.mxu0 %v3118
    %v3517 = vpop.f32.mrf.mxu0
    %v3518 = vadd.f32 %v3335, %v3517
    %v3519 = vpop.f32.mrf.mxu0
    %v3520 = vadd.f32 %v3337, %v3519
    %v3521 = vpop.f32.mrf.mxu0
    %v3522 = vadd.f32 %v3339, %v3521
    %v3523 = vpop.f32.mrf.mxu0
    %v3524 = vadd.f32 %v3341, %v3523
    %3525 = vmatprep.mubr.bf16.mxu0 0
    %3526 = vmatmul.mubr.bf16.gmra.mxu0 %v3119
    %v3527 = vpop.f32.mrf.mxu0
    %v3528 = vadd.f32 %v3345, %v3527
    %v3529 = vpop.f32.mrf.mxu0
    %v3530 = vadd.f32 %v3347, %v3529
    %v3531 = vpop.f32.mrf.mxu0
    %v3532 = vadd.f32 %v3349, %v3531
    %v3533 = vpop.f32.mrf.mxu0
    %v3534 = vadd.f32 %v3351, %v3533
    %3535 = vmatprep.mubr.bf16.mxu0 0
    %3536 = vmatmul.mubr.bf16.gmra.mxu0 %v3120
    %v3537 = vpop.f32.mrf.mxu0
    %v3538 = vadd.f32 %v3355, %v3537
    %v3539 = vpop.f32.mrf.mxu0
    %v3540 = vadd.f32 %v3357, %v3539
    %v3541 = vpop.f32.mrf.mxu0
    %v3542 = vadd.f32 %v3359, %v3541
    %v3543 = vpop.f32.mrf.mxu0
    %v3544 = vadd.f32 %v3361, %v3543
    %3545 = vmatprep.mubr.bf16.mxu0 0
    %3546 = vmatmul.mubr.bf16.gmra.mxu0 %v3121
    %v3547 = vpop.f32.mrf.mxu0
    %v3548 = vadd.f32 %v3365, %v3547
    %v3549 = vpop.f32.mrf.mxu0
    %v3550 = vadd.f32 %v3367, %v3549
    %v3551 = vpop.f32.mrf.mxu0
    %v3552 = vadd.f32 %v3369, %v3551
    %v3553 = vpop.f32.mrf.mxu0
    %v3554 = vadd.f32 %v3371, %v3553
    %3555 = vmatprep.mubr.bf16.mxu0 0
    %3556 = vmatmul.mubr.bf16.gmra.mxu0 %v3122
    %v3557 = vpop.f32.mrf.mxu0
    %v3558 = vadd.f32 %v3375, %v3557
    %v3559 = vpop.f32.mrf.mxu0
    %v3560 = vadd.f32 %v3377, %v3559
    %v3561 = vpop.f32.mrf.mxu0
    %v3562 = vadd.f32 %v3379, %v3561
    %v3563 = vpop.f32.mrf.mxu0
    %v3564 = vadd.f32 %v3381, %v3563
    %3565 = vmatprep.mubr.bf16.mxu0 0
    %3566 = vmatmul.mubr.bf16.gmra.mxu0 %v3123
    %v3567 = vpop.f32.mrf.mxu0
    %v3568 = vadd.f32 %v3385, %v3567
    %v3569 = vpop.f32.mrf.mxu0
    %v3570 = vadd.f32 %v3387, %v3569
    %v3571 = vpop.f32.mrf.mxu0
    %v3572 = vadd.f32 %v3389, %v3571
    %v3573 = vpop.f32.mrf.mxu0
    %v3574 = vadd.f32 %v3391, %v3573
    %3575 = vmatprep.mubr.bf16.mxu0 0
    %3576 = vmatmul.mubr.bf16.gmra.mxu0 %v3124
    %v3577 = vpop.f32.mrf.mxu0
    %v3578 = vadd.f32 %v3395, %v3577
    %v3579 = vpop.f32.mrf.mxu0
    %v3580 = vadd.f32 %v3397, %v3579
    %v3581 = vpop.f32.mrf.mxu0
    %v3582 = vadd.f32 %v3399, %v3581
    %v3583 = vpop.f32.mrf.mxu0
    %v3584 = vadd.f32 %v3401, %v3583
    %3585 = vdwg.mxu0
    %s3586 = scalar_lea.vmem [#allocation11], 256
    %v3587 = vld [vmem:[%s3586] sm:$0xff]
    %v3588 = vld [vmem:[%s3586 + $0x8] sm:$0xff]
    %v3589 = vld [vmem:[%s3586 + $0x10] sm:$0xff]
    %v3590 = vld [vmem:[%s3586 + $0x18] sm:$0xff]
    %v3591 = vld [vmem:[%s3586 + $0x20] sm:$0xff]
    %v3592 = vld [vmem:[%s3586 + $0x28] sm:$0xff]
    %v3593 = vld [vmem:[%s3586 + $0x30] sm:$0xff]
    %v3594 = vld [vmem:[%s3586 + $0x38] sm:$0xff]
    %v3595 = vld [vmem:[%s3586 + $0x40] sm:$0xff]
    %v3596 = vld [vmem:[%s3586 + $0x48] sm:$0xff]
    %v3597 = vld [vmem:[%s3586 + $0x50] sm:$0xff]
    %v3598 = vld [vmem:[%s3586 + $0x58] sm:$0xff]
    %v3599 = vld [vmem:[%s3586 + $0x60] sm:$0xff]
    %v3600 = vld [vmem:[%s3586 + $0x68] sm:$0xff]
    %v3601 = vld [vmem:[%s3586 + $0x70] sm:$0xff]
    %v3602 = vld [vmem:[%s3586 + $0x78] sm:$0xff]
    %v3610 = vrot.slane %v3118, 1
    %v3611 = vrot.slane %v3119, 1
    %v3612 = vsel %vm965, %v3610, %v3611
    %v3613 = vrot.slane %v3120, 1
    %v3614 = vsel %vm965, %v3611, %v3613
    %v3615 = vrot.slane %v3121, 1
    %v3616 = vsel %vm965, %v3613, %v3615
    %v3617 = vrot.slane %v3122, 1
    %v3618 = vsel %vm965, %v3615, %v3617
    %v3619 = vrot.slane %v3123, 1
    %v3620 = vsel %vm965, %v3617, %v3619
    %v3621 = vrot.slane %v3124, 1
    %v3622 = vsel %vm965, %v3619, %v3621
    %v3646 = vunpack.c.l.b16 %v3587
    %v3647 = vunpack.c.h.b16 %v3587
    %v3648 = vunpack.c.l.b16 %v3588
    %v3649 = vunpack.c.h.b16 %v3588
    %v3650 = vunpack.c.l.b16 %v3589
    %v3651 = vunpack.c.h.b16 %v3589
    %v3652 = vunpack.c.l.b16 %v3590
    %v3653 = vunpack.c.h.b16 %v3590
    %v3654 = vunpack.c.l.b16 %v3591
    %v3655 = vunpack.c.h.b16 %v3591
    %v3656 = vunpack.c.l.b16 %v3592
    %v3657 = vunpack.c.h.b16 %v3592
    %v3658 = vunpack.c.l.b16 %v3593
    %v3659 = vunpack.c.h.b16 %v3593
    %v3660 = vunpack.c.l.b16 %v3594
    %v3661 = vunpack.c.h.b16 %v3594
    %v3662 = vunpack.c.l.b16 %v3595
    %v3663 = vunpack.c.h.b16 %v3595
    %v3664 = vunpack.c.l.b16 %v3596
    %v3665 = vunpack.c.h.b16 %v3596
    %v3666 = vunpack.c.l.b16 %v3597
    %v3667 = vunpack.c.h.b16 %v3597
    %v3668 = vunpack.c.l.b16 %v3598
    %v3669 = vunpack.c.h.b16 %v3598
    %v3670 = vunpack.c.l.b16 %v3599
    %v3671 = vunpack.c.h.b16 %v3599
    %v3672 = vunpack.c.l.b16 %v3600
    %v3673 = vunpack.c.h.b16 %v3600
    %v3674 = vunpack.c.l.b16 %v3601
    %v3675 = vunpack.c.h.b16 %v3601
    %v3676 = vunpack.c.l.b16 %v3602
    %v3677 = vunpack.c.h.b16 %v3602
    %v3678 = vpack.c.b16 %v3648, %v3646
    %v3679 = vpack.c.b16 %v3649, %v3647
    %v3680 = vpack.c.b16 %v3652, %v3650
    %v3681 = vpack.c.b16 %v3653, %v3651
    %v3682 = vpack.c.b16 %v3656, %v3654
    %v3683 = vpack.c.b16 %v3657, %v3655
    %v3684 = vpack.c.b16 %v3660, %v3658
    %v3685 = vpack.c.b16 %v3661, %v3659
    %v3686 = vpack.c.b16 %v3664, %v3662
    %v3687 = vpack.c.b16 %v3665, %v3663
    %v3688 = vpack.c.b16 %v3668, %v3666
    %v3689 = vpack.c.b16 %v3669, %v3667
    %v3690 = vpack.c.b16 %v3672, %v3670
    %v3691 = vpack.c.b16 %v3673, %v3671
    %v3692 = vpack.c.b16 %v3676, %v3674
    %v3693 = vpack.c.b16 %v3677, %v3675
    %3710 = vmatprep.subr.bf16.mxu0 %v3693
    %3711 = vmatpush1.bf16.msra.mxu0 %v3692
    %3712 = vmatprep.subr.bf16.mxu0 %v3691
    %3713 = vmatpush1.bf16.msra.mxu0 %v3690
    %3714 = vmatprep.subr.bf16.mxu0 %v3689
    %3715 = vmatpush1.bf16.msra.mxu0 %v3688
    %3716 = vmatprep.subr.bf16.mxu0 %v3687
    %3717 = vmatpush1.bf16.msra.mxu0 %v3686
    %3718 = vmatprep.subr.bf16.mxu0 %v3685
    %3719 = vmatpush1.bf16.msra.mxu0 %v3684
    %3720 = vmatprep.subr.bf16.mxu0 %v3683
    %3721 = vmatpush1.bf16.msra.mxu0 %v3682
    %3722 = vmatprep.subr.bf16.mxu0 %v3681
    %3723 = vmatpush1.bf16.msra.mxu0 %v3680
    %3724 = vmatprep.subr.bf16.mxu0 %v3679
    %3725 = vmatpush1.bf16.msra.mxu0 %v3678
    %3726 = vmatprep.subr.bf16.mxu0 0
    %3727 = vmatpush2.bf16.msra.mxu0 0
    %3728 = vmatprep.subr.bf16.mxu0 0
    %3729 = vmatpush2.bf16.msra.mxu0 0
    %3730 = vmatprep.subr.bf16.mxu0 0
    %3731 = vmatpush2.bf16.msra.mxu0 0
    %3732 = vmatprep.subr.bf16.mxu0 0
    %3733 = vmatpush2.bf16.msra.mxu0 0
    %3734 = vmatprep.subr.bf16.mxu0 0
    %3735 = vmatpush2.bf16.msra.mxu0 0
    %3736 = vmatprep.subr.bf16.mxu0 0
    %3737 = vmatpush2.bf16.msra.mxu0 0
    %3738 = vmatprep.subr.bf16.mxu0 0
    %3739 = vmatpush2.bf16.msra.mxu0 0
    %3740 = vmatprep.subr.bf16.mxu0 0
    %3741 = vmatpush2.bf16.msra.mxu0 0
    %3742 = vmatprep.mubr.bf16.mxu0 0
    %3743 = vmatmul.mubr.bf16.gmra.mxu0 %v3612
    %v3744 = vpop.f32.mrf.mxu0
    %v3745 = vadd.f32 0.0, %v3744
    %v3746 = vpop.f32.mrf.mxu0
    %v3747 = vadd.f32 0.0, %v3746
    %v3748 = vpop.f32.mrf.mxu0
    %v3749 = vadd.f32 0.0, %v3748
    %v3750 = vpop.f32.mrf.mxu0
    %v3751 = vadd.f32 0.0, %v3750
    %3752 = vmatprep.mubr.bf16.mxu0 0
    %3753 = vmatmul.mubr.bf16.gmra.mxu0 %v3614
    %v3754 = vpop.f32.mrf.mxu0
    %v3755 = vadd.f32 0.0, %v3754
    %v3756 = vpop.f32.mrf.mxu0
    %v3757 = vadd.f32 0.0, %v3756
    %v3758 = vpop.f32.mrf.mxu0
    %v3759 = vadd.f32 0.0, %v3758
    %v3760 = vpop.f32.mrf.mxu0
    %v3761 = vadd.f32 0.0, %v3760
    %3762 = vmatprep.mubr.bf16.mxu0 0
    %3763 = vmatmul.mubr.bf16.gmra.mxu0 %v3616
    %v3764 = vpop.f32.mrf.mxu0
    %v3765 = vadd.f32 0.0, %v3764
    %v3766 = vpop.f32.mrf.mxu0
    %v3767 = vadd.f32 0.0, %v3766
    %v3768 = vpop.f32.mrf.mxu0
    %v3769 = vadd.f32 0.0, %v3768
    %v3770 = vpop.f32.mrf.mxu0
    %v3771 = vadd.f32 0.0, %v3770
    %3772 = vmatprep.mubr.bf16.mxu0 0
    %3773 = vmatmul.mubr.bf16.gmra.mxu0 %v3618
    %v3774 = vpop.f32.mrf.mxu0
    %v3775 = vadd.f32 0.0, %v3774
    %v3776 = vpop.f32.mrf.mxu0
    %v3777 = vadd.f32 0.0, %v3776
    %v3778 = vpop.f32.mrf.mxu0
    %v3779 = vadd.f32 0.0, %v3778
    %v3780 = vpop.f32.mrf.mxu0
    %v3781 = vadd.f32 0.0, %v3780
    %3782 = vmatprep.mubr.bf16.mxu0 0
    %3783 = vmatmul.mubr.bf16.gmra.mxu0 %v3620
    %v3784 = vpop.f32.mrf.mxu0
    %v3785 = vadd.f32 0.0, %v3784
    %v3786 = vpop.f32.mrf.mxu0
    %v3787 = vadd.f32 0.0, %v3786
    %v3788 = vpop.f32.mrf.mxu0
    %v3789 = vadd.f32 0.0, %v3788
    %v3790 = vpop.f32.mrf.mxu0
    %v3791 = vadd.f32 0.0, %v3790
    %3792 = vmatprep.mubr.bf16.mxu0 0
    %3793 = vmatmul.mubr.bf16.gmra.mxu0 %v3622
    %v3794 = vpop.f32.mrf.mxu0
    %v3795 = vadd.f32 0.0, %v3794
    %v3796 = vpop.f32.mrf.mxu0
    %v3797 = vadd.f32 0.0, %v3796
    %v3798 = vpop.f32.mrf.mxu0
    %v3799 = vadd.f32 0.0, %v3798
    %v3800 = vpop.f32.mrf.mxu0
    %v3801 = vadd.f32 0.0, %v3800
    %3802 = vmatprep.mubr.bf16.mxu0 0
    %3803 = vmatmul.mubr.bf16.gmra.mxu0 %v3621
    %v3804 = vpop.f32.mrf.mxu0
    %v3805 = vadd.f32 0.0, %v3804
    %v3806 = vpop.f32.mrf.mxu0
    %v3807 = vadd.f32 0.0, %v3806
    %v3808 = vpop.f32.mrf.mxu0
    %v3809 = vadd.f32 0.0, %v3808
    %v3810 = vpop.f32.mrf.mxu0
    %v3811 = vadd.f32 0.0, %v3810
    %3812 = vdwg.mxu0
    %v3813 = vadd.f32 %v3518, %v3745
    %v3814 = vadd.f32 %v3520, %v3747
    %v3815 = vadd.f32 %v3522, %v3749
    %v3816 = vadd.f32 %v3524, %v3751
    %v3817 = vadd.f32 %v3528, %v3755
    %v3818 = vadd.f32 %v3530, %v3757
    %v3819 = vadd.f32 %v3532, %v3759
    %v3820 = vadd.f32 %v3534, %v3761
    %v3821 = vadd.f32 %v3538, %v3765
    %v3822 = vadd.f32 %v3540, %v3767
    %v3823 = vadd.f32 %v3542, %v3769
    %v3824 = vadd.f32 %v3544, %v3771
    %v3825 = vadd.f32 %v3548, %v3775
    %v3826 = vadd.f32 %v3550, %v3777
    %v3827 = vadd.f32 %v3552, %v3779
    %v3828 = vadd.f32 %v3554, %v3781
    %v3829 = vadd.f32 %v3558, %v3785
    %v3830 = vadd.f32 %v3560, %v3787
    %v3831 = vadd.f32 %v3562, %v3789
    %v3832 = vadd.f32 %v3564, %v3791
    %v3833 = vadd.f32 %v3568, %v3795
    %v3834 = vadd.f32 %v3570, %v3797
    %v3835 = vadd.f32 %v3572, %v3799
    %v3836 = vadd.f32 %v3574, %v3801
    %v3837 = vadd.f32 %v3578, %v3805
    %v3838 = vadd.f32 %v3580, %v3807
    %v3839 = vadd.f32 %v3582, %v3809
    %v3840 = vadd.f32 %v3584, %v3811
    %s3841 = scalar_lea.vmem [#allocation11], 384
    %v3842 = vld [vmem:[%s3841] sm:$0xff]
    %v3843 = vld [vmem:[%s3841 + $0x8] sm:$0xff]
    %v3844 = vld [vmem:[%s3841 + $0x10] sm:$0xff]
    %v3845 = vld [vmem:[%s3841 + $0x18] sm:$0xff]
    %v3846 = vld [vmem:[%s3841 + $0x20] sm:$0xff]
    %v3847 = vld [vmem:[%s3841 + $0x28] sm:$0xff]
    %v3848 = vld [vmem:[%s3841 + $0x30] sm:$0xff]
    %v3849 = vld [vmem:[%s3841 + $0x38] sm:$0xff]
    %v3850 = vld [vmem:[%s3841 + $0x40] sm:$0xff]
    %v3851 = vld [vmem:[%s3841 + $0x48] sm:$0xff]
    %v3852 = vld [vmem:[%s3841 + $0x50] sm:$0xff]
    %v3853 = vld [vmem:[%s3841 + $0x58] sm:$0xff]
    %v3854 = vld [vmem:[%s3841 + $0x60] sm:$0xff]
    %v3855 = vld [vmem:[%s3841 + $0x68] sm:$0xff]
    %v3856 = vld [vmem:[%s3841 + $0x70] sm:$0xff]
    %v3857 = vld [vmem:[%s3841 + $0x78] sm:$0xff]
    %v3858 = vrot.slane %v3159, 1
    %v3859 = vrot.slane %v3161, 2
    %v3860 = vor.u32 %v3858, %v3859
    %v3861 = vrot.slane %v3170, 1
    %v3862 = vrot.slane %v3166, 2
    %v3863 = vor.u32 %v3861, %v3862
    %v3864 = vsel %vm1327, %v3860, %v3863
    %v3865 = vrot.slane %v3178, 1
    %v3866 = vrot.slane %v3174, 2
    %v3867 = vor.u32 %v3865, %v3866
    %v3868 = vsel %vm1327, %v3863, %v3867
    %v3869 = vrot.slane %v3186, 1
    %v3870 = vrot.slane %v3182, 2
    %v3871 = vor.u32 %v3869, %v3870
    %v3872 = vsel %vm1327, %v3867, %v3871
    %v3873 = vrot.slane %v3194, 1
    %v3874 = vrot.slane %v3190, 2
    %v3875 = vor.u32 %v3873, %v3874
    %v3876 = vsel %vm1327, %v3871, %v3875
    %v3877 = vrot.slane %v3202, 1
    %v3878 = vrot.slane %v3198, 2
    %v3879 = vor.u32 %v3877, %v3878
    %v3880 = vsel %vm1327, %v3875, %v3879
    %v3881 = vrot.slane %v3210, 1
    %v3882 = vrot.slane %v3206, 2
    %v3883 = vor.u32 %v3881, %v3882
    %v3884 = vsel %vm1327, %v3879, %v3883
    %v3908 = vunpack.c.l.b16 %v3842
    %v3909 = vunpack.c.h.b16 %v3842
    %v3910 = vunpack.c.l.b16 %v3843
    %v3911 = vunpack.c.h.b16 %v3843
    %v3912 = vunpack.c.l.b16 %v3844
    %v3913 = vunpack.c.h.b16 %v3844
    %v3914 = vunpack.c.l.b16 %v3845
    %v3915 = vunpack.c.h.b16 %v3845
    %v3916 = vunpack.c.l.b16 %v3846
    %v3917 = vunpack.c.h.b16 %v3846
    %v3918 = vunpack.c.l.b16 %v3847
    %v3919 = vunpack.c.h.b16 %v3847
    %v3920 = vunpack.c.l.b16 %v3848
    %v3921 = vunpack.c.h.b16 %v3848
    %v3922 = vunpack.c.l.b16 %v3849
    %v3923 = vunpack.c.h.b16 %v3849
    %v3924 = vunpack.c.l.b16 %v3850
    %v3925 = vunpack.c.h.b16 %v3850
    %v3926 = vunpack.c.l.b16 %v3851
    %v3927 = vunpack.c.h.b16 %v3851
    %v3928 = vunpack.c.l.b16 %v3852
    %v3929 = vunpack.c.h.b16 %v3852
    %v3930 = vunpack.c.l.b16 %v3853
    %v3931 = vunpack.c.h.b16 %v3853
    %v3932 = vunpack.c.l.b16 %v3854
    %v3933 = vunpack.c.h.b16 %v3854
    %v3934 = vunpack.c.l.b16 %v3855
    %v3935 = vunpack.c.h.b16 %v3855
    %v3936 = vunpack.c.l.b16 %v3856
    %v3937 = vunpack.c.h.b16 %v3856
    %v3938 = vunpack.c.l.b16 %v3857
    %v3939 = vunpack.c.h.b16 %v3857
    %v3940 = vpack.c.b16 %v3910, %v3908
    %v3941 = vpack.c.b16 %v3911, %v3909
    %v3942 = vpack.c.b16 %v3914, %v3912
    %v3943 = vpack.c.b16 %v3915, %v3913
    %v3944 = vpack.c.b16 %v3918, %v3916
    %v3945 = vpack.c.b16 %v3919, %v3917
    %v3946 = vpack.c.b16 %v3922, %v3920
    %v3947 = vpack.c.b16 %v3923, %v3921
    %v3948 = vpack.c.b16 %v3926, %v3924
    %v3949 = vpack.c.b16 %v3927, %v3925
    %v3950 = vpack.c.b16 %v3930, %v3928
    %v3951 = vpack.c.b16 %v3931, %v3929
    %v3952 = vpack.c.b16 %v3934, %v3932
    %v3953 = vpack.c.b16 %v3935, %v3933
    %v3954 = vpack.c.b16 %v3938, %v3936
    %v3955 = vpack.c.b16 %v3939, %v3937
    %3972 = vmatprep.subr.bf16.mxu0 %v3955
    %3973 = vmatpush1.bf16.msra.mxu0 %v3954
    %3974 = vmatprep.subr.bf16.mxu0 %v3953
    %3975 = vmatpush1.bf16.msra.mxu0 %v3952
    %3976 = vmatprep.subr.bf16.mxu0 %v3951
    %3977 = vmatpush1.bf16.msra.mxu0 %v3950
    %3978 = vmatprep.subr.bf16.mxu0 %v3949
    %3979 = vmatpush1.bf16.msra.mxu0 %v3948
    %3980 = vmatprep.subr.bf16.mxu0 %v3947
    %3981 = vmatpush1.bf16.msra.mxu0 %v3946
    %3982 = vmatprep.subr.bf16.mxu0 %v3945
    %3983 = vmatpush1.bf16.msra.mxu0 %v3944
    %3984 = vmatprep.subr.bf16.mxu0 %v3943
    %3985 = vmatpush1.bf16.msra.mxu0 %v3942
    %3986 = vmatprep.subr.bf16.mxu0 %v3941
    %3987 = vmatpush1.bf16.msra.mxu0 %v3940
    %3988 = vmatprep.subr.bf16.mxu0 0
    %3989 = vmatpush2.bf16.msra.mxu0 0
    %3990 = vmatprep.subr.bf16.mxu0 0
    %3991 = vmatpush2.bf16.msra.mxu0 0
    %3992 = vmatprep.subr.bf16.mxu0 0
    %3993 = vmatpush2.bf16.msra.mxu0 0
    %3994 = vmatprep.subr.bf16.mxu0 0
    %3995 = vmatpush2.bf16.msra.mxu0 0
    %3996 = vmatprep.subr.bf16.mxu0 0
    %3997 = vmatpush2.bf16.msra.mxu0 0
    %3998 = vmatprep.subr.bf16.mxu0 0
    %3999 = vmatpush2.bf16.msra.mxu0 0
    %4000 = vmatprep.subr.bf16.mxu0 0
    %4001 = vmatpush2.bf16.msra.mxu0 0
    %4002 = vmatprep.subr.bf16.mxu0 0
    %4003 = vmatpush2.bf16.msra.mxu0 0
    %4004 = vmatprep.mubr.bf16.mxu0 0
    %4005 = vmatmul.mubr.bf16.gmra.mxu0 %v3864
    %v4006 = vpop.f32.mrf.mxu0
    %v4007 = vadd.f32 0.0, %v4006
    %v4008 = vpop.f32.mrf.mxu0
    %v4009 = vadd.f32 0.0, %v4008
    %v4010 = vpop.f32.mrf.mxu0
    %v4011 = vadd.f32 0.0, %v4010
    %v4012 = vpop.f32.mrf.mxu0
    %v4013 = vadd.f32 0.0, %v4012
    %4014 = vmatprep.mubr.bf16.mxu0 0
    %4015 = vmatmul.mubr.bf16.gmra.mxu0 %v3868
    %v4016 = vpop.f32.mrf.mxu0
    %v4017 = vadd.f32 0.0, %v4016
    %v4018 = vpop.f32.mrf.mxu0
    %v4019 = vadd.f32 0.0, %v4018
    %v4020 = vpop.f32.mrf.mxu0
    %v4021 = vadd.f32 0.0, %v4020
    %v4022 = vpop.f32.mrf.mxu0
    %v4023 = vadd.f32 0.0, %v4022
    %4024 = vmatprep.mubr.bf16.mxu0 0
    %4025 = vmatmul.mubr.bf16.gmra.mxu0 %v3872
    %v4026 = vpop.f32.mrf.mxu0
    %v4027 = vadd.f32 0.0, %v4026
    %v4028 = vpop.f32.mrf.mxu0
    %v4029 = vadd.f32 0.0, %v4028
    %v4030 = vpop.f32.mrf.mxu0
    %v4031 = vadd.f32 0.0, %v4030
    %v4032 = vpop.f32.mrf.mxu0
    %v4033 = vadd.f32 0.0, %v4032
    %4034 = vmatprep.mubr.bf16.mxu0 0
    %4035 = vmatmul.mubr.bf16.gmra.mxu0 %v3876
    %v4036 = vpop.f32.mrf.mxu0
    %v4037 = vadd.f32 0.0, %v4036
    %v4038 = vpop.f32.mrf.mxu0
    %v4039 = vadd.f32 0.0, %v4038
    %v4040 = vpop.f32.mrf.mxu0
    %v4041 = vadd.f32 0.0, %v4040
    %v4042 = vpop.f32.mrf.mxu0
    %v4043 = vadd.f32 0.0, %v4042
    %4044 = vmatprep.mubr.bf16.mxu0 0
    %4045 = vmatmul.mubr.bf16.gmra.mxu0 %v3880
    %v4046 = vpop.f32.mrf.mxu0
    %v4047 = vadd.f32 0.0, %v4046
    %v4048 = vpop.f32.mrf.mxu0
    %v4049 = vadd.f32 0.0, %v4048
    %v4050 = vpop.f32.mrf.mxu0
    %v4051 = vadd.f32 0.0, %v4050
    %v4052 = vpop.f32.mrf.mxu0
    %v4053 = vadd.f32 0.0, %v4052
    %4054 = vmatprep.mubr.bf16.mxu0 0
    %4055 = vmatmul.mubr.bf16.gmra.mxu0 %v3884
    %v4056 = vpop.f32.mrf.mxu0
    %v4057 = vadd.f32 0.0, %v4056
    %v4058 = vpop.f32.mrf.mxu0
    %v4059 = vadd.f32 0.0, %v4058
    %v4060 = vpop.f32.mrf.mxu0
    %v4061 = vadd.f32 0.0, %v4060
    %v4062 = vpop.f32.mrf.mxu0
    %v4063 = vadd.f32 0.0, %v4062
    %4064 = vmatprep.mubr.bf16.mxu0 0
    %4065 = vmatmul.mubr.bf16.gmra.mxu0 %v3883
    %v4066 = vpop.f32.mrf.mxu0
    %v4067 = vadd.f32 0.0, %v4066
    %v4068 = vpop.f32.mrf.mxu0
    %v4069 = vadd.f32 0.0, %v4068
    %v4070 = vpop.f32.mrf.mxu0
    %v4071 = vadd.f32 0.0, %v4070
    %v4072 = vpop.f32.mrf.mxu0
    %v4073 = vadd.f32 0.0, %v4072
    %4074 = vdwg.mxu0
    %v4075 = vadd.f32 %v3813, %v4007
    %v4076 = vadd.f32 %v3814, %v4009
    %v4077 = vadd.f32 %v3815, %v4011
    %v4078 = vadd.f32 %v3816, %v4013
    %v4079 = vadd.f32 %v3817, %v4017
    %v4080 = vadd.f32 %v3818, %v4019
    %v4081 = vadd.f32 %v3819, %v4021
    %v4082 = vadd.f32 %v3820, %v4023
    %v4083 = vadd.f32 %v3821, %v4027
    %v4084 = vadd.f32 %v3822, %v4029
    %v4085 = vadd.f32 %v3823, %v4031
    %v4086 = vadd.f32 %v3824, %v4033
    %v4087 = vadd.f32 %v3825, %v4037
    %v4088 = vadd.f32 %v3826, %v4039
    %v4089 = vadd.f32 %v3827, %v4041
    %v4090 = vadd.f32 %v3828, %v4043
    %v4091 = vadd.f32 %v3829, %v4047
    %v4092 = vadd.f32 %v3830, %v4049
    %v4093 = vadd.f32 %v3831, %v4051
    %v4094 = vadd.f32 %v3832, %v4053
    %v4095 = vadd.f32 %v3833, %v4057
    %v4096 = vadd.f32 %v3834, %v4059
    %v4097 = vadd.f32 %v3835, %v4061
    %v4098 = vadd.f32 %v3836, %v4063
    %v4099 = vadd.f32 %v3837, %v4067
    %v4100 = vadd.f32 %v3838, %v4069
    %v4101 = vadd.f32 %v3839, %v4071
    %v4102 = vadd.f32 %v3840, %v4073
    %s4103 = scalar_lea.vmem [#allocation11], 512
    %v4104 = vld [vmem:[%s4103] sm:$0xff]
    %v4105 = vld [vmem:[%s4103 + $0x8] sm:$0xff]
    %v4106 = vld [vmem:[%s4103 + $0x10] sm:$0xff]
    %v4107 = vld [vmem:[%s4103 + $0x18] sm:$0xff]
    %v4108 = vld [vmem:[%s4103 + $0x20] sm:$0xff]
    %v4109 = vld [vmem:[%s4103 + $0x28] sm:$0xff]
    %v4110 = vld [vmem:[%s4103 + $0x30] sm:$0xff]
    %v4111 = vld [vmem:[%s4103 + $0x38] sm:$0xff]
    %v4112 = vld [vmem:[%s4103 + $0x40] sm:$0xff]
    %v4113 = vld [vmem:[%s4103 + $0x48] sm:$0xff]
    %v4114 = vld [vmem:[%s4103 + $0x50] sm:$0xff]
    %v4115 = vld [vmem:[%s4103 + $0x58] sm:$0xff]
    %v4116 = vld [vmem:[%s4103 + $0x60] sm:$0xff]
    %v4117 = vld [vmem:[%s4103 + $0x68] sm:$0xff]
    %v4118 = vld [vmem:[%s4103 + $0x70] sm:$0xff]
    %v4119 = vld [vmem:[%s4103 + $0x78] sm:$0xff]
    %v4120 = vrot.slane %v3118, 2
    %v4121 = vrot.slane %v3119, 2
    %v4122 = vsel %vm1721, %v4120, %v4121
    %v4123 = vrot.slane %v3120, 2
    %v4124 = vsel %vm1721, %v4121, %v4123
    %v4125 = vrot.slane %v3121, 2
    %v4126 = vsel %vm1721, %v4123, %v4125
    %v4127 = vrot.slane %v3122, 2
    %v4128 = vsel %vm1721, %v4125, %v4127
    %v4129 = vrot.slane %v3123, 2
    %v4130 = vsel %vm1721, %v4127, %v4129
    %v4131 = vrot.slane %v3124, 2
    %v4132 = vsel %vm1721, %v4129, %v4131
    %v4156 = vunpack.c.l.b16 %v4104
    %v4157 = vunpack.c.h.b16 %v4104
    %v4158 = vunpack.c.l.b16 %v4105
    %v4159 = vunpack.c.h.b16 %v4105
    %v4160 = vunpack.c.l.b16 %v4106
    %v4161 = vunpack.c.h.b16 %v4106
    %v4162 = vunpack.c.l.b16 %v4107
    %v4163 = vunpack.c.h.b16 %v4107
    %v4164 = vunpack.c.l.b16 %v4108
    %v4165 = vunpack.c.h.b16 %v4108
    %v4166 = vunpack.c.l.b16 %v4109
    %v4167 = vunpack.c.h.b16 %v4109
    %v4168 = vunpack.c.l.b16 %v4110
    %v4169 = vunpack.c.h.b16 %v4110
    %v4170 = vunpack.c.l.b16 %v4111
    %v4171 = vunpack.c.h.b16 %v4111
    %v4172 = vunpack.c.l.b16 %v4112
    %v4173 = vunpack.c.h.b16 %v4112
    %v4174 = vunpack.c.l.b16 %v4113
    %v4175 = vunpack.c.h.b16 %v4113
    %v4176 = vunpack.c.l.b16 %v4114
    %v4177 = vunpack.c.h.b16 %v4114
    %v4178 = vunpack.c.l.b16 %v4115
    %v4179 = vunpack.c.h.b16 %v4115
    %v4180 = vunpack.c.l.b16 %v4116
    %v4181 = vunpack.c.h.b16 %v4116
    %v4182 = vunpack.c.l.b16 %v4117
    %v4183 = vunpack.c.h.b16 %v4117
    %v4184 = vunpack.c.l.b16 %v4118
    %v4185 = vunpack.c.h.b16 %v4118
    %v4186 = vunpack.c.l.b16 %v4119
    %v4187 = vunpack.c.h.b16 %v4119
    %v4188 = vpack.c.b16 %v4158, %v4156
    %v4189 = vpack.c.b16 %v4159, %v4157
    %v4190 = vpack.c.b16 %v4162, %v4160
    %v4191 = vpack.c.b16 %v4163, %v4161
    %v4192 = vpack.c.b16 %v4166, %v4164
    %v4193 = vpack.c.b16 %v4167, %v4165
    %v4194 = vpack.c.b16 %v4170, %v4168
    %v4195 = vpack.c.b16 %v4171, %v4169
    %v4196 = vpack.c.b16 %v4174, %v4172
    %v4197 = vpack.c.b16 %v4175, %v4173
    %v4198 = vpack.c.b16 %v4178, %v4176
    %v4199 = vpack.c.b16 %v4179, %v4177
    %v4200 = vpack.c.b16 %v4182, %v4180
    %v4201 = vpack.c.b16 %v4183, %v4181
    %v4202 = vpack.c.b16 %v4186, %v4184
    %v4203 = vpack.c.b16 %v4187, %v4185
    %4220 = vmatprep.subr.bf16.mxu0 %v4203
    %4221 = vmatpush1.bf16.msra.mxu0 %v4202
    %4222 = vmatprep.subr.bf16.mxu0 %v4201
    %4223 = vmatpush1.bf16.msra.mxu0 %v4200
    %4224 = vmatprep.subr.bf16.mxu0 %v4199
    %4225 = vmatpush1.bf16.msra.mxu0 %v4198
    %4226 = vmatprep.subr.bf16.mxu0 %v4197
    %4227 = vmatpush1.bf16.msra.mxu0 %v4196
    %4228 = vmatprep.subr.bf16.mxu0 %v4195
    %4229 = vmatpush1.bf16.msra.mxu0 %v4194
    %4230 = vmatprep.subr.bf16.mxu0 %v4193
    %4231 = vmatpush1.bf16.msra.mxu0 %v4192
    %4232 = vmatprep.subr.bf16.mxu0 %v4191
    %4233 = vmatpush1.bf16.msra.mxu0 %v4190
    %4234 = vmatprep.subr.bf16.mxu0 %v4189
    %4235 = vmatpush1.bf16.msra.mxu0 %v4188
    %4236 = vmatprep.subr.bf16.mxu0 0
    %4237 = vmatpush2.bf16.msra.mxu0 0
    %4238 = vmatprep.subr.bf16.mxu0 0
    %4239 = vmatpush2.bf16.msra.mxu0 0
    %4240 = vmatprep.subr.bf16.mxu0 0
    %4241 = vmatpush2.bf16.msra.mxu0 0
    %4242 = vmatprep.subr.bf16.mxu0 0
    %4243 = vmatpush2.bf16.msra.mxu0 0
    %4244 = vmatprep.subr.bf16.mxu0 0
    %4245 = vmatpush2.bf16.msra.mxu0 0
    %4246 = vmatprep.subr.bf16.mxu0 0
    %4247 = vmatpush2.bf16.msra.mxu0 0
    %4248 = vmatprep.subr.bf16.mxu0 0
    %4249 = vmatpush2.bf16.msra.mxu0 0
    %4250 = vmatprep.subr.bf16.mxu0 0
    %4251 = vmatpush2.bf16.msra.mxu0 0
    %4252 = vmatprep.mubr.bf16.mxu0 0
    %4253 = vmatmul.mubr.bf16.gmra.mxu0 %v4122
    %v4254 = vpop.f32.mrf.mxu0
    %v4255 = vadd.f32 0.0, %v4254
    %v4256 = vpop.f32.mrf.mxu0
    %v4257 = vadd.f32 0.0, %v4256
    %v4258 = vpop.f32.mrf.mxu0
    %v4259 = vadd.f32 0.0, %v4258
    %v4260 = vpop.f32.mrf.mxu0
    %v4261 = vadd.f32 0.0, %v4260
    %4262 = vmatprep.mubr.bf16.mxu0 0
    %4263 = vmatmul.mubr.bf16.gmra.mxu0 %v4124
    %v4264 = vpop.f32.mrf.mxu0
    %v4265 = vadd.f32 0.0, %v4264
    %v4266 = vpop.f32.mrf.mxu0
    %v4267 = vadd.f32 0.0, %v4266
    %v4268 = vpop.f32.mrf.mxu0
    %v4269 = vadd.f32 0.0, %v4268
    %v4270 = vpop.f32.mrf.mxu0
    %v4271 = vadd.f32 0.0, %v4270
    %4272 = vmatprep.mubr.bf16.mxu0 0
    %4273 = vmatmul.mubr.bf16.gmra.mxu0 %v4126
    %v4274 = vpop.f32.mrf.mxu0
    %v4275 = vadd.f32 0.0, %v4274
    %v4276 = vpop.f32.mrf.mxu0
    %v4277 = vadd.f32 0.0, %v4276
    %v4278 = vpop.f32.mrf.mxu0
    %v4279 = vadd.f32 0.0, %v4278
    %v4280 = vpop.f32.mrf.mxu0
    %v4281 = vadd.f32 0.0, %v4280
    %4282 = vmatprep.mubr.bf16.mxu0 0
    %4283 = vmatmul.mubr.bf16.gmra.mxu0 %v4128
    %v4284 = vpop.f32.mrf.mxu0
    %v4285 = vadd.f32 0.0, %v4284
    %v4286 = vpop.f32.mrf.mxu0
    %v4287 = vadd.f32 0.0, %v4286
    %v4288 = vpop.f32.mrf.mxu0
    %v4289 = vadd.f32 0.0, %v4288
    %v4290 = vpop.f32.mrf.mxu0
    %v4291 = vadd.f32 0.0, %v4290
    %4292 = vmatprep.mubr.bf16.mxu0 0
    %4293 = vmatmul.mubr.bf16.gmra.mxu0 %v4130
    %v4294 = vpop.f32.mrf.mxu0
    %v4295 = vadd.f32 0.0, %v4294
    %v4296 = vpop.f32.mrf.mxu0
    %v4297 = vadd.f32 0.0, %v4296
    %v4298 = vpop.f32.mrf.mxu0
    %v4299 = vadd.f32 0.0, %v4298
    %v4300 = vpop.f32.mrf.mxu0
    %v4301 = vadd.f32 0.0, %v4300
    %4302 = vmatprep.mubr.bf16.mxu0 0
    %4303 = vmatmul.mubr.bf16.gmra.mxu0 %v4132
    %v4304 = vpop.f32.mrf.mxu0
    %v4305 = vadd.f32 0.0, %v4304
    %v4306 = vpop.f32.mrf.mxu0
    %v4307 = vadd.f32 0.0, %v4306
    %v4308 = vpop.f32.mrf.mxu0
    %v4309 = vadd.f32 0.0, %v4308
    %v4310 = vpop.f32.mrf.mxu0
    %v4311 = vadd.f32 0.0, %v4310
    %4312 = vmatprep.mubr.bf16.mxu0 0
    %4313 = vmatmul.mubr.bf16.gmra.mxu0 %v4131
    %v4314 = vpop.f32.mrf.mxu0
    %v4315 = vadd.f32 0.0, %v4314
    %v4316 = vpop.f32.mrf.mxu0
    %v4317 = vadd.f32 0.0, %v4316
    %v4318 = vpop.f32.mrf.mxu0
    %v4319 = vadd.f32 0.0, %v4318
    %v4320 = vpop.f32.mrf.mxu0
    %v4321 = vadd.f32 0.0, %v4320
    %4322 = vdwg.mxu0
    %v4323 = vadd.f32 %v4075, %v4255
    %v4324 = vadd.f32 %v4076, %v4257
    %v4325 = vadd.f32 %v4077, %v4259
    %v4326 = vadd.f32 %v4078, %v4261
    %v4327 = vadd.f32 %v4079, %v4265
    %v4328 = vadd.f32 %v4080, %v4267
    %v4329 = vadd.f32 %v4081, %v4269
    %v4330 = vadd.f32 %v4082, %v4271
    %v4331 = vadd.f32 %v4083, %v4275
    %v4332 = vadd.f32 %v4084, %v4277
    %v4333 = vadd.f32 %v4085, %v4279
    %v4334 = vadd.f32 %v4086, %v4281
    %v4335 = vadd.f32 %v4087, %v4285
    %v4336 = vadd.f32 %v4088, %v4287
    %v4337 = vadd.f32 %v4089, %v4289
    %v4338 = vadd.f32 %v4090, %v4291
    %v4339 = vadd.f32 %v4091, %v4295
    %v4340 = vadd.f32 %v4092, %v4297
    %v4341 = vadd.f32 %v4093, %v4299
    %v4342 = vadd.f32 %v4094, %v4301
    %v4343 = vadd.f32 %v4095, %v4305
    %v4344 = vadd.f32 %v4096, %v4307
    %v4345 = vadd.f32 %v4097, %v4309
    %v4346 = vadd.f32 %v4098, %v4311
    %v4347 = vadd.f32 %v4099, %v4315
    %v4348 = vadd.f32 %v4100, %v4317
    %v4349 = vadd.f32 %v4101, %v4319
    %v4350 = vadd.f32 %v4102, %v4321
    %v4351 = vld [vmem:[#allocation13] sm:$0x3]
    %v4353 = vlaneseq
    %v4354 = vshrl.u32 %v4353, 7
    %v4355 = vsub.s32 0, %v4354
    %v4356 = vrot.slane %v4351, %v4355
    %v4357 = vlaneseq
    %v4358 = vshrl.u32 %v4357, 7
    %v4359 = vsub.s32 1, %v4358
    %v4360 = vrot.slane %v4351, %v4359
    %v4363 = vadd.f32 %v4323, %v4356
    %v4364 = vadd.f32 %v4324, %v4360
    %v4365 = vadd.f32 %v4325, %v4356
    %v4366 = vadd.f32 %v4326, %v4360
    %v4367 = vadd.f32 %v4327, %v4356
    %v4368 = vadd.f32 %v4328, %v4360
    %v4369 = vadd.f32 %v4329, %v4356
    %v4370 = vadd.f32 %v4330, %v4360
    %v4371 = vadd.f32 %v4331, %v4356
    %v4372 = vadd.f32 %v4332, %v4360
    %v4373 = vadd.f32 %v4333, %v4356
    %v4374 = vadd.f32 %v4334, %v4360
    %v4375 = vadd.f32 %v4335, %v4356
    %v4376 = vadd.f32 %v4336, %v4360
    %v4377 = vadd.f32 %v4337, %v4356
    %v4378 = vadd.f32 %v4338, %v4360
    %v4379 = vadd.f32 %v4339, %v4356
    %v4380 = vadd.f32 %v4340, %v4360
    %v4381 = vadd.f32 %v4341, %v4356
    %v4382 = vadd.f32 %v4342, %v4360
    %v4383 = vadd.f32 %v4343, %v4356
    %v4384 = vadd.f32 %v4344, %v4360
    %v4385 = vadd.f32 %v4345, %v4356
    %v4386 = vadd.f32 %v4346, %v4360
    %v4387 = vadd.f32 %v4347, %v4356
    %v4388 = vadd.f32 %v4348, %v4360
    %v4389 = vadd.f32 %v4349, %v4356
    %v4390 = vadd.f32 %v4350, %v4360
    %v4391 = vmax.f32 %v4363, 0.0
    %v4392 = vmax.f32 %v4364, 0.0
    %v4393 = vmax.f32 %v4365, 0.0
    %v4394 = vmax.f32 %v4366, 0.0
    %v4395 = vmax.f32 %v4367, 0.0
    %v4396 = vmax.f32 %v4368, 0.0
    %v4397 = vmax.f32 %v4369, 0.0
    %v4398 = vmax.f32 %v4370, 0.0
    %v4399 = vmax.f32 %v4371, 0.0
    %v4400 = vmax.f32 %v4372, 0.0
    %v4401 = vmax.f32 %v4373, 0.0
    %v4402 = vmax.f32 %v4374, 0.0
    %v4403 = vmax.f32 %v4375, 0.0
    %v4404 = vmax.f32 %v4376, 0.0
    %v4405 = vmax.f32 %v4377, 0.0
    %v4406 = vmax.f32 %v4378, 0.0
    %v4407 = vmax.f32 %v4379, 0.0
    %v4408 = vmax.f32 %v4380, 0.0
    %v4409 = vmax.f32 %v4381, 0.0
    %v4410 = vmax.f32 %v4382, 0.0
    %v4411 = vmax.f32 %v4383, 0.0
    %v4412 = vmax.f32 %v4384, 0.0
    %v4413 = vmax.f32 %v4385, 0.0
    %v4414 = vmax.f32 %v4386, 0.0
    %v4415 = vmax.f32 %v4387, 0.0
    %v4416 = vmax.f32 %v4388, 0.0
    %v4417 = vmax.f32 %v4389, 0.0
    %v4418 = vmax.f32 %v4390, 0.0
    %v4419 = vpack.c.bf16 %v4393, %v4391
    %v4420 = vpack.c.bf16 %v4394, %v4392
    %v4421 = vpack.c.bf16 %v4397, %v4395
    %v4422 = vpack.c.bf16 %v4398, %v4396
    %v4423 = vpack.c.bf16 %v4401, %v4399
    %v4424 = vpack.c.bf16 %v4402, %v4400
    %v4425 = vpack.c.bf16 %v4405, %v4403
    %v4426 = vpack.c.bf16 %v4406, %v4404
    %v4427 = vpack.c.bf16 %v4409, %v4407
    %v4428 = vpack.c.bf16 %v4410, %v4408
    %v4429 = vpack.c.bf16 %v4413, %v4411
    %v4430 = vpack.c.bf16 %v4414, %v4412
    %v4431 = vpack.c.bf16 %v4417, %v4415
    %v4432 = vpack.c.bf16 %v4418, %v4416
    %v4433 = vld [vmem:[#allocation14] sm:$0xf]
    %v4434 = vld [vmem:[#allocation14 + $0x4] sm:$0xf]
    %v4435 = vld [vmem:[#allocation14 + $0x8] sm:$0xf]
    %v4436 = vld [vmem:[#allocation14 + $0xc] sm:$0xf]
    %v4437 = vld [vmem:[#allocation14 + $0x10] sm:$0xf]
    %v4438 = vld [vmem:[#allocation14 + $0x14] sm:$0xf]
    %v4439 = vld [vmem:[#allocation14 + $0x18] sm:$0xf]
    %v4440 = vld [vmem:[#allocation14 + $0x1c] sm:$0xf]
    %v4441 = vld [vmem:[#allocation14 + $0x20] sm:$0xf]
    %v4442 = vld [vmem:[#allocation14 + $0x24] sm:$0xf]
    %v4443 = vld [vmem:[#allocation14 + $0x28] sm:$0xf]
    %v4444 = vld [vmem:[#allocation14 + $0x2c] sm:$0xf]
    %v4445 = vld [vmem:[#allocation14 + $0x30] sm:$0xf]
    %v4446 = vld [vmem:[#allocation14 + $0x34] sm:$0xf]
    %v4447 = vld [vmem:[#allocation14 + $0x38] sm:$0xf]
    %v4448 = vld [vmem:[#allocation14 + $0x3c] sm:$0xf]
    %v4449 = vld [vmem:[#allocation14 + $0x40] sm:$0xf]
    %v4450 = vld [vmem:[#allocation14 + $0x44] sm:$0xf]
    %v4451 = vld [vmem:[#allocation14 + $0x48] sm:$0xf]
    %v4452 = vld [vmem:[#allocation14 + $0x4c] sm:$0xf]
    %v4453 = vld [vmem:[#allocation14 + $0x50] sm:$0xf]
    %v4454 = vld [vmem:[#allocation14 + $0x54] sm:$0xf]
    %v4455 = vld [vmem:[#allocation14 + $0x58] sm:$0xf]
    %v4456 = vld [vmem:[#allocation14 + $0x5c] sm:$0xf]
    %v4457 = vld [vmem:[#allocation14 + $0x60] sm:$0xf]
    %v4458 = vld [vmem:[#allocation14 + $0x64] sm:$0xf]
    %v4459 = vld [vmem:[#allocation14 + $0x68] sm:$0xf]
    %v4460 = vld [vmem:[#allocation14 + $0x6c] sm:$0xf]
    %v4461 = vld [vmem:[#allocation14 + $0x70] sm:$0xf]
    %v4462 = vld [vmem:[#allocation14 + $0x74] sm:$0xf]
    %v4463 = vld [vmem:[#allocation14 + $0x78] sm:$0xf]
    %v4464 = vld [vmem:[#allocation14 + $0x7c] sm:$0xf]
    %v4497 = vunpack.c.l.b16 %v4433
    %v4498 = vunpack.c.l.b16 %v4434
    %v4499 = vunpack.c.l.b16 %v4435
    %v4500 = vunpack.c.l.b16 %v4436
    %v4501 = vunpack.c.l.b16 %v4437
    %v4502 = vunpack.c.l.b16 %v4438
    %v4503 = vunpack.c.l.b16 %v4439
    %v4504 = vunpack.c.l.b16 %v4440
    %v4505 = vunpack.c.l.b16 %v4441
    %v4506 = vunpack.c.l.b16 %v4442
    %v4507 = vunpack.c.l.b16 %v4443
    %v4508 = vunpack.c.l.b16 %v4444
    %v4509 = vunpack.c.l.b16 %v4445
    %v4510 = vunpack.c.l.b16 %v4446
    %v4511 = vunpack.c.l.b16 %v4447
    %v4512 = vunpack.c.l.b16 %v4448
    %v4513 = vunpack.c.l.b16 %v4449
    %v4514 = vunpack.c.l.b16 %v4450
    %v4515 = vunpack.c.l.b16 %v4451
    %v4516 = vunpack.c.l.b16 %v4452
    %v4517 = vunpack.c.l.b16 %v4453
    %v4518 = vunpack.c.l.b16 %v4454
    %v4519 = vunpack.c.l.b16 %v4455
    %v4520 = vunpack.c.l.b16 %v4456
    %v4521 = vunpack.c.l.b16 %v4457
    %v4522 = vunpack.c.l.b16 %v4458
    %v4523 = vunpack.c.l.b16 %v4459
    %v4524 = vunpack.c.l.b16 %v4460
    %v4525 = vunpack.c.l.b16 %v4461
    %v4526 = vunpack.c.l.b16 %v4462
    %v4527 = vunpack.c.l.b16 %v4463
    %v4528 = vunpack.c.l.b16 %v4464
    %v4529 = vpack.c.b16 %v4498, %v4497
    %v4530 = vpack.c.b16 %v4500, %v4499
    %v4531 = vpack.c.b16 %v4502, %v4501
    %v4532 = vpack.c.b16 %v4504, %v4503
    %v4533 = vpack.c.b16 %v4506, %v4505
    %v4534 = vpack.c.b16 %v4508, %v4507
    %v4535 = vpack.c.b16 %v4510, %v4509
    %v4536 = vpack.c.b16 %v4512, %v4511
    %v4537 = vpack.c.b16 %v4514, %v4513
    %v4538 = vpack.c.b16 %v4516, %v4515
    %v4539 = vpack.c.b16 %v4518, %v4517
    %v4540 = vpack.c.b16 %v4520, %v4519
    %v4541 = vpack.c.b16 %v4522, %v4521
    %v4542 = vpack.c.b16 %v4524, %v4523
    %v4543 = vpack.c.b16 %v4526, %v4525
    %v4544 = vpack.c.b16 %v4528, %v4527
    %4561 = vmatprep.subr.bf16.mxu0 0
    %4562 = vmatpush1.bf16.msra.mxu0 %v4536
    %4563 = vmatprep.subr.bf16.mxu0 0
    %4564 = vmatpush1.bf16.msra.mxu0 %v4535
    %4565 = vmatprep.subr.bf16.mxu0 0
    %4566 = vmatpush1.bf16.msra.mxu0 %v4534
    %4567 = vmatprep.subr.bf16.mxu0 0
    %4568 = vmatpush1.bf16.msra.mxu0 %v4533
    %4569 = vmatprep.subr.bf16.mxu0 0
    %4570 = vmatpush1.bf16.msra.mxu0 %v4532
    %4571 = vmatprep.subr.bf16.mxu0 0
    %4572 = vmatpush1.bf16.msra.mxu0 %v4531
    %4573 = vmatprep.subr.bf16.mxu0 0
    %4574 = vmatpush1.bf16.msra.mxu0 %v4530
    %4575 = vmatprep.subr.bf16.mxu0 0
    %4576 = vmatpush1.bf16.msra.mxu0 %v4529
    %4577 = vmatprep.subr.bf16.mxu0 0
    %4578 = vmatpush2.bf16.msra.mxu0 %v4544
    %4579 = vmatprep.subr.bf16.mxu0 0
    %4580 = vmatpush2.bf16.msra.mxu0 %v4543
    %4581 = vmatprep.subr.bf16.mxu0 0
    %4582 = vmatpush2.bf16.msra.mxu0 %v4542
    %4583 = vmatprep.subr.bf16.mxu0 0
    %4584 = vmatpush2.bf16.msra.mxu0 %v4541
    %4585 = vmatprep.subr.bf16.mxu0 0
    %4586 = vmatpush2.bf16.msra.mxu0 %v4540
    %4587 = vmatprep.subr.bf16.mxu0 0
    %4588 = vmatpush2.bf16.msra.mxu0 %v4539
    %4589 = vmatprep.subr.bf16.mxu0 0
    %4590 = vmatpush2.bf16.msra.mxu0 %v4538
    %4591 = vmatprep.subr.bf16.mxu0 0
    %4592 = vmatpush2.bf16.msra.mxu0 %v4537
    %4593 = vmatprep.mubr.bf16.mxu0 %v4420
    %4594 = vmatmul.mubr.bf16.gmra.mxu0 %v4419
    %v4595 = vpop.f32.mrf.mxu0
    %v4596 = vadd.f32 0.0, %v4595
    %v4597 = vpop.f32.mrf.mxu0
    %v4598 = vpop.f32.mrf.mxu0
    %v4599 = vadd.f32 0.0, %v4598
    %v4600 = vpop.f32.mrf.mxu0
    %4601 = vmatprep.mubr.bf16.mxu0 %v4422
    %4602 = vmatmul.mubr.bf16.gmra.mxu0 %v4421
    %v4603 = vpop.f32.mrf.mxu0
    %v4604 = vadd.f32 0.0, %v4603
    %v4605 = vpop.f32.mrf.mxu0
    %v4606 = vpop.f32.mrf.mxu0
    %v4607 = vadd.f32 0.0, %v4606
    %v4608 = vpop.f32.mrf.mxu0
    %4609 = vmatprep.mubr.bf16.mxu0 %v4424
    %4610 = vmatmul.mubr.bf16.gmra.mxu0 %v4423
    %v4611 = vpop.f32.mrf.mxu0
    %v4612 = vadd.f32 0.0, %v4611
    %v4613 = vpop.f32.mrf.mxu0
    %v4614 = vpop.f32.mrf.mxu0
    %v4615 = vadd.f32 0.0, %v4614
    %v4616 = vpop.f32.mrf.mxu0
    %4617 = vmatprep.mubr.bf16.mxu0 %v4426
    %4618 = vmatmul.mubr.bf16.gmra.mxu0 %v4425
    %v4619 = vpop.f32.mrf.mxu0
    %v4620 = vadd.f32 0.0, %v4619
    %v4621 = vpop.f32.mrf.mxu0
    %v4622 = vpop.f32.mrf.mxu0
    %v4623 = vadd.f32 0.0, %v4622
    %v4624 = vpop.f32.mrf.mxu0
    %4625 = vmatprep.mubr.bf16.mxu0 %v4428
    %4626 = vmatmul.mubr.bf16.gmra.mxu0 %v4427
    %v4627 = vpop.f32.mrf.mxu0
    %v4628 = vadd.f32 0.0, %v4627
    %v4629 = vpop.f32.mrf.mxu0
    %v4630 = vpop.f32.mrf.mxu0
    %v4631 = vadd.f32 0.0, %v4630
    %v4632 = vpop.f32.mrf.mxu0
    %4633 = vmatprep.mubr.bf16.mxu0 %v4430
    %4634 = vmatmul.mubr.bf16.gmra.mxu0 %v4429
    %v4635 = vpop.f32.mrf.mxu0
    %v4636 = vadd.f32 0.0, %v4635
    %v4637 = vpop.f32.mrf.mxu0
    %v4638 = vpop.f32.mrf.mxu0
    %v4639 = vadd.f32 0.0, %v4638
    %v4640 = vpop.f32.mrf.mxu0
    %4641 = vmatprep.mubr.bf16.mxu0 %v4432
    %4642 = vmatmul.mubr.bf16.gmra.mxu0 %v4431
    %v4643 = vpop.f32.mrf.mxu0
    %v4644 = vadd.f32 0.0, %v4643
    %v4645 = vpop.f32.mrf.mxu0
    %v4646 = vpop.f32.mrf.mxu0
    %v4647 = vadd.f32 0.0, %v4646
    %v4648 = vpop.f32.mrf.mxu0
    %4649 = vdwg.mxu0
    %v4650 = vpack.c.bf16 %v4599, %v4596
    %v4651 = vpack.c.bf16 %v4607, %v4604
    %v4652 = vpack.c.bf16 %v4615, %v4612
    %v4653 = vpack.c.bf16 %v4623, %v4620
    %v4654 = vpack.c.bf16 %v4631, %v4628
    %v4655 = vpack.c.bf16 %v4639, %v4636
    %v4656 = vpack.c.bf16 %v4647, %v4644
    %v4657 = vld [vmem:[%s9] sm:$0xf]
    %v4658 = vld [vmem:[%s9 + $0x4] sm:$0xf]
    %v4659 = vld [vmem:[%s9 + $0x8] sm:$0xf]
    %v4660 = vld [vmem:[%s9 + $0xc] sm:$0xf]
    %v4661 = vld [vmem:[%s9 + $0x10] sm:$0xf]
    %v4667 = vunpack.c.l.b16 %v4657
    %v4668 = vunpack.c.l.b16 %v4658
    %v4669 = vunpack.c.l.b16 %v4659
    %v4670 = vunpack.c.l.b16 %v4660
    %v4671 = vunpack.c.l.b16 %v4661
    %v4672 = vpack.c.b16 %v4668, %v4667
    %v4673 = vpack.c.b16 %v4670, %v4669
    %v4674 = vpack.c.b16 %v4671, %v4671
    %vm4675 = vcmask 883712
    %v4677 = vsel %vm4675, %v4672, 0
    %v4680 = vsel %vm4675, %v4673, 0
    %v4683 = vsel %vm4675, %v4674, 0
    %v4686 = vsel %vm2654, %v4656, 0
    %4688 = vmatprep.subr.bf16.mxu0 0
    %4689 = vmatpush1.bf16.msra.mxu0 0
    %4690 = vmatprep.subr.bf16.mxu0 0
    %4691 = vmatpush1.bf16.msra.mxu0 %v4686
    %4692 = vmatprep.subr.bf16.mxu0 0
    %4693 = vmatpush1.bf16.msra.mxu0 %v4655
    %4694 = vmatprep.subr.bf16.mxu0 0
    %4695 = vmatpush1.bf16.msra.mxu0 %v4654
    %4696 = vmatprep.subr.bf16.mxu0 0
    %4697 = vmatpush1.bf16.msra.mxu0 %v4653
    %4698 = vmatprep.subr.bf16.mxu0 0
    %4699 = vmatpush1.bf16.msra.mxu0 %v4652
    %4700 = vmatprep.subr.bf16.mxu0 0
    %4701 = vmatpush1.bf16.msra.mxu0 %v4651
    %4702 = vmatprep.subr.bf16.mxu0 0
    %4703 = vmatpush1.bf16.msra.mxu0 %v4650
    %4704 = vmatprep.subr.bf16.mxu0 0
    %4705 = vmatpush2.bf16.msra.mxu0 0
    %4706 = vmatprep.subr.bf16.mxu0 0
    %4707 = vmatpush2.bf16.msra.mxu0 0
    %4708 = vmatprep.subr.bf16.mxu0 0
    %4709 = vmatpush2.bf16.msra.mxu0 0
    %4710 = vmatprep.subr.bf16.mxu0 0
    %4711 = vmatpush2.bf16.msra.mxu0 0
    %4712 = vmatprep.subr.bf16.mxu0 0
    %4713 = vmatpush2.bf16.msra.mxu0 0
    %4714 = vmatprep.subr.bf16.mxu0 0
    %4715 = vmatpush2.bf16.msra.mxu0 0
    %4716 = vmatprep.subr.bf16.mxu0 0
    %4717 = vmatpush2.bf16.msra.mxu0 0
    %4718 = vmatprep.subr.bf16.mxu0 0
    %4719 = vmatpush2.bf16.msra.mxu0 0
    %4720 = vmatprep.mubr.bf16.mxu0 0
    %4721 = vmatmul.mubr.bf16.gmra.mxu0 %v4677
    %v4722 = vpop.f32.mrf.mxu0
    %v4723 = vadd.f32 0.0, %v4722
    %v4724 = vpop.f32.mrf.mxu0
    %v4725 = vpop.f32.mrf.mxu0
    %v4726 = vadd.f32 0.0, %v4725
    %v4727 = vpop.f32.mrf.mxu0
    %4728 = vmatprep.mubr.bf16.mxu0 0
    %4729 = vmatmul.mubr.bf16.gmra.mxu0 %v4680
    %v4730 = vpop.f32.mrf.mxu0
    %v4731 = vadd.f32 0.0, %v4730
    %v4732 = vpop.f32.mrf.mxu0
    %v4733 = vpop.f32.mrf.mxu0
    %v4734 = vadd.f32 0.0, %v4733
    %v4735 = vpop.f32.mrf.mxu0
    %4736 = vmatprep.mubr.bf16.mxu0 0
    %4737 = vmatmul.mubr.bf16.gmra.mxu0 %v4683
    %v4738 = vpop.f32.mrf.mxu0
    %v4739 = vadd.f32 0.0, %v4738
    %v4740 = vpop.f32.mrf.mxu0
    %v4741 = vpop.f32.mrf.mxu0
    %v4742 = vpop.f32.mrf.mxu0
    %4743 = vdwg.mxu0
    %v4744 = vld [vmem:[#allocation16] sm:$0xff]
    %v4745 = vld [vmem:[#allocation16 + $0x8] sm:$0xff]
    %v4746 = vld [vmem:[#allocation16 + $0x10] sm:$0xff]
    %v4747 = vld [vmem:[#allocation16 + $0x18] sm:$0xff]
    %v4748 = vld [vmem:[#allocation16 + $0x20] sm:$0xff]
    %v4749 = vld [vmem:[#allocation16 + $0x28] sm:$0xff]
    %v4750 = vld [vmem:[#allocation16 + $0x30] sm:$0xff]
    %v4751 = vld [vmem:[#allocation16 + $0x38] sm:$0xff]
    %v4752 = vld [vmem:[#allocation16 + $0x40] sm:$0xff]
    %v4753 = vld [vmem:[#allocation16 + $0x48] sm:$0xff]
    %v4754 = vld [vmem:[#allocation16 + $0x50] sm:$0xff]
    %v4755 = vld [vmem:[#allocation16 + $0x58] sm:$0xff]
    %v4756 = vld [vmem:[#allocation16 + $0x60] sm:$0xff]
    %v4757 = vld [vmem:[#allocation16 + $0x68] sm:$0xff]
    %v4758 = vld [vmem:[#allocation16 + $0x70] sm:$0xff]
    %v4759 = vld [vmem:[#allocation16 + $0x78] sm:$0xff]
    %4760 = vmatprep.subr.mxu0 0.0
    %4761 = vmatpush1.msra.mxu0 %v4759
    %4762 = vmatprep.subr.mxu0 0.0
    %4763 = vmatpush1.msra.mxu0 %v4758
    %4764 = vmatprep.subr.mxu0 0.0
    %4765 = vmatpush1.msra.mxu0 %v4757
    %4766 = vmatprep.subr.mxu0 0.0
    %4767 = vmatpush1.msra.mxu0 %v4756
    %4768 = vmatprep.subr.mxu0 0.0
    %4769 = vmatpush1.msra.mxu0 %v4755
    %4770 = vmatprep.subr.mxu0 0.0
    %4771 = vmatpush1.msra.mxu0 %v4754
    %4772 = vmatprep.subr.mxu0 0.0
    %4773 = vmatpush1.msra.mxu0 %v4753
    %4774 = vmatprep.subr.mxu0 0.0
    %4775 = vmatpush1.msra.mxu0 %v4752
    %4776 = vmatprep.subr.mxu0 0.0
    %4777 = vmatpush1.msra.mxu0 %v4751
    %4778 = vmatprep.subr.mxu0 0.0
    %4779 = vmatpush1.msra.mxu0 %v4750
    %4780 = vmatprep.subr.mxu0 0.0
    %4781 = vmatpush1.msra.mxu0 %v4749
    %4782 = vmatprep.subr.mxu0 0.0
    %4783 = vmatpush1.msra.mxu0 %v4748
    %4784 = vmatprep.subr.mxu0 0.0
    %4785 = vmatpush1.msra.mxu0 %v4747
    %4786 = vmatprep.subr.mxu0 0.0
    %4787 = vmatpush1.msra.mxu0 %v4746
    %4788 = vmatprep.subr.mxu0 0.0
    %4789 = vmatpush1.msra.mxu0 %v4745
    %4790 = vmatprep.subr.mxu0 0.0
    %4791 = vmatpush1.msra.mxu0 %v4744
    %4792 = vmatprep.subr.mxu0 0.0
    %4793 = vmatpush2.msra.mxu0 0.0
    %4794 = vmatprep.subr.mxu0 0.0
    %4795 = vmatpush2.msra.mxu0 0.0
    %4796 = vmatprep.subr.mxu0 0.0
    %4797 = vmatpush2.msra.mxu0 0.0
    %4798 = vmatprep.subr.mxu0 0.0
    %4799 = vmatpush2.msra.mxu0 0.0
    %4800 = vmatprep.subr.mxu0 0.0
    %4801 = vmatpush2.msra.mxu0 0.0
    %4802 = vmatprep.subr.mxu0 0.0
    %4803 = vmatpush2.msra.mxu0 0.0
    %4804 = vmatprep.subr.mxu0 0.0
    %4805 = vmatpush2.msra.mxu0 0.0
    %4806 = vmatprep.subr.mxu0 0.0
    %4807 = vmatpush2.msra.mxu0 0.0
    %4808 = vmatprep.subr.mxu0 0.0
    %4809 = vmatpush2.msra.mxu0 0.0
    %4810 = vmatprep.subr.mxu0 0.0
    %4811 = vmatpush2.msra.mxu0 0.0
    %4812 = vmatprep.subr.mxu0 0.0
    %4813 = vmatpush2.msra.mxu0 0.0
    %4814 = vmatprep.subr.mxu0 0.0
    %4815 = vmatpush2.msra.mxu0 0.0
    %4816 = vmatprep.subr.mxu0 0.0
    %4817 = vmatpush2.msra.mxu0 0.0
    %4818 = vmatprep.subr.mxu0 0.0
    %4819 = vmatpush2.msra.mxu0 0.0
    %4820 = vmatprep.subr.mxu0 0.0
    %4821 = vmatpush2.msra.mxu0 0.0
    %4822 = vmatprep.subr.mxu0 0.0
    %4823 = vmatpush2.msra.mxu0 0.0
    %4824 = vmatprep.mubr.f32.mxu0 0.0
    %4825 = vmatmul.mubr.f32.gmra.mxu0 %v4723
    %v4826 = vpop.f32.mrf.mxu0
    %v4827 = vadd.f32 0.0, %v4826
    %v4828 = vpop.f32.mrf.mxu0
    %4829 = vmatprep.mubr.f32.mxu0 0.0
    %4830 = vmatmul.mubr.f32.gmra.mxu0 %v4726
    %v4831 = vpop.f32.mrf.mxu0
    %v4832 = vadd.f32 0.0, %v4831
    %v4833 = vpop.f32.mrf.mxu0
    %4834 = vmatprep.mubr.f32.mxu0 0.0
    %4835 = vmatmul.mubr.f32.gmra.mxu0 %v4731
    %v4836 = vpop.f32.mrf.mxu0
    %v4837 = vadd.f32 0.0, %v4836
    %v4838 = vpop.f32.mrf.mxu0
    %4839 = vmatprep.mubr.f32.mxu0 0.0
    %4840 = vmatmul.mubr.f32.gmra.mxu0 %v4734
    %v4841 = vpop.f32.mrf.mxu0
    %v4842 = vadd.f32 0.0, %v4841
    %v4843 = vpop.f32.mrf.mxu0
    %4844 = vmatprep.mubr.f32.mxu0 0.0
    %4845 = vmatmul.mubr.f32.gmra.mxu0 %v4739
    %v4846 = vpop.f32.mrf.mxu0
    %v4847 = vadd.f32 0.0, %v4846
    %v4848 = vpop.f32.mrf.mxu0
    %4849 = vdwg.mxu0
    %v4850 = vadd.f32 %v4827, %v4832
    %v4851 = vadd.f32 %v4850, %v4837
    %v4852 = vadd.f32 %v4851, %v4842
    %v4853 = vadd.f32 %v4852, %v4847
    %v4854 = vrot.slane %v4853, 4
    %v4855 = vadd.f32 %v4853, %v4854
    %v4856 = vrot.slane %v4855, 2
    %v4857 = vadd.f32 %v4855, %v4856
    %v4858 = vrot.slane %v4857, 1
    %v4859 = vadd.f32 %v4857, %v4858
    %v4860 = vmul.f32 %v4723, %v4723
    %v4861 = vmul.f32 %v4726, %v4726
    %v4862 = vmul.f32 %v4731, %v4731
    %v4863 = vmul.f32 %v4734, %v4734
    %v4864 = vmul.f32 %v4739, %v4739
    %4865 = vmatprep.subr.mxu0 0.0
    %4866 = vmatpush1.msra.mxu0 %v4759
    %4867 = vmatprep.subr.mxu0 0.0
    %4868 = vmatpush1.msra.mxu0 %v4758
    %4869 = vmatprep.subr.mxu0 0.0
    %4870 = vmatpush1.msra.mxu0 %v4757
    %4871 = vmatprep.subr.mxu0 0.0
    %4872 = vmatpush1.msra.mxu0 %v4756
    %4873 = vmatprep.subr.mxu0 0.0
    %4874 = vmatpush1.msra.mxu0 %v4755
    %4875 = vmatprep.subr.mxu0 0.0
    %4876 = vmatpush1.msra.mxu0 %v4754
    %4877 = vmatprep.subr.mxu0 0.0
    %4878 = vmatpush1.msra.mxu0 %v4753
    %4879 = vmatprep.subr.mxu0 0.0
    %4880 = vmatpush1.msra.mxu0 %v4752
    %4881 = vmatprep.subr.mxu0 0.0
    %4882 = vmatpush1.msra.mxu0 %v4751
    %4883 = vmatprep.subr.mxu0 0.0
    %4884 = vmatpush1.msra.mxu0 %v4750
    %4885 = vmatprep.subr.mxu0 0.0
    %4886 = vmatpush1.msra.mxu0 %v4749
    %4887 = vmatprep.subr.mxu0 0.0
    %4888 = vmatpush1.msra.mxu0 %v4748
    %4889 = vmatprep.subr.mxu0 0.0
    %4890 = vmatpush1.msra.mxu0 %v4747
    %4891 = vmatprep.subr.mxu0 0.0
    %4892 = vmatpush1.msra.mxu0 %v4746
    %4893 = vmatprep.subr.mxu0 0.0
    %4894 = vmatpush1.msra.mxu0 %v4745
    %4895 = vmatprep.subr.mxu0 0.0
    %4896 = vmatpush1.msra.mxu0 %v4744
    %4897 = vmatprep.subr.mxu0 0.0
    %4898 = vmatpush2.msra.mxu0 0.0
    %4899 = vmatprep.subr.mxu0 0.0
    %4900 = vmatpush2.msra.mxu0 0.0
    %4901 = vmatprep.subr.mxu0 0.0
    %4902 = vmatpush2.msra.mxu0 0.0
    %4903 = vmatprep.subr.mxu0 0.0
    %4904 = vmatpush2.msra.mxu0 0.0
    %4905 = vmatprep.subr.mxu0 0.0
    %4906 = vmatpush2.msra.mxu0 0.0
    %4907 = vmatprep.subr.mxu0 0.0
    %4908 = vmatpush2.msra.mxu0 0.0
    %4909 = vmatprep.subr.mxu0 0.0
    %4910 = vmatpush2.msra.mxu0 0.0
    %4911 = vmatprep.subr.mxu0 0.0
    %4912 = vmatpush2.msra.mxu0 0.0
    %4913 = vmatprep.subr.mxu0 0.0
    %4914 = vmatpush2.msra.mxu0 0.0
    %4915 = vmatprep.subr.mxu0 0.0
    %4916 = vmatpush2.msra.mxu0 0.0
    %4917 = vmatprep.subr.mxu0 0.0
    %4918 = vmatpush2.msra.mxu0 0.0
    %4919 = vmatprep.subr.mxu0 0.0
    %4920 = vmatpush2.msra.mxu0 0.0
    %4921 = vmatprep.subr.mxu0 0.0
    %4922 = vmatpush2.msra.mxu0 0.0
    %4923 = vmatprep.subr.mxu0 0.0
    %4924 = vmatpush2.msra.mxu0 0.0
    %4925 = vmatprep.subr.mxu0 0.0
    %4926 = vmatpush2.msra.mxu0 0.0
    %4927 = vmatprep.subr.mxu0 0.0
    %4928 = vmatpush2.msra.mxu0 0.0
    %4929 = vmatprep.mubr.f32.mxu0 0.0
    %4930 = vmatmul.mubr.f32.gmra.mxu0 %v4860
    %v4931 = vpop.f32.mrf.mxu0
    %v4932 = vadd.f32 0.0, %v4931
    %v4933 = vpop.f32.mrf.mxu0
    %4934 = vmatprep.mubr.f32.mxu0 0.0
    %4935 = vmatmul.mubr.f32.gmra.mxu0 %v4861
    %v4936 = vpop.f32.mrf.mxu0
    %v4937 = vadd.f32 0.0, %v4936
    %v4938 = vpop.f32.mrf.mxu0
    %4939 = vmatprep.mubr.f32.mxu0 0.0
    %4940 = vmatmul.mubr.f32.gmra.mxu0 %v4862
    %v4941 = vpop.f32.mrf.mxu0
    %v4942 = vadd.f32 0.0, %v4941
    %v4943 = vpop.f32.mrf.mxu0
    %4944 = vmatprep.mubr.f32.mxu0 0.0
    %4945 = vmatmul.mubr.f32.gmra.mxu0 %v4863
    %v4946 = vpop.f32.mrf.mxu0
    %v4947 = vadd.f32 0.0, %v4946
    %v4948 = vpop.f32.mrf.mxu0
    %4949 = vmatprep.mubr.f32.mxu0 0.0
    %4950 = vmatmul.mubr.f32.gmra.mxu0 %v4864
    %v4951 = vpop.f32.mrf.mxu0
    %v4952 = vadd.f32 0.0, %v4951
    %v4953 = vpop.f32.mrf.mxu0
    %4954 = vdwg.mxu0
    %v4955 = vadd.f32 %v4932, %v4937
    %v4956 = vadd.f32 %v4955, %v4942
    %v4957 = vadd.f32 %v4956, %v4947
    %v4958 = vadd.f32 %v4957, %v4952
    %v4959 = vrot.slane %v4958, 4
    %v4960 = vadd.f32 %v4958, %v4959
    %v4961 = vrot.slane %v4960, 2
    %v4962 = vadd.f32 %v4960, %v4961
    %v4963 = vrot.slane %v4962, 1
    %v4964 = vadd.f32 %v4962, %v4963
    %v4965 = vmul.f32 %v4859, %v4859
    %v4966 = vsub.f32 %v4964, %v4965
    %v4967 = vmax.f32 %v4966, 0.0
    %v4968 = vsub.f32 %v4723, %v4859
    %v4969 = vsub.f32 %v4726, %v4859
    %v4970 = vsub.f32 %v4731, %v4859
    %v4971 = vsub.f32 %v4734, %v4859
    %v4972 = vsub.f32 %v4739, %v4859
    %v4973 = vadd.f32 %v4967, 1e-05
    %v4974 = vrsqrt.pop %v4973
    %v4975 = vmul.f32 %v4968, %v4974
    %v4976 = vmul.f32 %v4969, %v4974
    %v4977 = vmul.f32 %v4970, %v4974
    %v4978 = vmul.f32 %v4971, %v4974
    %v4979 = vmul.f32 %v4972, %v4974
    %v4980 = vpack.c.bf16 %v4976, %v4975
    %v4981 = vpack.c.bf16 %v4978, %v4977
    %v4982 = vpack.c.bf16 %v4979, %v4979
    %v4983 = vld [vmem:[%s11] sm:$0xf]
    %v4984 = vld [vmem:[%s11 + $0x4] sm:$0xf]
    %v4985 = vld [vmem:[%s11 + $0x8] sm:$0xf]
    %v4986 = vld [vmem:[%s11 + $0xc] sm:$0xf]
    %v4987 = vld [vmem:[%s11 + $0x10] sm:$0xf]
    %v4988 = vld [vmem:[%s11 + $0x14] sm:$0xf]
    %v4989 = vld [vmem:[%s11 + $0x18] sm:$0xf]
    %v4990 = vld [vmem:[%s11 + $0x1c] sm:$0xf]
    %v4991 = vld [vmem:[%s11 + $0x20] sm:$0xf]
    %v4992 = vld [vmem:[%s11 + $0x24] sm:$0xf]
    %v4993 = vld [vmem:[%s11 + $0x28] sm:$0xf]
    %v4994 = vld [vmem:[%s11 + $0x2c] sm:$0xf]
    %v4995 = vld [vmem:[%s11 + $0x30] sm:$0xf]
    %v4996 = vld [vmem:[%s11 + $0x34] sm:$0xf]
    %v4997 = vld [vmem:[%s11 + $0x38] sm:$0xf]
    %v4998 = vld [vmem:[%s11 + $0x3c] sm:$0xf]
    %s4999 = scalar_lea.vmem %s11, 64
    %v5000 = vld [vmem:[%s4999] sm:$0xf]
    %v5001 = vld [vmem:[%s4999 + $0x4] sm:$0xf]
    %v5002 = vld [vmem:[%s4999 + $0x8] sm:$0xf]
    %v5003 = vld [vmem:[%s4999 + $0xc] sm:$0xf]
    %v5004 = vld [vmem:[%s4999 + $0x10] sm:$0xf]
    %v5005 = vld [vmem:[%s4999 + $0x14] sm:$0xf]
    %v5006 = vld [vmem:[%s4999 + $0x18] sm:$0xf]
    %v5007 = vld [vmem:[%s4999 + $0x1c] sm:$0xf]
    %v5008 = vld [vmem:[%s4999 + $0x20] sm:$0xf]
    %v5009 = vld [vmem:[%s4999 + $0x24] sm:$0xf]
    %v5010 = vld [vmem:[%s4999 + $0x28] sm:$0xf]
    %v5011 = vld [vmem:[%s4999 + $0x2c] sm:$0xf]
    %v5012 = vld [vmem:[%s4999 + $0x30] sm:$0xf]
    %v5013 = vld [vmem:[%s4999 + $0x34] sm:$0xf]
    %v5014 = vld [vmem:[%s4999 + $0x38] sm:$0xf]
    %v5015 = vld [vmem:[%s4999 + $0x3c] sm:$0xf]
    %v5017 = vshrl.u32 %v4980, 16
    %v5019 = vshll.u32 %v4980, 16
    %v5021 = vrot.slane %v5019, 1
    %v5022 = vor.u32 %v5017, %v5021
    %v5024 = vshll.u32 %v4981, 16
    %v5026 = vrot.slane %v5024, 1
    %v5027 = vsel %vm325, %v5022, %v5026
    %v5028 = vshrl.u32 %v4981, 16
    %v5030 = vor.u32 %v5028, %v5026
    %v5032 = vshll.u32 %v4982, 16
    %v5034 = vrot.slane %v5032, 1
    %v5035 = vsel %vm325, %v5030, %v5034
    %v5036 = vshrl.u32 %v4982, 16
    %v5038 = vor.u32 %v5036, %v5034
    %v5058 = vunpack.c.l.b16 %v5000
    %v5059 = vunpack.c.l.b16 %v5001
    %v5060 = vunpack.c.l.b16 %v5002
    %v5061 = vunpack.c.l.b16 %v5003
    %v5062 = vunpack.c.l.b16 %v5004
    %v5063 = vunpack.c.l.b16 %v5005
    %v5064 = vunpack.c.l.b16 %v5006
    %v5065 = vunpack.c.l.b16 %v5007
    %v5066 = vunpack.c.l.b16 %v5008
    %v5067 = vunpack.c.l.b16 %v5009
    %v5068 = vunpack.c.l.b16 %v5010
    %v5069 = vunpack.c.l.b16 %v5011
    %v5070 = vunpack.c.l.b16 %v5012
    %v5071 = vunpack.c.l.b16 %v5013
    %v5072 = vunpack.c.l.b16 %v5014
    %v5073 = vunpack.c.l.b16 %v5015
    %v5074 = vpack.c.b16 %v5059, %v5058
    %v5075 = vpack.c.b16 %v5061, %v5060
    %v5076 = vpack.c.b16 %v5063, %v5062
    %v5077 = vpack.c.b16 %v5065, %v5064
    %v5078 = vpack.c.b16 %v5067, %v5066
    %v5079 = vpack.c.b16 %v5069, %v5068
    %v5080 = vpack.c.b16 %v5071, %v5070
    %v5081 = vpack.c.b16 %v5073, %v5072
    %5090 = vmatprep.subr.bf16.mxu0 0
    %5091 = vmatpush1.bf16.msra.mxu0 %v5081
    %5092 = vmatprep.subr.bf16.mxu0 0
    %5093 = vmatpush1.bf16.msra.mxu0 %v5080
    %5094 = vmatprep.subr.bf16.mxu0 0
    %5095 = vmatpush1.bf16.msra.mxu0 %v5079
    %5096 = vmatprep.subr.bf16.mxu0 0
    %5097 = vmatpush1.bf16.msra.mxu0 %v5078
    %5098 = vmatprep.subr.bf16.mxu0 0
    %5099 = vmatpush1.bf16.msra.mxu0 %v5077
    %5100 = vmatprep.subr.bf16.mxu0 0
    %5101 = vmatpush1.bf16.msra.mxu0 %v5076
    %5102 = vmatprep.subr.bf16.mxu0 0
    %5103 = vmatpush1.bf16.msra.mxu0 %v5075
    %5104 = vmatprep.subr.bf16.mxu0 0
    %5105 = vmatpush1.bf16.msra.mxu0 %v5074
    %5106 = vmatprep.subr.bf16.mxu0 0
    %5107 = vmatpush2.bf16.msra.mxu0 0
    %5108 = vmatprep.subr.bf16.mxu0 0
    %5109 = vmatpush2.bf16.msra.mxu0 0
    %5110 = vmatprep.subr.bf16.mxu0 0
    %5111 = vmatpush2.bf16.msra.mxu0 0
    %5112 = vmatprep.subr.bf16.mxu0 0
    %5113 = vmatpush2.bf16.msra.mxu0 0
    %5114 = vmatprep.subr.bf16.mxu0 0
    %5115 = vmatpush2.bf16.msra.mxu0 0
    %5116 = vmatprep.subr.bf16.mxu0 0
    %5117 = vmatpush2.bf16.msra.mxu0 0
    %5118 = vmatprep.subr.bf16.mxu0 0
    %5119 = vmatpush2.bf16.msra.mxu0 0
    %5120 = vmatprep.subr.bf16.mxu0 0
    %5121 = vmatpush2.bf16.msra.mxu0 0
    %5122 = vmatprep.mubr.bf16.mxu0 0
    %5123 = vmatmul.mubr.bf16.gmra.mxu0 %v5027
    %v5124 = vpop.f32.mrf.mxu0
    %v5125 = vadd.f32 0.0, %v5124
    %v5126 = vpop.f32.mrf.mxu0
    %v5127 = vpop.f32.mrf.mxu0
    %v5128 = vadd.f32 0.0, %v5127
    %v5129 = vpop.f32.mrf.mxu0
    %5130 = vmatprep.mubr.bf16.mxu0 0
    %5131 = vmatmul.mubr.bf16.gmra.mxu0 %v5035
    %v5132 = vpop.f32.mrf.mxu0
    %v5133 = vadd.f32 0.0, %v5132
    %v5134 = vpop.f32.mrf.mxu0
    %v5135 = vpop.f32.mrf.mxu0
    %v5136 = vadd.f32 0.0, %v5135
    %v5137 = vpop.f32.mrf.mxu0
    %5138 = vmatprep.mubr.bf16.mxu0 0
    %5139 = vmatmul.mubr.bf16.gmra.mxu0 %v5038
    %v5140 = vpop.f32.mrf.mxu0
    %v5141 = vadd.f32 0.0, %v5140
    %v5142 = vpop.f32.mrf.mxu0
    %v5143 = vpop.f32.mrf.mxu0
    %v5144 = vpop.f32.mrf.mxu0
    %5145 = vdwg.mxu0
    %v5162 = vunpack.c.l.b16 %v4983
    %v5163 = vunpack.c.l.b16 %v4984
    %v5164 = vunpack.c.l.b16 %v4985
    %v5165 = vunpack.c.l.b16 %v4986
    %v5166 = vunpack.c.l.b16 %v4987
    %v5167 = vunpack.c.l.b16 %v4988
    %v5168 = vunpack.c.l.b16 %v4989
    %v5169 = vunpack.c.l.b16 %v4990
    %v5170 = vunpack.c.l.b16 %v4991
    %v5171 = vunpack.c.l.b16 %v4992
    %v5172 = vunpack.c.l.b16 %v4993
    %v5173 = vunpack.c.l.b16 %v4994
    %v5174 = vunpack.c.l.b16 %v4995
    %v5175 = vunpack.c.l.b16 %v4996
    %v5176 = vunpack.c.l.b16 %v4997
    %v5177 = vunpack.c.l.b16 %v4998
    %v5178 = vpack.c.b16 %v5163, %v5162
    %v5179 = vpack.c.b16 %v5165, %v5164
    %v5180 = vpack.c.b16 %v5167, %v5166
    %v5181 = vpack.c.b16 %v5169, %v5168
    %v5182 = vpack.c.b16 %v5171, %v5170
    %v5183 = vpack.c.b16 %v5173, %v5172
    %v5184 = vpack.c.b16 %v5175, %v5174
    %v5185 = vpack.c.b16 %v5177, %v5176
    %5194 = vmatprep.subr.bf16.mxu0 0
    %5195 = vmatpush1.bf16.msra.mxu0 %v5185
    %5196 = vmatprep.subr.bf16.mxu0 0
    %5197 = vmatpush1.bf16.msra.mxu0 %v5184
    %5198 = vmatprep.subr.bf16.mxu0 0
    %5199 = vmatpush1.bf16.msra.mxu0 %v5183
    %5200 = vmatprep.subr.bf16.mxu0 0
    %5201 = vmatpush1.bf16.msra.mxu0 %v5182
    %5202 = vmatprep.subr.bf16.mxu0 0
    %5203 = vmatpush1.bf16.msra.mxu0 %v5181
    %5204 = vmatprep.subr.bf16.mxu0 0
    %5205 = vmatpush1.bf16.msra.mxu0 %v5180
    %5206 = vmatprep.subr.bf16.mxu0 0
    %5207 = vmatpush1.bf16.msra.mxu0 %v5179
    %5208 = vmatprep.subr.bf16.mxu0 0
    %5209 = vmatpush1.bf16.msra.mxu0 %v5178
    %5210 = vmatprep.subr.bf16.mxu0 0
    %5211 = vmatpush2.bf16.msra.mxu0 0
    %5212 = vmatprep.subr.bf16.mxu0 0
    %5213 = vmatpush2.bf16.msra.mxu0 0
    %5214 = vmatprep.subr.bf16.mxu0 0
    %5215 = vmatpush2.bf16.msra.mxu0 0
    %5216 = vmatprep.subr.bf16.mxu0 0
    %5217 = vmatpush2.bf16.msra.mxu0 0
    %5218 = vmatprep.subr.bf16.mxu0 0
    %5219 = vmatpush2.bf16.msra.mxu0 0
    %5220 = vmatprep.subr.bf16.mxu0 0
    %5221 = vmatpush2.bf16.msra.mxu0 0
    %5222 = vmatprep.subr.bf16.mxu0 0
    %5223 = vmatpush2.bf16.msra.mxu0 0
    %5224 = vmatprep.subr.bf16.mxu0 0
    %5225 = vmatpush2.bf16.msra.mxu0 0
    %5226 = vmatprep.mubr.bf16.mxu0 0
    %5227 = vmatmul.mubr.bf16.gmra.mxu0 %v4980
    %v5228 = vpop.f32.mrf.mxu0
    %v5229 = vadd.f32 %v5125, %v5228
    %v5230 = vpop.f32.mrf.mxu0
    %v5231 = vpop.f32.mrf.mxu0
    %v5232 = vadd.f32 %v5128, %v5231
    %v5233 = vpop.f32.mrf.mxu0
    %5234 = vmatprep.mubr.bf16.mxu0 0
    %5235 = vmatmul.mubr.bf16.gmra.mxu0 %v4981
    %v5236 = vpop.f32.mrf.mxu0
    %v5237 = vadd.f32 %v5133, %v5236
    %v5238 = vpop.f32.mrf.mxu0
    %v5239 = vpop.f32.mrf.mxu0
    %v5240 = vadd.f32 %v5136, %v5239
    %v5241 = vpop.f32.mrf.mxu0
    %5242 = vmatprep.mubr.bf16.mxu0 0
    %5243 = vmatmul.mubr.bf16.gmra.mxu0 %v4982
    %v5244 = vpop.f32.mrf.mxu0
    %v5245 = vadd.f32 %v5141, %v5244
    %v5246 = vpop.f32.mrf.mxu0
    %v5247 = vpop.f32.mrf.mxu0
    %v5248 = vpop.f32.mrf.mxu0
    %5249 = vdwg.mxu0
    %s5250 = scalar_lea.vmem %s11, 128
    %v5251 = vld [vmem:[%s5250] sm:$0xf]
    %v5252 = vld [vmem:[%s5250 + $0x4] sm:$0xf]
    %v5253 = vld [vmem:[%s5250 + $0x8] sm:$0xf]
    %v5254 = vld [vmem:[%s5250 + $0xc] sm:$0xf]
    %v5255 = vld [vmem:[%s5250 + $0x10] sm:$0xf]
    %v5256 = vld [vmem:[%s5250 + $0x14] sm:$0xf]
    %v5257 = vld [vmem:[%s5250 + $0x18] sm:$0xf]
    %v5258 = vld [vmem:[%s5250 + $0x1c] sm:$0xf]
    %v5259 = vld [vmem:[%s5250 + $0x20] sm:$0xf]
    %v5260 = vld [vmem:[%s5250 + $0x24] sm:$0xf]
    %v5261 = vld [vmem:[%s5250 + $0x28] sm:$0xf]
    %v5262 = vld [vmem:[%s5250 + $0x2c] sm:$0xf]
    %v5263 = vld [vmem:[%s5250 + $0x30] sm:$0xf]
    %v5264 = vld [vmem:[%s5250 + $0x34] sm:$0xf]
    %v5265 = vld [vmem:[%s5250 + $0x38] sm:$0xf]
    %v5266 = vld [vmem:[%s5250 + $0x3c] sm:$0xf]
    %v5270 = vrot.slane %v4980, 1
    %v5271 = vrot.slane %v4981, 1
    %v5272 = vsel %vm965, %v5270, %v5271
    %v5273 = vrot.slane %v4982, 1
    %v5274 = vsel %vm965, %v5271, %v5273
    %v5294 = vunpack.c.l.b16 %v5251
    %v5295 = vunpack.c.l.b16 %v5252
    %v5296 = vunpack.c.l.b16 %v5253
    %v5297 = vunpack.c.l.b16 %v5254
    %v5298 = vunpack.c.l.b16 %v5255
    %v5299 = vunpack.c.l.b16 %v5256
    %v5300 = vunpack.c.l.b16 %v5257
    %v5301 = vunpack.c.l.b16 %v5258
    %v5302 = vunpack.c.l.b16 %v5259
    %v5303 = vunpack.c.l.b16 %v5260
    %v5304 = vunpack.c.l.b16 %v5261
    %v5305 = vunpack.c.l.b16 %v5262
    %v5306 = vunpack.c.l.b16 %v5263
    %v5307 = vunpack.c.l.b16 %v5264
    %v5308 = vunpack.c.l.b16 %v5265
    %v5309 = vunpack.c.l.b16 %v5266
    %v5310 = vpack.c.b16 %v5295, %v5294
    %v5311 = vpack.c.b16 %v5297, %v5296
    %v5312 = vpack.c.b16 %v5299, %v5298
    %v5313 = vpack.c.b16 %v5301, %v5300
    %v5314 = vpack.c.b16 %v5303, %v5302
    %v5315 = vpack.c.b16 %v5305, %v5304
    %v5316 = vpack.c.b16 %v5307, %v5306
    %v5317 = vpack.c.b16 %v5309, %v5308
    %5326 = vmatprep.subr.bf16.mxu0 0
    %5327 = vmatpush1.bf16.msra.mxu0 %v5317
    %5328 = vmatprep.subr.bf16.mxu0 0
    %5329 = vmatpush1.bf16.msra.mxu0 %v5316
    %5330 = vmatprep.subr.bf16.mxu0 0
    %5331 = vmatpush1.bf16.msra.mxu0 %v5315
    %5332 = vmatprep.subr.bf16.mxu0 0
    %5333 = vmatpush1.bf16.msra.mxu0 %v5314
    %5334 = vmatprep.subr.bf16.mxu0 0
    %5335 = vmatpush1.bf16.msra.mxu0 %v5313
    %5336 = vmatprep.subr.bf16.mxu0 0
    %5337 = vmatpush1.bf16.msra.mxu0 %v5312
    %5338 = vmatprep.subr.bf16.mxu0 0
    %5339 = vmatpush1.bf16.msra.mxu0 %v5311
    %5340 = vmatprep.subr.bf16.mxu0 0
    %5341 = vmatpush1.bf16.msra.mxu0 %v5310
    %5342 = vmatprep.subr.bf16.mxu0 0
    %5343 = vmatpush2.bf16.msra.mxu0 0
    %5344 = vmatprep.subr.bf16.mxu0 0
    %5345 = vmatpush2.bf16.msra.mxu0 0
    %5346 = vmatprep.subr.bf16.mxu0 0
    %5347 = vmatpush2.bf16.msra.mxu0 0
    %5348 = vmatprep.subr.bf16.mxu0 0
    %5349 = vmatpush2.bf16.msra.mxu0 0
    %5350 = vmatprep.subr.bf16.mxu0 0
    %5351 = vmatpush2.bf16.msra.mxu0 0
    %5352 = vmatprep.subr.bf16.mxu0 0
    %5353 = vmatpush2.bf16.msra.mxu0 0
    %5354 = vmatprep.subr.bf16.mxu0 0
    %5355 = vmatpush2.bf16.msra.mxu0 0
    %5356 = vmatprep.subr.bf16.mxu0 0
    %5357 = vmatpush2.bf16.msra.mxu0 0
    %5358 = vmatprep.mubr.bf16.mxu0 0
    %5359 = vmatmul.mubr.bf16.gmra.mxu0 %v5272
    %v5360 = vpop.f32.mrf.mxu0
    %v5361 = vadd.f32 0.0, %v5360
    %v5362 = vpop.f32.mrf.mxu0
    %v5363 = vpop.f32.mrf.mxu0
    %v5364 = vadd.f32 0.0, %v5363
    %v5365 = vpop.f32.mrf.mxu0
    %5366 = vmatprep.mubr.bf16.mxu0 0
    %5367 = vmatmul.mubr.bf16.gmra.mxu0 %v5274
    %v5368 = vpop.f32.mrf.mxu0
    %v5369 = vadd.f32 0.0, %v5368
    %v5370 = vpop.f32.mrf.mxu0
    %v5371 = vpop.f32.mrf.mxu0
    %v5372 = vadd.f32 0.0, %v5371
    %v5373 = vpop.f32.mrf.mxu0
    %5374 = vmatprep.mubr.bf16.mxu0 0
    %5375 = vmatmul.mubr.bf16.gmra.mxu0 %v5273
    %v5376 = vpop.f32.mrf.mxu0
    %v5377 = vadd.f32 0.0, %v5376
    %v5378 = vpop.f32.mrf.mxu0
    %v5379 = vpop.f32.mrf.mxu0
    %v5380 = vpop.f32.mrf.mxu0
    %5381 = vdwg.mxu0
    %v5382 = vadd.f32 %v5229, %v5361
    %v5383 = vadd.f32 %v5232, %v5364
    %v5384 = vadd.f32 %v5237, %v5369
    %v5385 = vadd.f32 %v5240, %v5372
    %v5386 = vadd.f32 %v5245, %v5377
    %s5387 = scalar_lea.vmem %s11, 192
    %v5388 = vld [vmem:[%s5387] sm:$0xf]
    %v5389 = vld [vmem:[%s5387 + $0x4] sm:$0xf]
    %v5390 = vld [vmem:[%s5387 + $0x8] sm:$0xf]
    %v5391 = vld [vmem:[%s5387 + $0xc] sm:$0xf]
    %v5392 = vld [vmem:[%s5387 + $0x10] sm:$0xf]
    %v5393 = vld [vmem:[%s5387 + $0x14] sm:$0xf]
    %v5394 = vld [vmem:[%s5387 + $0x18] sm:$0xf]
    %v5395 = vld [vmem:[%s5387 + $0x1c] sm:$0xf]
    %v5396 = vld [vmem:[%s5387 + $0x20] sm:$0xf]
    %v5397 = vld [vmem:[%s5387 + $0x24] sm:$0xf]
    %v5398 = vld [vmem:[%s5387 + $0x28] sm:$0xf]
    %v5399 = vld [vmem:[%s5387 + $0x2c] sm:$0xf]
    %v5400 = vld [vmem:[%s5387 + $0x30] sm:$0xf]
    %v5401 = vld [vmem:[%s5387 + $0x34] sm:$0xf]
    %v5402 = vld [vmem:[%s5387 + $0x38] sm:$0xf]
    %v5403 = vld [vmem:[%s5387 + $0x3c] sm:$0xf]
    %v5404 = vrot.slane %v5017, 1
    %v5405 = vrot.slane %v5019, 2
    %v5406 = vor.u32 %v5404, %v5405
    %v5407 = vrot.slane %v5028, 1
    %v5408 = vrot.slane %v5024, 2
    %v5409 = vor.u32 %v5407, %v5408
    %v5410 = vsel %vm1327, %v5406, %v5409
    %v5411 = vrot.slane %v5036, 1
    %v5412 = vrot.slane %v5032, 2
    %v5413 = vor.u32 %v5411, %v5412
    %v5414 = vsel %vm1327, %v5409, %v5413
    %v5434 = vunpack.c.l.b16 %v5388
    %v5435 = vunpack.c.l.b16 %v5389
    %v5436 = vunpack.c.l.b16 %v5390
    %v5437 = vunpack.c.l.b16 %v5391
    %v5438 = vunpack.c.l.b16 %v5392
    %v5439 = vunpack.c.l.b16 %v5393
    %v5440 = vunpack.c.l.b16 %v5394
    %v5441 = vunpack.c.l.b16 %v5395
    %v5442 = vunpack.c.l.b16 %v5396
    %v5443 = vunpack.c.l.b16 %v5397
    %v5444 = vunpack.c.l.b16 %v5398
    %v5445 = vunpack.c.l.b16 %v5399
    %v5446 = vunpack.c.l.b16 %v5400
    %v5447 = vunpack.c.l.b16 %v5401
    %v5448 = vunpack.c.l.b16 %v5402
    %v5449 = vunpack.c.l.b16 %v5403
    %v5450 = vpack.c.b16 %v5435, %v5434
    %v5451 = vpack.c.b16 %v5437, %v5436
    %v5452 = vpack.c.b16 %v5439, %v5438
    %v5453 = vpack.c.b16 %v5441, %v5440
    %v5454 = vpack.c.b16 %v5443, %v5442
    %v5455 = vpack.c.b16 %v5445, %v5444
    %v5456 = vpack.c.b16 %v5447, %v5446
    %v5457 = vpack.c.b16 %v5449, %v5448
    %5466 = vmatprep.subr.bf16.mxu0 0
    %5467 = vmatpush1.bf16.msra.mxu0 %v5457
    %5468 = vmatprep.subr.bf16.mxu0 0
    %5469 = vmatpush1.bf16.msra.mxu0 %v5456
    %5470 = vmatprep.subr.bf16.mxu0 0
    %5471 = vmatpush1.bf16.msra.mxu0 %v5455
    %5472 = vmatprep.subr.bf16.mxu0 0
    %5473 = vmatpush1.bf16.msra.mxu0 %v5454
    %5474 = vmatprep.subr.bf16.mxu0 0
    %5475 = vmatpush1.bf16.msra.mxu0 %v5453
    %5476 = vmatprep.subr.bf16.mxu0 0
    %5477 = vmatpush1.bf16.msra.mxu0 %v5452
    %5478 = vmatprep.subr.bf16.mxu0 0
    %5479 = vmatpush1.bf16.msra.mxu0 %v5451
    %5480 = vmatprep.subr.bf16.mxu0 0
    %5481 = vmatpush1.bf16.msra.mxu0 %v5450
    %5482 = vmatprep.subr.bf16.mxu0 0
    %5483 = vmatpush2.bf16.msra.mxu0 0
    %5484 = vmatprep.subr.bf16.mxu0 0
    %5485 = vmatpush2.bf16.msra.mxu0 0
    %5486 = vmatprep.subr.bf16.mxu0 0
    %5487 = vmatpush2.bf16.msra.mxu0 0
    %5488 = vmatprep.subr.bf16.mxu0 0
    %5489 = vmatpush2.bf16.msra.mxu0 0
    %5490 = vmatprep.subr.bf16.mxu0 0
    %5491 = vmatpush2.bf16.msra.mxu0 0
    %5492 = vmatprep.subr.bf16.mxu0 0
    %5493 = vmatpush2.bf16.msra.mxu0 0
    %5494 = vmatprep.subr.bf16.mxu0 0
    %5495 = vmatpush2.bf16.msra.mxu0 0
    %5496 = vmatprep.subr.bf16.mxu0 0
    %5497 = vmatpush2.bf16.msra.mxu0 0
    %5498 = vmatprep.mubr.bf16.mxu0 0
    %5499 = vmatmul.mubr.bf16.gmra.mxu0 %v5410
    %v5500 = vpop.f32.mrf.mxu0
    %v5501 = vadd.f32 0.0, %v5500
    %v5502 = vpop.f32.mrf.mxu0
    %v5503 = vpop.f32.mrf.mxu0
    %v5504 = vadd.f32 0.0, %v5503
    %v5505 = vpop.f32.mrf.mxu0
    %5506 = vmatprep.mubr.bf16.mxu0 0
    %5507 = vmatmul.mubr.bf16.gmra.mxu0 %v5414
    %v5508 = vpop.f32.mrf.mxu0
    %v5509 = vadd.f32 0.0, %v5508
    %v5510 = vpop.f32.mrf.mxu0
    %v5511 = vpop.f32.mrf.mxu0
    %v5512 = vadd.f32 0.0, %v5511
    %v5513 = vpop.f32.mrf.mxu0
    %5514 = vmatprep.mubr.bf16.mxu0 0
    %5515 = vmatmul.mubr.bf16.gmra.mxu0 %v5413
    %v5516 = vpop.f32.mrf.mxu0
    %v5517 = vadd.f32 0.0, %v5516
    %v5518 = vpop.f32.mrf.mxu0
    %v5519 = vpop.f32.mrf.mxu0
    %v5520 = vpop.f32.mrf.mxu0
    %5521 = vdwg.mxu0
    %v5522 = vadd.f32 %v5382, %v5501
    %v5523 = vadd.f32 %v5383, %v5504
    %v5524 = vadd.f32 %v5384, %v5509
    %v5525 = vadd.f32 %v5385, %v5512
    %v5526 = vadd.f32 %v5386, %v5517
    %s5527 = scalar_lea.vmem %s11, 256
    %v5528 = vld [vmem:[%s5527] sm:$0xf]
    %v5529 = vld [vmem:[%s5527 + $0x4] sm:$0xf]
    %v5530 = vld [vmem:[%s5527 + $0x8] sm:$0xf]
    %v5531 = vld [vmem:[%s5527 + $0xc] sm:$0xf]
    %v5532 = vld [vmem:[%s5527 + $0x10] sm:$0xf]
    %v5533 = vld [vmem:[%s5527 + $0x14] sm:$0xf]
    %v5534 = vld [vmem:[%s5527 + $0x18] sm:$0xf]
    %v5535 = vld [vmem:[%s5527 + $0x1c] sm:$0xf]
    %v5536 = vld [vmem:[%s5527 + $0x20] sm:$0xf]
    %v5537 = vld [vmem:[%s5527 + $0x24] sm:$0xf]
    %v5538 = vld [vmem:[%s5527 + $0x28] sm:$0xf]
    %v5539 = vld [vmem:[%s5527 + $0x2c] sm:$0xf]
    %v5540 = vld [vmem:[%s5527 + $0x30] sm:$0xf]
    %v5541 = vld [vmem:[%s5527 + $0x34] sm:$0xf]
    %v5542 = vld [vmem:[%s5527 + $0x38] sm:$0xf]
    %v5543 = vld [vmem:[%s5527 + $0x3c] sm:$0xf]
    %v5544 = vrot.slane %v4980, 2
    %v5545 = vrot.slane %v4981, 2
    %v5546 = vsel %vm1721, %v5544, %v5545
    %v5547 = vrot.slane %v4982, 2
    %v5548 = vsel %vm1721, %v5545, %v5547
    %v5568 = vunpack.c.l.b16 %v5528
    %v5569 = vunpack.c.l.b16 %v5529
    %v5570 = vunpack.c.l.b16 %v5530
    %v5571 = vunpack.c.l.b16 %v5531
    %v5572 = vunpack.c.l.b16 %v5532
    %v5573 = vunpack.c.l.b16 %v5533
    %v5574 = vunpack.c.l.b16 %v5534
    %v5575 = vunpack.c.l.b16 %v5535
    %v5576 = vunpack.c.l.b16 %v5536
    %v5577 = vunpack.c.l.b16 %v5537
    %v5578 = vunpack.c.l.b16 %v5538
    %v5579 = vunpack.c.l.b16 %v5539
    %v5580 = vunpack.c.l.b16 %v5540
    %v5581 = vunpack.c.l.b16 %v5541
    %v5582 = vunpack.c.l.b16 %v5542
    %v5583 = vunpack.c.l.b16 %v5543
    %v5584 = vpack.c.b16 %v5569, %v5568
    %v5585 = vpack.c.b16 %v5571, %v5570
    %v5586 = vpack.c.b16 %v5573, %v5572
    %v5587 = vpack.c.b16 %v5575, %v5574
    %v5588 = vpack.c.b16 %v5577, %v5576
    %v5589 = vpack.c.b16 %v5579, %v5578
    %v5590 = vpack.c.b16 %v5581, %v5580
    %v5591 = vpack.c.b16 %v5583, %v5582
    %5600 = vmatprep.subr.bf16.mxu0 0
    %5601 = vmatpush1.bf16.msra.mxu0 %v5591
    %5602 = vmatprep.subr.bf16.mxu0 0
    %5603 = vmatpush1.bf16.msra.mxu0 %v5590
    %5604 = vmatprep.subr.bf16.mxu0 0
    %5605 = vmatpush1.bf16.msra.mxu0 %v5589
    %5606 = vmatprep.subr.bf16.mxu0 0
    %5607 = vmatpush1.bf16.msra.mxu0 %v5588
    %5608 = vmatprep.subr.bf16.mxu0 0
    %5609 = vmatpush1.bf16.msra.mxu0 %v5587
    %5610 = vmatprep.subr.bf16.mxu0 0
    %5611 = vmatpush1.bf16.msra.mxu0 %v5586
    %5612 = vmatprep.subr.bf16.mxu0 0
    %5613 = vmatpush1.bf16.msra.mxu0 %v5585
    %5614 = vmatprep.subr.bf16.mxu0 0
    %5615 = vmatpush1.bf16.msra.mxu0 %v5584
    %5616 = vmatprep.subr.bf16.mxu0 0
    %5617 = vmatpush2.bf16.msra.mxu0 0
    %5618 = vmatprep.subr.bf16.mxu0 0
    %5619 = vmatpush2.bf16.msra.mxu0 0
    %5620 = vmatprep.subr.bf16.mxu0 0
    %5621 = vmatpush2.bf16.msra.mxu0 0
    %5622 = vmatprep.subr.bf16.mxu0 0
    %5623 = vmatpush2.bf16.msra.mxu0 0
    %5624 = vmatprep.subr.bf16.mxu0 0
    %5625 = vmatpush2.bf16.msra.mxu0 0
    %5626 = vmatprep.subr.bf16.mxu0 0
    %5627 = vmatpush2.bf16.msra.mxu0 0
    %5628 = vmatprep.subr.bf16.mxu0 0
    %5629 = vmatpush2.bf16.msra.mxu0 0
    %5630 = vmatprep.subr.bf16.mxu0 0
    %5631 = vmatpush2.bf16.msra.mxu0 0
    %5632 = vmatprep.mubr.bf16.mxu0 0
    %5633 = vmatmul.mubr.bf16.gmra.mxu0 %v5546
    %v5634 = vpop.f32.mrf.mxu0
    %v5635 = vadd.f32 0.0, %v5634
    %v5636 = vpop.f32.mrf.mxu0
    %v5637 = vpop.f32.mrf.mxu0
    %v5638 = vadd.f32 0.0, %v5637
    %v5639 = vpop.f32.mrf.mxu0
    %5640 = vmatprep.mubr.bf16.mxu0 0
    %5641 = vmatmul.mubr.bf16.gmra.mxu0 %v5548
    %v5642 = vpop.f32.mrf.mxu0
    %v5643 = vadd.f32 0.0, %v5642
    %v5644 = vpop.f32.mrf.mxu0
    %v5645 = vpop.f32.mrf.mxu0
    %v5646 = vadd.f32 0.0, %v5645
    %v5647 = vpop.f32.mrf.mxu0
    %5648 = vmatprep.mubr.bf16.mxu0 0
    %5649 = vmatmul.mubr.bf16.gmra.mxu0 %v5547
    %v5650 = vpop.f32.mrf.mxu0
    %v5651 = vadd.f32 0.0, %v5650
    %v5652 = vpop.f32.mrf.mxu0
    %v5653 = vpop.f32.mrf.mxu0
    %v5654 = vpop.f32.mrf.mxu0
    %5655 = vdwg.mxu0
    %v5656 = vadd.f32 %v5522, %v5635
    %v5657 = vadd.f32 %v5523, %v5638
    %v5658 = vadd.f32 %v5524, %v5643
    %v5659 = vadd.f32 %v5525, %v5646
    %v5660 = vadd.f32 %v5526, %v5651
    %v5661 = vld [vmem:[#allocation17] sm:$0xf]
    %v5662 = vpack.c.bf16 %v5657, %v5656
    %v5663 = vpack.c.bf16 %v5659, %v5658
    %v5664 = vpack.c.bf16 %v5660, %v5660
    %v5665 = vld [vmem:[%s13] sm:$0x1]
    %v5667 = vlaneseq
    %v5668 = vshrl.u32 %v5667, 7
    %v5669 = vsub.s32 0, %v5668
    %v5670 = vrot.slane %v5665, %v5669
    %vm5672 = vcmask 293888
    %v5674 = vsel %vm5672, %v5661, 0
    %vm5676 = vcmask 1041408
    %v5678 = vsel %vm5676, %v5664, 0
    %5680 = vmatprep.subr.bf16.mxu0 0
    %5681 = vmatpush1.bf16.msra.mxu0 0
    %5682 = vmatprep.subr.bf16.mxu0 0
    %5683 = vmatpush1.bf16.msra.mxu0 0
    %5684 = vmatprep.subr.bf16.mxu0 0
    %5685 = vmatpush1.bf16.msra.mxu0 0
    %5686 = vmatprep.subr.bf16.mxu0 0
    %5687 = vmatpush1.bf16.msra.mxu0 0
    %5688 = vmatprep.subr.bf16.mxu0 0
    %5689 = vmatpush1.bf16.msra.mxu0 0
    %5690 = vmatprep.subr.bf16.mxu0 0
    %5691 = vmatpush1.bf16.msra.mxu0 %v5678
    %5692 = vmatprep.subr.bf16.mxu0 0
    %5693 = vmatpush1.bf16.msra.mxu0 %v5663
    %5694 = vmatprep.subr.bf16.mxu0 0
    %5695 = vmatpush1.bf16.msra.mxu0 %v5662
    %5696 = vmatprep.subr.bf16.mxu0 0
    %5697 = vmatpush2.bf16.msra.mxu0 0
    %5698 = vmatprep.subr.bf16.mxu0 0
    %5699 = vmatpush2.bf16.msra.mxu0 0
    %5700 = vmatprep.subr.bf16.mxu0 0
    %5701 = vmatpush2.bf16.msra.mxu0 0
    %5702 = vmatprep.subr.bf16.mxu0 0
    %5703 = vmatpush2.bf16.msra.mxu0 0
    %5704 = vmatprep.subr.bf16.mxu0 0
    %5705 = vmatpush2.bf16.msra.mxu0 0
    %5706 = vmatprep.subr.bf16.mxu0 0
    %5707 = vmatpush2.bf16.msra.mxu0 0
    %5708 = vmatprep.subr.bf16.mxu0 0
    %5709 = vmatpush2.bf16.msra.mxu0 0
    %5710 = vmatprep.subr.bf16.mxu0 0
    %5711 = vmatpush2.bf16.msra.mxu0 0
    %5712 = vmatprep.mubr.bf16.mxu0 0
    %5713 = vmatmul.mubr.bf16.gmra.mxu0 %v5674
    %v5714 = vpop.f32.mrf.mxu0
    %v5715 = vadd.f32 %v5670, %v5714
    %v5716 = vpop.f32.mrf.mxu0
    %v5717 = vpop.f32.mrf.mxu0
    %v5718 = vpop.f32.mrf.mxu0
    %5719 = vdwg.mxu0
    %v5720 = vmax.f32 %v5715, 0.0
    %v5721 = vrot.slane %v5720, 4
    %v5722 = vadd.f32 %v5720, %v5721
    %v5723 = vrot.slane %v5722, 2
    %v5724 = vadd.f32 %v5722, %v5723
    %v5725 = vrot.slane %v5724, 1
    %v5726 = vadd.f32 %v5724, %v5725
    %v5727 = vrcp.pop 8.0
    %v5728 = vmul.f32 %v5726, %v5727
    %v5729 = vsub.f32 %v5720, %v5728
    %v5730 = vmul.f32 %v5729, %v5729
    %v5731 = vrot.slane %v5730, 4
    %v5732 = vadd.f32 %v5730, %v5731
    %v5733 = vrot.slane %v5732, 2
    %v5734 = vadd.f32 %v5732, %v5733
    %v5735 = vrot.slane %v5734, 1
    %v5736 = vadd.f32 %v5734, %v5735
    %v5737 = vmul.f32 %v5736, %v5727
    %v5738 = vadd.f32 %v5737, 1e-05
    %v5739 = vrsqrt.pop %v5738
    %v5740 = vmul.f32 %v5729, %v5739
    %v5741 = vpack.c.bf16 %v5740, %v5740
    %v5742 = vld [vmem:[#allocation19] sm:$0xf]
    %v5743 = vld [vmem:[#allocation19 + $0x4] sm:$0xf]
    %v5744 = vld [vmem:[#allocation19 + $0x8] sm:$0xf]
    %v5745 = vld [vmem:[#allocation19 + $0xc] sm:$0xf]
    %v5746 = vld [vmem:[#allocation19 + $0x10] sm:$0xf]
    %v5747 = vld [vmem:[#allocation19 + $0x14] sm:$0xf]
    %v5748 = vld [vmem:[#allocation19 + $0x18] sm:$0xf]
    %v5749 = vld [vmem:[#allocation19 + $0x1c] sm:$0xf]
    %v5750 = vld [vmem:[#allocation19 + $0x20] sm:$0xf]
    %v5751 = vld [vmem:[#allocation19 + $0x24] sm:$0xf]
    %v5752 = vld [vmem:[#allocation19 + $0x28] sm:$0xf]
    %v5753 = vld [vmem:[#allocation19 + $0x2c] sm:$0xf]
    %v5754 = vld [vmem:[#allocation19 + $0x30] sm:$0xf]
    %v5755 = vld [vmem:[#allocation19 + $0x34] sm:$0xf]
    %v5756 = vld [vmem:[#allocation19 + $0x38] sm:$0xf]
    %v5757 = vld [vmem:[#allocation19 + $0x3c] sm:$0xf]
    %v5758 = vld [vmem:[%s15] sm:$0x1]
    %v5760 = vlaneseq
    %v5761 = vshrl.u32 %v5760, 7
    %v5762 = vsub.s32 0, %v5761
    %v5763 = vrot.slane %v5758, %v5762
    %v5781 = vunpack.c.l.b16 %v5742
    %v5782 = vunpack.c.l.b16 %v5743
    %v5783 = vunpack.c.l.b16 %v5744
    %v5784 = vunpack.c.l.b16 %v5745
    %v5785 = vunpack.c.l.b16 %v5746
    %v5786 = vunpack.c.l.b16 %v5747
    %v5787 = vunpack.c.l.b16 %v5748
    %v5788 = vunpack.c.l.b16 %v5749
    %v5789 = vunpack.c.l.b16 %v5750
    %v5790 = vunpack.c.l.b16 %v5751
    %v5791 = vunpack.c.l.b16 %v5752
    %v5792 = vunpack.c.l.b16 %v5753
    %v5793 = vunpack.c.l.b16 %v5754
    %v5794 = vunpack.c.l.b16 %v5755
    %v5795 = vunpack.c.l.b16 %v5756
    %v5796 = vunpack.c.l.b16 %v5757
    %v5797 = vpack.c.b16 %v5782, %v5781
    %v5798 = vpack.c.b16 %v5784, %v5783
    %v5799 = vpack.c.b16 %v5786, %v5785
    %v5800 = vpack.c.b16 %v5788, %v5787
    %v5801 = vpack.c.b16 %v5790, %v5789
    %v5802 = vpack.c.b16 %v5792, %v5791
    %v5803 = vpack.c.b16 %v5794, %v5793
    %v5804 = vpack.c.b16 %v5796, %v5795
    %5813 = vmatprep.subr.bf16.mxu0 0
    %5814 = vmatpush1.bf16.msra.mxu0 %v5804
    %5815 = vmatprep.subr.bf16.mxu0 0
    %5816 = vmatpush1.bf16.msra.mxu0 %v5803
    %5817 = vmatprep.subr.bf16.mxu0 0
    %5818 = vmatpush1.bf16.msra.mxu0 %v5802
    %5819 = vmatprep.subr.bf16.mxu0 0
    %5820 = vmatpush1.bf16.msra.mxu0 %v5801
    %5821 = vmatprep.subr.bf16.mxu0 0
    %5822 = vmatpush1.bf16.msra.mxu0 %v5800
    %5823 = vmatprep.subr.bf16.mxu0 0
    %5824 = vmatpush1.bf16.msra.mxu0 %v5799
    %5825 = vmatprep.subr.bf16.mxu0 0
    %5826 = vmatpush1.bf16.msra.mxu0 %v5798
    %5827 = vmatprep.subr.bf16.mxu0 0
    %5828 = vmatpush1.bf16.msra.mxu0 %v5797
    %5829 = vmatprep.subr.bf16.mxu0 0
    %5830 = vmatpush2.bf16.msra.mxu0 0
    %5831 = vmatprep.subr.bf16.mxu0 0
    %5832 = vmatpush2.bf16.msra.mxu0 0
    %5833 = vmatprep.subr.bf16.mxu0 0
    %5834 = vmatpush2.bf16.msra.mxu0 0
    %5835 = vmatprep.subr.bf16.mxu0 0
    %5836 = vmatpush2.bf16.msra.mxu0 0
    %5837 = vmatprep.subr.bf16.mxu0 0
    %5838 = vmatpush2.bf16.msra.mxu0 0
    %5839 = vmatprep.subr.bf16.mxu0 0
    %5840 = vmatpush2.bf16.msra.mxu0 0
    %5841 = vmatprep.subr.bf16.mxu0 0
    %5842 = vmatpush2.bf16.msra.mxu0 0
    %5843 = vmatprep.subr.bf16.mxu0 0
    %5844 = vmatpush2.bf16.msra.mxu0 0
    %5845 = vmatprep.mubr.bf16.mxu0 0
    %5846 = vmatmul.mubr.bf16.gmra.mxu0 %v5741
    %v5847 = vpop.f32.mrf.mxu0
    %v5848 = vadd.f32 %v5763, %v5847
    %v5849 = vpop.f32.mrf.mxu0
    %v5850 = vpop.f32.mrf.mxu0
    %v5851 = vpop.f32.mrf.mxu0
    %5852 = vdwg.mxu0
    %v5853 = vmax.f32 %v5848, 0.0
    %v5854 = vrot.slane %v5853, 4
    %v5855 = vadd.f32 %v5853, %v5854
    %v5856 = vrot.slane %v5855, 2
    %v5857 = vadd.f32 %v5855, %v5856
    %v5858 = vrot.slane %v5857, 1
    %v5859 = vadd.f32 %v5857, %v5858
    %v5860 = vmul.f32 %v5859, %v5727
    %v5861 = vsub.f32 %v5853, %v5860
    %v5862 = vmul.f32 %v5861, %v5861
    %v5863 = vrot.slane %v5862, 4
    %v5864 = vadd.f32 %v5862, %v5863
    %v5865 = vrot.slane %v5864, 2
    %v5866 = vadd.f32 %v5864, %v5865
    %v5867 = vrot.slane %v5866, 1
    %v5868 = vadd.f32 %v5866, %v5867
    %v5869 = vmul.f32 %v5868, %v5727
    %v5870 = vadd.f32 %v5869, 1e-05
    %v5871 = vrsqrt.pop %v5870
    %v5872 = vmul.f32 %v5861, %v5871
    %v5873 = vpack.c.bf16 %v5872, %v5872
    %v5874 = vld [vmem:[%s16] sm:$0xf]
    %v5875 = vld [vmem:[%s16 + $0x4] sm:$0xf]
    %v5876 = vld [vmem:[%s16 + $0x8] sm:$0xf]
    %v5877 = vld [vmem:[%s16 + $0xc] sm:$0xf]
    %v5878 = vld [vmem:[%s16 + $0x10] sm:$0xf]
    %v5879 = vld [vmem:[%s16 + $0x14] sm:$0xf]
    %v5880 = vld [vmem:[%s16 + $0x18] sm:$0xf]
    %v5881 = vld [vmem:[%s16 + $0x1c] sm:$0xf]
    %v5882 = vld [vmem:[%s16 + $0x20] sm:$0xf]
    %v5883 = vld [vmem:[%s16 + $0x24] sm:$0xf]
    %v5884 = vld [vmem:[%s16 + $0x28] sm:$0xf]
    %v5885 = vld [vmem:[%s16 + $0x2c] sm:$0xf]
    %v5886 = vld [vmem:[%s16 + $0x30] sm:$0xf]
    %v5887 = vld [vmem:[%s16 + $0x34] sm:$0xf]
    %v5888 = vld [vmem:[%s16 + $0x38] sm:$0xf]
    %v5889 = vld [vmem:[%s16 + $0x3c] sm:$0xf]
    %v5890 = vld [vmem:[%s17] sm:$0x1]
    %v5892 = vlaneseq
    %v5893 = vshrl.u32 %v5892, 7
    %v5894 = vsub.s32 0, %v5893
    %v5895 = vrot.slane %v5890, %v5894
    %v5913 = vunpack.c.l.b16 %v5874
    %v5914 = vunpack.c.l.b16 %v5875
    %v5915 = vunpack.c.l.b16 %v5876
    %v5916 = vunpack.c.l.b16 %v5877
    %v5917 = vunpack.c.l.b16 %v5878
    %v5918 = vunpack.c.l.b16 %v5879
    %v5919 = vunpack.c.l.b16 %v5880
    %v5920 = vunpack.c.l.b16 %v5881
    %v5921 = vunpack.c.l.b16 %v5882
    %v5922 = vunpack.c.l.b16 %v5883
    %v5923 = vunpack.c.l.b16 %v5884
    %v5924 = vunpack.c.l.b16 %v5885
    %v5925 = vunpack.c.l.b16 %v5886
    %v5926 = vunpack.c.l.b16 %v5887
    %v5927 = vunpack.c.l.b16 %v5888
    %v5928 = vunpack.c.l.b16 %v5889
    %v5929 = vpack.c.b16 %v5914, %v5913
    %v5930 = vpack.c.b16 %v5916, %v5915
    %v5931 = vpack.c.b16 %v5918, %v5917
    %v5932 = vpack.c.b16 %v5920, %v5919
    %v5933 = vpack.c.b16 %v5922, %v5921
    %v5934 = vpack.c.b16 %v5924, %v5923
    %v5935 = vpack.c.b16 %v5926, %v5925
    %v5936 = vpack.c.b16 %v5928, %v5927
    %5945 = vmatprep.subr.bf16.mxu0 0
    %5946 = vmatpush1.bf16.msra.mxu0 %v5936
    %5947 = vmatprep.subr.bf16.mxu0 0
    %5948 = vmatpush1.bf16.msra.mxu0 %v5935
    %5949 = vmatprep.subr.bf16.mxu0 0
    %5950 = vmatpush1.bf16.msra.mxu0 %v5934
    %5951 = vmatprep.subr.bf16.mxu0 0
    %5952 = vmatpush1.bf16.msra.mxu0 %v5933
    %5953 = vmatprep.subr.bf16.mxu0 0
    %5954 = vmatpush1.bf16.msra.mxu0 %v5932
    %5955 = vmatprep.subr.bf16.mxu0 0
    %5956 = vmatpush1.bf16.msra.mxu0 %v5931
    %5957 = vmatprep.subr.bf16.mxu0 0
    %5958 = vmatpush1.bf16.msra.mxu0 %v5930
    %5959 = vmatprep.subr.bf16.mxu0 0
    %5960 = vmatpush1.bf16.msra.mxu0 %v5929
    %5961 = vmatprep.subr.bf16.mxu0 0
    %5962 = vmatpush2.bf16.msra.mxu0 0
    %5963 = vmatprep.subr.bf16.mxu0 0
    %5964 = vmatpush2.bf16.msra.mxu0 0
    %5965 = vmatprep.subr.bf16.mxu0 0
    %5966 = vmatpush2.bf16.msra.mxu0 0
    %5967 = vmatprep.subr.bf16.mxu0 0
    %5968 = vmatpush2.bf16.msra.mxu0 0
    %5969 = vmatprep.subr.bf16.mxu0 0
    %5970 = vmatpush2.bf16.msra.mxu0 0
    %5971 = vmatprep.subr.bf16.mxu0 0
    %5972 = vmatpush2.bf16.msra.mxu0 0
    %5973 = vmatprep.subr.bf16.mxu0 0
    %5974 = vmatpush2.bf16.msra.mxu0 0
    %5975 = vmatprep.subr.bf16.mxu0 0
    %5976 = vmatpush2.bf16.msra.mxu0 0
    %5977 = vmatprep.mubr.bf16.mxu0 0
    %5978 = vmatmul.mubr.bf16.gmra.mxu0 %v5873
    %v5979 = vpop.f32.mrf.mxu0
    %v5980 = vadd.f32 %v5895, %v5979
    %v5981 = vpop.f32.mrf.mxu0
    %v5982 = vpop.f32.mrf.mxu0
    %v5983 = vpop.f32.mrf.mxu0
    %5984 = vdwg.mxu0
    %v5985 = vmax.f32 %v5980, 0.0
    %v5986 = vrot.slane %v5985, 4
    %v5987 = vadd.f32 %v5985, %v5986
    %v5988 = vrot.slane %v5987, 2
    %v5989 = vadd.f32 %v5987, %v5988
    %v5990 = vrot.slane %v5989, 1
    %v5991 = vadd.f32 %v5989, %v5990
    %v5992 = vmul.f32 %v5991, %v5727
    %v5993 = vsub.f32 %v5985, %v5992
    %v5994 = vmul.f32 %v5993, %v5993
    %v5995 = vrot.slane %v5994, 4
    %v5996 = vadd.f32 %v5994, %v5995
    %v5997 = vrot.slane %v5996, 2
    %v5998 = vadd.f32 %v5996, %v5997
    %v5999 = vrot.slane %v5998, 1
    %v6000 = vadd.f32 %v5998, %v5999
    %v6001 = vmul.f32 %v6000, %v5727
    %v6002 = vadd.f32 %v6001, 1e-05
    %v6003 = vrsqrt.pop %v6002
    %v6004 = vmul.f32 %v5993, %v6003
    %6005 = vst [vmem:[#allocation20] sm:$0xff] %v6004
    // Predicated region
    $region118: #{forward.1} parent=1 // pred_check
      _
    $region119: #{forward.1} parent=1 // pred_check_branch
      %6007 = sbr.rel (0) target = $region121
    $region120: #{forward.1} parent=1 // pred_region
      %s6009 = ssub.s32 128, 128
      %6010 = vsyncadd [#allocation4], %s6009
      %s6012 = sshll.u32 [#allocation20], 4
      %s6013 = int_to_ptr.vmem [resolvable:$true] %s6012
      %6015 = dma.vmem_to_hbm [thread:$0]  %s6013, 128, %s18, [#allocation4]
    $region121: #{forward.1} parent=1 // pred_fallthru
      _
    // Predicated region
    $region122: #{forward.1} parent=1 // pred_check
      _
    $region123: #{forward.1} parent=1 // pred_check_branch
      %6017 = sbr.rel (0) target = $region125
    $region124: #{forward.1} parent=1 // pred_region
      %6018 = dma.done [#allocation4], 128
    $region125: #{forward.1} parent=1 // pred_fallthru
      _
    %6019 = vsyncpa [#allocation3], 1
    %6020 = vsyncpa [#allocation6], 1
    %6021 = vsyncpa [#allocation9], 1
    %6022 = vsyncpa [#allocation12], 1
    %6023 = vsyncpa [#allocation15], 1
    %6024 = vsyncpa [#allocation18], 1
    %6025 = vsyncpa [#allocation4], 1

</llo_original>
